<compile_context>
chip_gen: v5e
topology: v5e:2x2
jax: 0.10.0
libtpu: 0.0.40
codegen_flags: <defaults>
</compile_context>

<pallas_src>
import math

import jax
import jax.numpy as jnp
from jax import lax
from jax.experimental import pallas as pl
from jax.experimental.pallas import tpu as pltpu

# ------------------------- config (small synthetic shapes) -------------------------
BATCH = 2
SEQ = 8                  # question length (q_max)
NUM_OBJ = 8              # objects per image
DIM_WORD = 16
DIM_HIDDEN = 32
DIM_VISION = 24          # last 4 dims are the (unused) box coords
MID_SIZE = 32            # == DIM_HIDDEN (BiGRU hidden feeds the mid_size-sized heads)
DIM_EDGE = 32
STATE_SIZE = NUM_OBJ     # prior logits must align with per-object posterior logits
GLIMPSES = 1
MAX_LEN = 4              # number of entities / e_mask length
NUM_Q_TOKEN = 20         # question vocab size
NUM_ANSWER = 10          # answer vocab size
GRU_H = DIM_HIDDEN // 2  # per-direction GRU hidden size
OUT_LANES = 128          # packed output slab width


# =============================== the single fused kernel ============================
def _net_kernel(q_ref, gidx_ref, wembih_ref, whh_ref, wvis_ref, wmid_ref,
                whid_ref, bias_ref, v_ref, elab_ref, emask_ref, rmask_ref, out_ref):
    f32 = jnp.float32
    B, S, H, N, Dv = BATCH, SEQ, GRU_H, NUM_OBJ, DIM_VISION
    M, E, T, ML, NA, DH = MID_SIZE, DIM_EDGE, NUM_Q_TOKEN, MAX_LEN, NUM_ANSWER, DIM_HIDDEN
    SL = ML - 1                      # number of time-reasoning loop steps
    V = NUM_Q_TOKEN

    bias = bias_ref[...]             # (16, 128) packed bias / vector-weight slab

    def brow(r, w):                  # static slice of one packed bias row
        return bias[r:r + 1, :w]

    def sigmoid(x):
        return 1.0 / (1.0 + jnp.exp(-x))

    def _softmax(x):
        m = jnp.max(x, axis=-1, keepdims=True)
        e = jnp.exp(x - m)
        return e * pl.reciprocal(jnp.sum(e, axis=-1, keepdims=True), approx=True)

    def _log_softmax(x):
        s = x - jnp.max(x, axis=-1, keepdims=True)
        return s - jnp.log(jnp.sum(jnp.exp(s), axis=-1, keepdims=True))

    # ---- embedding gather fused with the BiGRU input projection (one matmul) -------
    # w_embih = embedding @ [Wih_fwd | Wih_bwd] was folded at pack time.
    oh_q = (q_ref[...] ==
            lax.broadcasted_iota(jnp.int32, (S * B, V), 1)).astype(f32)       # (S*B,V)
    xp = jnp.dot(oh_q, wembih_ref[...], preferred_element_type=f32) + brow(0, 6 * H)

    # ---- fused bidirectional GRU recurrence (trace-time unrolled, S=8) -------------
    whh = whh_ref[...]               # (H, 6H) = [Whh_fwd | Whh_bwd]
    bhh_f = brow(1, 3 * H)
    bhh_b = brow(2, 3 * H)
    hf = jnp.zeros((B, H), f32)
    hb = jnp.zeros((B, H), f32)
    hf_list = [None] * S
    hb_list = [None] * S
    for t in range(S):
        tb = S - 1 - t
        # one MXU push for both directions' hidden-state projections
        g = jnp.dot(jnp.concatenate([hf, hb], axis=0), whh,
                    preferred_element_type=f32)                               # (2B,6H)
        gf = g[:B, :3 * H] + bhh_f
        gb = g[B:, 3 * H:] + bhh_b
        xf = xp[t * B:(t + 1) * B, :3 * H]
        xb = xp[tb * B:(tb + 1) * B, 3 * H:]
        rf = sigmoid(xf[:, :H] + gf[:, :H])
        zf = sigmoid(xf[:, H:2 * H] + gf[:, H:2 * H])
        nf = jnp.tanh(xf[:, 2 * H:] + rf * gf[:, 2 * H:])
        hf = (1.0 - zf) * nf + zf * hf
        rb = sigmoid(xb[:, :H] + gb[:, :H])
        zb = sigmoid(xb[:, H:2 * H] + gb[:, H:2 * H])
        nb = jnp.tanh(xb[:, 2 * H:] + rb * gb[:, 2 * H:])
        hb = (1.0 - zb) * nb + zb * hb
        hf_list[t] = hf
        hb_list[tb] = hb

    # full hidden_q kept on-chip; never round-trips to HBM
    hq = jnp.concatenate(
        [jnp.concatenate([hf_list[t], hb_list[t]], axis=1).reshape(B, 1, 2 * H)
         for t in range(S)], axis=1)                                          # (B,S,2H)

    # ---- e_s / e_e / q_len gathers as ONE one-hot batched matmul -------------------
    oh_g = (gidx_ref[...] ==
            lax.broadcasted_iota(jnp.int32, (B, 2 * ML + 1, S), 2)).astype(f32)
    gathered = jnp.einsum('bks,bsh->bkh', oh_g, hq, preferred_element_type=f32)
    ent = gathered[:, :ML, :]                      # hidden_entity  (B, ML, 2H)
    trn = gathered[:, ML:2 * ML, :]                # hidden_trans   (B, ML, 2H)
    q_fwd = gathered[:, 2 * ML, :H]                # forward state at q_len-1
    q_out = jnp.concatenate([q_fwd, hb], axis=1)   # hb == final backward state (B,2H)

    entl = ent[:, :SL, :]                          # loop-step entity embeddings
    entf = ent[:, ML - 1, :]                       # final entity embedding (B, 2H)
    trnl = trn[:, :SL, :]

    # ---- vision prep: L2(dim=1) norm + fused vision_to_v @ edge_W_bot --------------
    # feat_edge[b,i,j] = feat[b,j]@W_top + feat[b,i]@W_bot (+bias); TransCell softmaxes
    # over i, so the j-only (W_top) half and the bias cancel -> only feat@W_bot needed,
    # and vision_to_v@W_bot was folded into one (Dv,E) weight at pack time.
    v = v_ref[...]                                 # (B,N,Dv) == object_list
    rmask = rmask_ref[...]                         # (B,N,N) in {0,1}
    wvis = wvis_ref[...]                           # (Dv, 148) packed slab
    v2 = v.reshape(B * N, Dv)
    nrm = jnp.sqrt(jnp.sum(v * v, axis=1, keepdims=True)) + 1e-12
    vn2 = (v / nrm).reshape(B * N, Dv)
    b_e = jnp.dot(vn2, wvis[:, 2 * M:2 * M + E],
                  preferred_element_type=f32).reshape(B, N, E)

    # loop-invariant relu(v @ Wh + bh) for both cells (v_input == object_list always),
    # one merged shared-LHS matmul
    h01 = jnp.maximum(jnp.dot(v2, wvis[:, :2 * M], preferred_element_type=f32)
                      + brow(3, 2 * M), 0.0)
    h0 = h01[:, :M].reshape(B, N, M)
    h1 = h01[:, M:].reshape(B, N, M)

    wmid = wmid_ref[...]                           # (M, 128) packed slab
    bp = brow(15, 2)
    bp0 = bp[:, 0:1]
    bp1 = bp[:, 1:2]

    # ---- cell[0] posterior logits for all SL loop steps at once --------------------
    qq0 = jnp.maximum(jnp.dot(entl.reshape(B * SL, M), wmid[:, :M],
                              preferred_element_type=f32) + brow(4, M), 0.0)
    qq0 = (qq0 * brow(12, M)).reshape(B, SL, M)    # fold encoder_posterior weight Wp0
    post0 = jnp.einsum('bsm,bnm->bsn', qq0, h0, preferred_element_type=f32) + bp0

    # ---- cell[1] posterior logits at the final entity step -------------------------
    qq1 = jnp.maximum(jnp.dot(entf, wmid[:, M:2 * M], preferred_element_type=f32)
                      + brow(5, M), 0.0)
    post1 = jnp.sum(h1 * (qq1 * brow(13, M)).reshape(B, 1, M), axis=-1) + bp1   # (B,N)

    # ---- decoder + BCE-with-logits (mean over vocab) for all loop steps ------------
    act0 = _softmax(post0)                         # act = exp(z), z = log-softmax sample
    h_act = jnp.einsum('bsn,bnd->bsd', act0, v, preferred_element_type=f32)
    dlog = (jnp.dot(h_act.reshape(B * SL, Dv), wvis[:, 2 * M + E:2 * M + E + T],
                    preferred_element_type=f32) + brow(7, T)).reshape(B, SL, T)
    tgt = elab_ref[...][:, :SL, :]
    bce = jnp.maximum(dlog, 0.0) - dlog * tgt + jnp.log(1.0 + jnp.exp(-jnp.abs(dlog)))
    recon = jnp.mean(bce, axis=-1)                 # (B, SL)

    # ---- TransCell for all SL steps (the (B,N,N,E) edge tensor never materialised) -
    qe = jnp.dot(trnl.reshape(B * SL, M), wmid[:, 2 * M:2 * M + E],
                 preferred_element_type=f32) + brow(6, E)
    w_t = (qe * brow(14, E)).reshape(B, SL, E)     # fold linear_out weight Wout
    bw = jnp.einsum('bse,bne->bsn', w_t, b_e, preferred_element_type=f32)     # (B,SL,N)
    eb = jnp.exp(bw - jnp.max(bw, axis=-1, keepdims=True))
    d = jnp.einsum('bsi,bij->bsj', eb, rmask, preferred_element_type=f32)     # col norm
    # state_pre (z before each loop step): zeros at step 0, posterior_{s-1} afterwards
    sp = jnp.concatenate([jnp.zeros((B, 1, N), f32), post0[:, :SL - 1, :]], axis=1)
    inv_d = jnp.where(d > 0.0, pl.reciprocal(d, approx=True), 0.0)
    g2 = sp * inv_d
    t1 = eb * jnp.einsum('bsj,bij->bsi', g2, rmask, preferred_element_type=f32)
    # columns whose every row is masked degenerate to a uniform 1/N softmax (reference)
    t2 = jnp.sum(jnp.where(d > 0.0, 0.0, sp), axis=-1, keepdims=True) * (1.0 / N)
    tl = t1 + t2                                   # prior logits produced at step s

    # ---- 0.1 * KL(posterior || prior) for loop steps and the final cell ------------
    prior_loop = jnp.concatenate([jnp.zeros((B, 1, N), f32), tl[:, :SL - 1, :]], axis=1)
    lp_post = _log_softmax(post0)
    lp_prior = _log_softmax(prior_loop)
    lf_loop = 0.1 * jnp.sum(jnp.exp(lp_post) * (lp_post - lp_prior), axis=-1)   # (B,SL)
    lp_post_f = _log_softmax(post1)
    lp_prior_f = _log_softmax(tl[:, SL - 1, :])
    lf_final = 0.1 * jnp.sum(jnp.exp(lp_post_f) * (lp_post_f - lp_prior_f),
                             axis=-1, keepdims=True)                            # (B,1)

    # ---- loss_time per batch row (mean over batch done by the caller) --------------
    col = lax.broadcasted_iota(jnp.int32, (B, SL), 1)
    l_t = (recon + jnp.where(col == 0, 0.0, lf_loop)) * emask_ref[...][:, :SL]
    loss_b = jnp.sum(l_t, axis=-1, keepdims=True) + lf_final                    # (B,1)

    # ---- attended read-out + Classifier ---------------------------------------------
    node = _softmax(post1)                                                      # (B,N)
    h_out = jnp.sum(v * node.reshape(B, N, 1), axis=1)                          # (B,Dv)
    whid = whid_ref[...]
    a = jnp.dot(h_out, wvis[:, 2 * M + E + T:], preferred_element_type=f32) + brow(8, DH)
    c = jnp.dot(q_out, wmid[:, 3 * M:], preferred_element_type=f32) + brow(9, DH)
    hcls = a * c
    hcls = jnp.maximum(jnp.dot(hcls, whid[:, :DH], preferred_element_type=f32)
                       + brow(10, DH), 0.0)
    ans = jnp.dot(hcls, whid[:, DH:], preferred_element_type=f32) + brow(11, NA)

    # single lane-dense packed output: answer in lanes [0,NA), loss in lane NA
    out_ref[...] = jnp.concatenate(
        [ans, loss_b, jnp.zeros((B, OUT_LANES - NA - 1), f32)], axis=1)


# ------------------------------- wrapper / driver -----------------------------------
def net_forward(packed, q, vision, e_s, e_e, e_mask, e_label, q_mask, r_mask, q_len):
    del q_mask  # unused in the reference forward
    B = q.shape[0]
    # tiny int32 index inputs; all gathers happen inside the kernel via one-hot matmuls
    q_flat = q.T.reshape(SEQ * B, 1).astype(jnp.int32)
    gather_idx = jnp.concatenate(
        [e_s, e_e, (q_len - 1).reshape(B, 1)], axis=1
    ).astype(jnp.int32).reshape(B, 2 * MAX_LEN + 1, 1)

    args = (q_flat, gather_idx,
            packed["w_embih"], packed["w_hh"], packed["w_vis"], packed["w_mid"],
            packed["w_hid"], packed["bias"],
            vision, e_label, e_mask, r_mask)
    vspec = pl.BlockSpec(memory_space=pltpu.MemorySpace.VMEM)
    out = pl.pallas_call(
        _net_kernel,
        out_shape=jax.ShapeDtypeStruct((B, OUT_LANES), jnp.float32),
        in_specs=[vspec] * len(args),
        out_specs=vspec,
    )(*args)
    answer = out[:, :NUM_ANSWER]
    loss_time = jnp.mean(out[:, NUM_ANSWER])
    return answer, loss_time


# ------------------------------ parameter init / packing ----------------------------
def init_params(key):
    keys = iter(jax.random.split(key, 64))

    def lin(in_d, out_d, bias=True):
        k1, k2 = next(keys), next(keys)
        bound = 1.0 / math.sqrt(in_d)
        W = jax.random.uniform(k1, (in_d, out_d), jnp.float32, -bound, bound)
        b = jax.random.uniform(k2, (out_d,), jnp.float32, -bound, bound) if bias else None
        return W, b

    p = {}
    p["embedding"] = 0.1 * jax.random.normal(next(keys), (NUM_Q_TOKEN, DIM_WORD), jnp.float32)
    for d in ("f", "b"):
        p[f"gru_{d}_Wih"], p[f"gru_{d}_bih"] = lin(DIM_WORD, 3 * GRU_H)
        p[f"gru_{d}_Whh"], p[f"gru_{d}_bhh"] = lin(GRU_H, 3 * GRU_H)
    p["v2v_W"], _ = lin(DIM_VISION, DIM_HIDDEN, bias=False)
    p["edge_W"], _ = lin(2 * DIM_HIDDEN, DIM_EDGE, bias=False)

    def cell():
        Wh, bh = lin(DIM_VISION, MID_SIZE)
        Wq, bq = lin(MID_SIZE, MID_SIZE)
        Wp, bp = lin(MID_SIZE, 1)
        Wb, bb = lin(MID_SIZE, 1)   # encoder_back: never affects (answer, loss_time)
        return {"Wh": Wh, "bh": bh, "Wq": Wq, "bq": bq,
                "Wp": Wp, "bp": bp, "Wb": Wb, "bb": bb}

    p["cell0"] = cell()
    p["cell1"] = cell()
    Wq, bq = lin(MID_SIZE, DIM_EDGE)
    Wout, bout = lin(DIM_EDGE, 1)   # bout cancels inside TransCell's softmax over i
    p["trans"] = {"Wq": Wq, "bq": bq, "Wout": Wout, "bout": bout}
    p["dec_W"], p["dec_b"] = lin(DIM_VISION, NUM_Q_TOKEN)
    W11, b11 = lin(GLIMPSES * DIM_VISION, DIM_HIDDEN)
    W12, b12 = lin(MID_SIZE, DIM_HIDDEN)
    W2, b2 = lin(DIM_HIDDEN, DIM_HIDDEN)
    W3, b3 = lin(DIM_HIDDEN, NUM_ANSWER)
    p["cls"] = {"W11": W11, "b11": b11, "W12": W12, "b12": b12,
                "W2": W2, "b2": b2, "W3": W3, "b3": b3}
    return p


def pack_params(p):
    """Folds linear chains and packs ~35 tiny tensors into 6 VMEM slabs (done once)."""
    c0, c1, tc, cls = p["cell0"], p["cell1"], p["trans"], p["cls"]
    M, E, DH = MID_SIZE, DIM_EDGE, DIM_HIDDEN

    w_ih = jnp.concatenate([p["gru_f_Wih"], p["gru_b_Wih"]], axis=1)      # (Dw, 6H)
    w_embih = p["embedding"] @ w_ih                                       # gather+proj fold
    w_hh = jnp.concatenate([p["gru_f_Whh"], p["gru_b_Whh"]], axis=1)      # (H, 6H)
    w_vedge = p["v2v_W"] @ p["edge_W"][DH:, :]                            # chain fold (Dv,E)
    w_vis = jnp.concatenate([c0["Wh"], c1["Wh"], w_vedge, p["dec_W"], cls["W11"]], axis=1)
    w_mid = jnp.concatenate([c0["Wq"], c1["Wq"], tc["Wq"], cls["W12"]], axis=1)  # (M,128)
    w_hid = jnp.concatenate([cls["W2"], cls["W3"]], axis=1)               # (DH, 42)

    def row(*vecs):
        v = jnp.concatenate([jnp.ravel(x) for x in vecs])
        return jnp.pad(v, (0, 128 - v.shape[0])).reshape(1, 128)

    bias = jnp.concatenate([
        row(p["gru_f_bih"], p["gru_b_bih"]),   # 0  bih (fwd|bwd)
        row(p["gru_f_bhh"]),                   # 1
        row(p["gru_b_bhh"]),                   # 2
        row(c0["bh"], c1["bh"]),               # 3  bh0|bh1
        row(c0["bq"]),                         # 4
        row(c1["bq"]),                         # 5
        row(tc["bq"]),                         # 6
        row(p["dec_b"]),                       # 7
        row(cls["b11"]),                       # 8
        row(cls["b12"]),                       # 9
        row(cls["b2"]),                        # 10
        row(cls["b3"]),                        # 11
        row(c0["Wp"]),                         # 12 encoder_posterior weight (cell0)
        row(c1["Wp"]),                         # 13 encoder_posterior weight (cell1)
        row(tc["Wout"]),                       # 14 TransCell linear_out weight
        row(c0["bp"], c1["bp"]),               # 15 [bp0, bp1]
    ], axis=0)                                 # (16, 128)

    return {"w_embih": w_embih, "w_hh": w_hh, "w_vis": w_vis,
            "w_mid": w_mid, "w_hid": w_hid, "bias": bias}


# -------------------------------------- main -----------------------------------------
if __name__ == "__main__":
    key = jax.random.PRNGKey(0)
    kp, kq, kv, ks, ke, kl, kr = jax.random.split(key, 7)
    params = init_params(kp)
    packed = pack_params(params)

    q = jax.random.randint(kq, (BATCH, SEQ), 0, NUM_Q_TOKEN, dtype=jnp.int32)
    vision = jax.random.normal(kv, (BATCH, NUM_OBJ, DIM_VISION), jnp.float32)
    e_s = jax.random.randint(ks, (BATCH, MAX_LEN), 0, SEQ, dtype=jnp.int32)
    e_e = jax.random.randint(ke, (BATCH, MAX_LEN), 0, SEQ, dtype=jnp.int32)
    e_mask = jnp.ones((BATCH, MAX_LEN), jnp.float32)
    e_label = jax.random.uniform(kl, (BATCH, MAX_LEN, NUM_Q_TOKEN), jnp.float32)
    q_mask = jnp.ones((BATCH, SEQ), jnp.float32)
    r_mask = (jax.random.uniform(kr, (BATCH, NUM_OBJ, NUM_OBJ)) > 0.2).astype(jnp.float32)
    q_len = jnp.array([SEQ, SEQ - 2], dtype=jnp.int32)

    fwd = jax.jit(net_forward)
    answer, loss_time = fwd(packed, q, vision, e_s, e_e, e_mask, e_label,
                            q_mask, r_mask, q_len)
    jax.block_until_ready((answer, loss_time))
    assert answer.shape == (BATCH, NUM_ANSWER)
    assert loss_time.shape == ()
    print("KERNEL_OK")
</pallas_src>

<mosaic_0001>
module attributes {stable_mosaic.version = 11 : i64} {
  func.func @_net_kernel(%arg0: memref<16x1xi32, #tpu.memory_space<vmem>>, %arg1: memref<2x9x1xi32, #tpu.memory_space<vmem>>, %arg2: memref<20x96xf32, #tpu.memory_space<vmem>>, %arg3: memref<16x96xf32, #tpu.memory_space<vmem>>, %arg4: memref<24x148xf32, #tpu.memory_space<vmem>>, %arg5: memref<32x128xf32, #tpu.memory_space<vmem>>, %arg6: memref<32x42xf32, #tpu.memory_space<vmem>>, %arg7: memref<16x128xf32, #tpu.memory_space<vmem>>, %arg8: memref<2x8x24xf32, #tpu.memory_space<vmem>>, %arg9: memref<2x4x20xf32, #tpu.memory_space<vmem>>, %arg10: memref<2x4xf32, #tpu.memory_space<vmem>>, %arg11: memref<2x8x8xf32, #tpu.memory_space<vmem>>, %arg12: memref<2x128xf32, #tpu.memory_space<vmem>>) attributes {dimension_semantics = [], scalar_prefetch = 0 : i64, scratch_operands = 0 : i64, tpu.core_type = #tpu.core_type<tc>} {
    %c0 = arith.constant 0 : index
    %c0_0 = arith.constant 0 : index
    %0 = vector.load %arg7[%c0, %c0_0] : memref<16x128xf32, #tpu.memory_space<vmem>>, vector<16x128xf32>
    %c0_1 = arith.constant 0 : index
    %c0_2 = arith.constant 0 : index
    %1 = vector.load %arg0[%c0_1, %c0_2] : memref<16x1xi32, #tpu.memory_space<vmem>>, vector<16x1xi32>
    %2 = tpu.iota {dimensions = array<i32: 1>} : vector<16x20xi32>
    %3 = vector.broadcast %1 : vector<16x1xi32> to vector<16x20xi32>
    %4 = arith.cmpi eq, %3, %2 : vector<16x20xi32>
    %5 = arith.extui %4 : vector<16x20xi1> to vector<16x20xi32>
    %6 = arith.sitofp %5 : vector<16x20xi32> to vector<16x20xf32>
    %c0_3 = arith.constant 0 : index
    %c0_4 = arith.constant 0 : index
    %7 = vector.load %arg2[%c0_3, %c0_4] : memref<20x96xf32, #tpu.memory_space<vmem>>, vector<20x96xf32>
    %cst = arith.constant dense<0.000000e+00> : vector<16x96xf32>
    %8 = tpu.matmul %6, %7, %cst {dimension_numbers = #tpu.dot_dimension_numbers<[1], [0], [0], [1], [0, 0, 1, 1], [], []>} : vector<16x20xf32>, vector<20x96xf32>, vector<16x96xf32> -> vector<16x96xf32>
    %9 = vector.extract_strided_slice %0 {offsets = [0, 0], sizes = [1, 96], strides = [1, 1]} : vector<16x128xf32> to vector<1x96xf32>
    %10 = vector.broadcast %9 : vector<1x96xf32> to vector<16x96xf32>
    %11 = arith.addf %8, %10 : vector<16x96xf32>
    %c0_5 = arith.constant 0 : index
    %c0_6 = arith.constant 0 : index
    %12 = vector.load %arg3[%c0_5, %c0_6] : memref<16x96xf32, #tpu.memory_space<vmem>>, vector<16x96xf32>
    %13 = vector.extract_strided_slice %0 {offsets = [1, 0], sizes = [1, 48], strides = [1, 1]} : vector<16x128xf32> to vector<1x48xf32>
    %14 = vector.extract_strided_slice %0 {offsets = [2, 0], sizes = [1, 48], strides = [1, 1]} : vector<16x128xf32> to vector<1x48xf32>
    %cst_7 = arith.constant 0.000000e+00 : f32
    %15 = vector.broadcast %cst_7 : f32 to vector<2x16xf32>
    %cst_8 = arith.constant 0.000000e+00 : f32
    %16 = vector.broadcast %cst_8 : f32 to vector<2x16xf32>
    %17 = tpu.concatenate %15, %16 in 0 : vector<2x16xf32>, vector<2x16xf32> -> vector<4x16xf32>
    %cst_9 = arith.constant dense<0.000000e+00> : vector<4x96xf32>
    %18 = tpu.matmul %17, %12, %cst_9 {dimension_numbers = #tpu.dot_dimension_numbers<[1], [0], [0], [1], [0, 0, 1, 1], [], []>} : vector<4x16xf32>, vector<16x96xf32>, vector<4x96xf32> -> vector<4x96xf32>
    %19 = vector.extract_strided_slice %18 {offsets = [0, 0], sizes = [2, 48], strides = [1, 1]} : vector<4x96xf32> to vector<2x48xf32>
    %20 = vector.broadcast %13 : vector<1x48xf32> to vector<2x48xf32>
    %21 = arith.addf %19, %20 : vector<2x48xf32>
    %22 = vector.extract_strided_slice %18 {offsets = [2, 48], sizes = [2, 48], strides = [1, 1]} : vector<4x96xf32> to vector<2x48xf32>
    %23 = vector.broadcast %14 : vector<1x48xf32> to vector<2x48xf32>
    %24 = arith.addf %22, %23 : vector<2x48xf32>
    %25 = vector.extract_strided_slice %11 {offsets = [0, 0], sizes = [2, 48], strides = [1, 1]} : vector<16x96xf32> to vector<2x48xf32>
    %26 = vector.extract_strided_slice %11 {offsets = [14, 48], sizes = [2, 48], strides = [1, 1]} : vector<16x96xf32> to vector<2x48xf32>
    %27 = vector.extract_strided_slice %25 {offsets = [0, 0], sizes = [2, 16], strides = [1, 1]} : vector<2x48xf32> to vector<2x16xf32>
    %28 = vector.extract_strided_slice %21 {offsets = [0, 0], sizes = [2, 16], strides = [1, 1]} : vector<2x48xf32> to vector<2x16xf32>
    %29 = arith.addf %27, %28 : vector<2x16xf32>
    %cst_10 = arith.constant 0.000000e+00 : f32
    %30 = vector.broadcast %cst_10 : f32 to vector<2x16xf32>
    %31 = arith.subf %30, %29 : vector<2x16xf32>
    %32 = math.exp %31 : vector<2x16xf32>
    %cst_11 = arith.constant 1.000000e+00 : f32
    %33 = vector.broadcast %cst_11 : f32 to vector<2x16xf32>
    %34 = arith.addf %33, %32 : vector<2x16xf32>
    %cst_12 = arith.constant 1.000000e+00 : f32
    %35 = vector.broadcast %cst_12 : f32 to vector<2x16xf32>
    %36 = arith.divf %35, %34 : vector<2x16xf32>
    %37 = vector.extract_strided_slice %25 {offsets = [0, 16], sizes = [2, 16], strides = [1, 1]} : vector<2x48xf32> to vector<2x16xf32>
    %38 = vector.extract_strided_slice %21 {offsets = [0, 16], sizes = [2, 16], strides = [1, 1]} : vector<2x48xf32> to vector<2x16xf32>
    %39 = arith.addf %37, %38 : vector<2x16xf32>
    %cst_13 = arith.constant 0.000000e+00 : f32
    %40 = vector.broadcast %cst_13 : f32 to vector<2x16xf32>
    %41 = arith.subf %40, %39 : vector<2x16xf32>
    %42 = math.exp %41 : vector<2x16xf32>
    %cst_14 = arith.constant 1.000000e+00 : f32
    %43 = vector.broadcast %cst_14 : f32 to vector<2x16xf32>
    %44 = arith.addf %43, %42 : vector<2x16xf32>
    %cst_15 = arith.constant 1.000000e+00 : f32
    %45 = vector.broadcast %cst_15 : f32 to vector<2x16xf32>
    %46 = arith.divf %45, %44 : vector<2x16xf32>
    %47 = vector.extract_strided_slice %25 {offsets = [0, 32], sizes = [2, 16], strides = [1, 1]} : vector<2x48xf32> to vector<2x16xf32>
    %48 = vector.extract_strided_slice %21 {offsets = [0, 32], sizes = [2, 16], strides = [1, 1]} : vector<2x48xf32> to vector<2x16xf32>
    %49 = arith.mulf %36, %48 : vector<2x16xf32>
    %50 = arith.addf %47, %49 : vector<2x16xf32>
    %51 = math.tanh %50 : vector<2x16xf32>
    %cst_16 = arith.constant 1.000000e+00 : f32
    %52 = vector.broadcast %cst_16 : f32 to vector<2x16xf32>
    %53 = arith.subf %52, %46 : vector<2x16xf32>
    %54 = arith.mulf %53, %51 : vector<2x16xf32>
    %55 = arith.mulf %46, %15 : vector<2x16xf32>
    %56 = arith.addf %54, %55 : vector<2x16xf32>
    %57 = vector.extract_strided_slice %26 {offsets = [0, 0], sizes = [2, 16], strides = [1, 1]} : vector<2x48xf32> to vector<2x16xf32>
    %58 = vector.extract_strided_slice %24 {offsets = [0, 0], sizes = [2, 16], strides = [1, 1]} : vector<2x48xf32> to vector<2x16xf32>
    %59 = arith.addf %57, %58 : vector<2x16xf32>
    %cst_17 = arith.constant 0.000000e+00 : f32
    %60 = vector.broadcast %cst_17 : f32 to vector<2x16xf32>
    %61 = arith.subf %60, %59 : vector<2x16xf32>
    %62 = math.exp %61 : vector<2x16xf32>
    %cst_18 = arith.constant 1.000000e+00 : f32
    %63 = vector.broadcast %cst_18 : f32 to vector<2x16xf32>
    %64 = arith.addf %63, %62 : vector<2x16xf32>
    %cst_19 = arith.constant 1.000000e+00 : f32
    %65 = vector.broadcast %cst_19 : f32 to vector<2x16xf32>
    %66 = arith.divf %65, %64 : vector<2x16xf32>
    %67 = vector.extract_strided_slice %26 {offsets = [0, 16], sizes = [2, 16], strides = [1, 1]} : vector<2x48xf32> to vector<2x16xf32>
    %68 = vector.extract_strided_slice %24 {offsets = [0, 16], sizes = [2, 16], strides = [1, 1]} : vector<2x48xf32> to vector<2x16xf32>
    %69 = arith.addf %67, %68 : vector<2x16xf32>
    %cst_20 = arith.constant 0.000000e+00 : f32
    %70 = vector.broadcast %cst_20 : f32 to vector<2x16xf32>
    %71 = arith.subf %70, %69 : vector<2x16xf32>
    %72 = math.exp %71 : vector<2x16xf32>
    %cst_21 = arith.constant 1.000000e+00 : f32
    %73 = vector.broadcast %cst_21 : f32 to vector<2x16xf32>
    %74 = arith.addf %73, %72 : vector<2x16xf32>
    %cst_22 = arith.constant 1.000000e+00 : f32
    %75 = vector.broadcast %cst_22 : f32 to vector<2x16xf32>
    %76 = arith.divf %75, %74 : vector<2x16xf32>
    %77 = vector.extract_strided_slice %26 {offsets = [0, 32], sizes = [2, 16], strides = [1, 1]} : vector<2x48xf32> to vector<2x16xf32>
    %78 = vector.extract_strided_slice %24 {offsets = [0, 32], sizes = [2, 16], strides = [1, 1]} : vector<2x48xf32> to vector<2x16xf32>
    %79 = arith.mulf %66, %78 : vector<2x16xf32>
    %80 = arith.addf %77, %79 : vector<2x16xf32>
    %81 = math.tanh %80 : vector<2x16xf32>
    %cst_23 = arith.constant 1.000000e+00 : f32
    %82 = vector.broadcast %cst_23 : f32 to vector<2x16xf32>
    %83 = arith.subf %82, %76 : vector<2x16xf32>
    %84 = arith.mulf %83, %81 : vector<2x16xf32>
    %85 = arith.mulf %76, %16 : vector<2x16xf32>
    %86 = arith.addf %84, %85 : vector<2x16xf32>
    %87 = tpu.concatenate %56, %86 in 0 : vector<2x16xf32>, vector<2x16xf32> -> vector<4x16xf32>
    %cst_24 = arith.constant dense<0.000000e+00> : vector<4x96xf32>
    %88 = tpu.matmul %87, %12, %cst_24 {dimension_numbers = #tpu.dot_dimension_numbers<[1], [0], [0], [1], [0, 0, 1, 1], [], []>} : vector<4x16xf32>, vector<16x96xf32>, vector<4x96xf32> -> vector<4x96xf32>
    %89 = vector.extract_strided_slice %88 {offsets = [0, 0], sizes = [2, 48], strides = [1, 1]} : vector<4x96xf32> to vector<2x48xf32>
    %90 = vector.broadcast %13 : vector<1x48xf32> to vector<2x48xf32>
    %91 = arith.addf %89, %90 : vector<2x48xf32>
    %92 = vector.extract_strided_slice %88 {offsets = [2, 48], sizes = [2, 48], strides = [1, 1]} : vector<4x96xf32> to vector<2x48xf32>
    %93 = vector.broadcast %14 : vector<1x48xf32> to vector<2x48xf32>
    %94 = arith.addf %92, %93 : vector<2x48xf32>
    %95 = vector.extract_strided_slice %11 {offsets = [2, 0], sizes = [2, 48], strides = [1, 1]} : vector<16x96xf32> to vector<2x48xf32>
    %96 = vector.extract_strided_slice %11 {offsets = [12, 48], sizes = [2, 48], strides = [1, 1]} : vector<16x96xf32> to vector<2x48xf32>
    %97 = vector.extract_strided_slice %95 {offsets = [0, 0], sizes = [2, 16], strides = [1, 1]} : vector<2x48xf32> to vector<2x16xf32>
    %98 = vector.extract_strided_slice %91 {offsets = [0, 0], sizes = [2, 16], strides = [1, 1]} : vector<2x48xf32> to vector<2x16xf32>
    %99 = arith.addf %97, %98 : vector<2x16xf32>
    %cst_25 = arith.constant 0.000000e+00 : f32
    %100 = vector.broadcast %cst_25 : f32 to vector<2x16xf32>
    %101 = arith.subf %100, %99 : vector<2x16xf32>
    %102 = math.exp %101 : vector<2x16xf32>
    %cst_26 = arith.constant 1.000000e+00 : f32
    %103 = vector.broadcast %cst_26 : f32 to vector<2x16xf32>
    %104 = arith.addf %103, %102 : vector<2x16xf32>
    %cst_27 = arith.constant 1.000000e+00 : f32
    %105 = vector.broadcast %cst_27 : f32 to vector<2x16xf32>
    %106 = arith.divf %105, %104 : vector<2x16xf32>
    %107 = vector.extract_strided_slice %95 {offsets = [0, 16], sizes = [2, 16], strides = [1, 1]} : vector<2x48xf32> to vector<2x16xf32>
    %108 = vector.extract_strided_slice %91 {offsets = [0, 16], sizes = [2, 16], strides = [1, 1]} : vector<2x48xf32> to vector<2x16xf32>
    %109 = arith.addf %107, %108 : vector<2x16xf32>
    %cst_28 = arith.constant 0.000000e+00 : f32
    %110 = vector.broadcast %cst_28 : f32 to vector<2x16xf32>
    %111 = arith.subf %110, %109 : vector<2x16xf32>
    %112 = math.exp %111 : vector<2x16xf32>
    %cst_29 = arith.constant 1.000000e+00 : f32
    %113 = vector.broadcast %cst_29 : f32 to vector<2x16xf32>
    %114 = arith.addf %113, %112 : vector<2x16xf32>
    %cst_30 = arith.constant 1.000000e+00 : f32
    %115 = vector.broadcast %cst_30 : f32 to vector<2x16xf32>
    %116 = arith.divf %115, %114 : vector<2x16xf32>
    %117 = vector.extract_strided_slice %95 {offsets = [0, 32], sizes = [2, 16], strides = [1, 1]} : vector<2x48xf32> to vector<2x16xf32>
    %118 = vector.extract_strided_slice %91 {offsets = [0, 32], sizes = [2, 16], strides = [1, 1]} : vector<2x48xf32> to vector<2x16xf32>
    %119 = arith.mulf %106, %118 : vector<2x16xf32>
    %120 = arith.addf %117, %119 : vector<2x16xf32>
    %121 = math.tanh %120 : vector<2x16xf32>
    %cst_31 = arith.constant 1.000000e+00 : f32
    %122 = vector.broadcast %cst_31 : f32 to vector<2x16xf32>
    %123 = arith.subf %122, %116 : vector<2x16xf32>
    %124 = arith.mulf %123, %121 : vector<2x16xf32>
    %125 = arith.mulf %116, %56 : vector<2x16xf32>
    %126 = arith.addf %124, %125 : vector<2x16xf32>
    %127 = vector.extract_strided_slice %96 {offsets = [0, 0], sizes = [2, 16], strides = [1, 1]} : vector<2x48xf32> to vector<2x16xf32>
    %128 = vector.extract_strided_slice %94 {offsets = [0, 0], sizes = [2, 16], strides = [1, 1]} : vector<2x48xf32> to vector<2x16xf32>
    %129 = arith.addf %127, %128 : vector<2x16xf32>
    %cst_32 = arith.constant 0.000000e+00 : f32
    %130 = vector.broadcast %cst_32 : f32 to vector<2x16xf32>
    %131 = arith.subf %130, %129 : vector<2x16xf32>
    %132 = math.exp %131 : vector<2x16xf32>
    %cst_33 = arith.constant 1.000000e+00 : f32
    %133 = vector.broadcast %cst_33 : f32 to vector<2x16xf32>
    %134 = arith.addf %133, %132 : vector<2x16xf32>
    %cst_34 = arith.constant 1.000000e+00 : f32
    %135 = vector.broadcast %cst_34 : f32 to vector<2x16xf32>
    %136 = arith.divf %135, %134 : vector<2x16xf32>
    %137 = vector.extract_strided_slice %96 {offsets = [0, 16], sizes = [2, 16], strides = [1, 1]} : vector<2x48xf32> to vector<2x16xf32>
    %138 = vector.extract_strided_slice %94 {offsets = [0, 16], sizes = [2, 16], strides = [1, 1]} : vector<2x48xf32> to vector<2x16xf32>
    %139 = arith.addf %137, %138 : vector<2x16xf32>
    %cst_35 = arith.constant 0.000000e+00 : f32
    %140 = vector.broadcast %cst_35 : f32 to vector<2x16xf32>
    %141 = arith.subf %140, %139 : vector<2x16xf32>
    %142 = math.exp %141 : vector<2x16xf32>
    %cst_36 = arith.constant 1.000000e+00 : f32
    %143 = vector.broadcast %cst_36 : f32 to vector<2x16xf32>
    %144 = arith.addf %143, %142 : vector<2x16xf32>
    %cst_37 = arith.constant 1.000000e+00 : f32
    %145 = vector.broadcast %cst_37 : f32 to vector<2x16xf32>
    %146 = arith.divf %145, %144 : vector<2x16xf32>
    %147 = vector.extract_strided_slice %96 {offsets = [0, 32], sizes = [2, 16], strides = [1, 1]} : vector<2x48xf32> to vector<2x16xf32>
    %148 = vector.extract_strided_slice %94 {offsets = [0, 32], sizes = [2, 16], strides = [1, 1]} : vector<2x48xf32> to vector<2x16xf32>
    %149 = arith.mulf %136, %148 : vector<2x16xf32>
    %150 = arith.addf %147, %149 : vector<2x16xf32>
    %151 = math.tanh %150 : vector<2x16xf32>
    %cst_38 = arith.constant 1.000000e+00 : f32
    %152 = vector.broadcast %cst_38 : f32 to vector<2x16xf32>
    %153 = arith.subf %152, %146 : vector<2x16xf32>
    %154 = arith.mulf %153, %151 : vector<2x16xf32>
    %155 = arith.mulf %146, %86 : vector<2x16xf32>
    %156 = arith.addf %154, %155 : vector<2x16xf32>
    %157 = tpu.concatenate %126, %156 in 0 : vector<2x16xf32>, vector<2x16xf32> -> vector<4x16xf32>
    %cst_39 = arith.constant dense<0.000000e+00> : vector<4x96xf32>
    %158 = tpu.matmul %157, %12, %cst_39 {dimension_numbers = #tpu.dot_dimension_numbers<[1], [0], [0], [1], [0, 0, 1, 1], [], []>} : vector<4x16xf32>, vector<16x96xf32>, vector<4x96xf32> -> vector<4x96xf32>
    %159 = vector.extract_strided_slice %158 {offsets = [0, 0], sizes = [2, 48], strides = [1, 1]} : vector<4x96xf32> to vector<2x48xf32>
    %160 = vector.broadcast %13 : vector<1x48xf32> to vector<2x48xf32>
    %161 = arith.addf %159, %160 : vector<2x48xf32>
    %162 = vector.extract_strided_slice %158 {offsets = [2, 48], sizes = [2, 48], strides = [1, 1]} : vector<4x96xf32> to vector<2x48xf32>
    %163 = vector.broadcast %14 : vector<1x48xf32> to vector<2x48xf32>
    %164 = arith.addf %162, %163 : vector<2x48xf32>
    %165 = vector.extract_strided_slice %11 {offsets = [4, 0], sizes = [2, 48], strides = [1, 1]} : vector<16x96xf32> to vector<2x48xf32>
    %166 = vector.extract_strided_slice %11 {offsets = [10, 48], sizes = [2, 48], strides = [1, 1]} : vector<16x96xf32> to vector<2x48xf32>
    %167 = vector.extract_strided_slice %165 {offsets = [0, 0], sizes = [2, 16], strides = [1, 1]} : vector<2x48xf32> to vector<2x16xf32>
    %168 = vector.extract_strided_slice %161 {offsets = [0, 0], sizes = [2, 16], strides = [1, 1]} : vector<2x48xf32> to vector<2x16xf32>
    %169 = arith.addf %167, %168 : vector<2x16xf32>
    %cst_40 = arith.constant 0.000000e+00 : f32
    %170 = vector.broadcast %cst_40 : f32 to vector<2x16xf32>
    %171 = arith.subf %170, %169 : vector<2x16xf32>
    %172 = math.exp %171 : vector<2x16xf32>
    %cst_41 = arith.constant 1.000000e+00 : f32
    %173 = vector.broadcast %cst_41 : f32 to vector<2x16xf32>
    %174 = arith.addf %173, %172 : vector<2x16xf32>
    %cst_42 = arith.constant 1.000000e+00 : f32
    %175 = vector.broadcast %cst_42 : f32 to vector<2x16xf32>
    %176 = arith.divf %175, %174 : vector<2x16xf32>
    %177 = vector.extract_strided_slice %165 {offsets = [0, 16], sizes = [2, 16], strides = [1, 1]} : vector<2x48xf32> to vector<2x16xf32>
    %178 = vector.extract_strided_slice %161 {offsets = [0, 16], sizes = [2, 16], strides = [1, 1]} : vector<2x48xf32> to vector<2x16xf32>
    %179 = arith.addf %177, %178 : vector<2x16xf32>
    %cst_43 = arith.constant 0.000000e+00 : f32
    %180 = vector.broadcast %cst_43 : f32 to vector<2x16xf32>
    %181 = arith.subf %180, %179 : vector<2x16xf32>
    %182 = math.exp %181 : vector<2x16xf32>
    %cst_44 = arith.constant 1.000000e+00 : f32
    %183 = vector.broadcast %cst_44 : f32 to vector<2x16xf32>
    %184 = arith.addf %183, %182 : vector<2x16xf32>
    %cst_45 = arith.constant 1.000000e+00 : f32
    %185 = vector.broadcast %cst_45 : f32 to vector<2x16xf32>
    %186 = arith.divf %185, %184 : vector<2x16xf32>
    %187 = vector.extract_strided_slice %165 {offsets = [0, 32], sizes = [2, 16], strides = [1, 1]} : vector<2x48xf32> to vector<2x16xf32>
    %188 = vector.extract_strided_slice %161 {offsets = [0, 32], sizes = [2, 16], strides = [1, 1]} : vector<2x48xf32> to vector<2x16xf32>
    %189 = arith.mulf %176, %188 : vector<2x16xf32>
    %190 = arith.addf %187, %189 : vector<2x16xf32>
    %191 = math.tanh %190 : vector<2x16xf32>
    %cst_46 = arith.constant 1.000000e+00 : f32
    %192 = vector.broadcast %cst_46 : f32 to vector<2x16xf32>
    %193 = arith.subf %192, %186 : vector<2x16xf32>
    %194 = arith.mulf %193, %191 : vector<2x16xf32>
    %195 = arith.mulf %186, %126 : vector<2x16xf32>
    %196 = arith.addf %194, %195 : vector<2x16xf32>
    %197 = vector.extract_strided_slice %166 {offsets = [0, 0], sizes = [2, 16], strides = [1, 1]} : vector<2x48xf32> to vector<2x16xf32>
    %198 = vector.extract_strided_slice %164 {offsets = [0, 0], sizes = [2, 16], strides = [1, 1]} : vector<2x48xf32> to vector<2x16xf32>
    %199 = arith.addf %197, %198 : vector<2x16xf32>
    %cst_47 = arith.constant 0.000000e+00 : f32
    %200 = vector.broadcast %cst_47 : f32 to vector<2x16xf32>
    %201 = arith.subf %200, %199 : vector<2x16xf32>
    %202 = math.exp %201 : vector<2x16xf32>
    %cst_48 = arith.constant 1.000000e+00 : f32
    %203 = vector.broadcast %cst_48 : f32 to vector<2x16xf32>
    %204 = arith.addf %203, %202 : vector<2x16xf32>
    %cst_49 = arith.constant 1.000000e+00 : f32
    %205 = vector.broadcast %cst_49 : f32 to vector<2x16xf32>
    %206 = arith.divf %205, %204 : vector<2x16xf32>
    %207 = vector.extract_strided_slice %166 {offsets = [0, 16], sizes = [2, 16], strides = [1, 1]} : vector<2x48xf32> to vector<2x16xf32>
    %208 = vector.extract_strided_slice %164 {offsets = [0, 16], sizes = [2, 16], strides = [1, 1]} : vector<2x48xf32> to vector<2x16xf32>
    %209 = arith.addf %207, %208 : vector<2x16xf32>
    %cst_50 = arith.constant 0.000000e+00 : f32
    %210 = vector.broadcast %cst_50 : f32 to vector<2x16xf32>
    %211 = arith.subf %210, %209 : vector<2x16xf32>
    %212 = math.exp %211 : vector<2x16xf32>
    %cst_51 = arith.constant 1.000000e+00 : f32
    %213 = vector.broadcast %cst_51 : f32 to vector<2x16xf32>
    %214 = arith.addf %213, %212 : vector<2x16xf32>
    %cst_52 = arith.constant 1.000000e+00 : f32
    %215 = vector.broadcast %cst_52 : f32 to vector<2x16xf32>
    %216 = arith.divf %215, %214 : vector<2x16xf32>
    %217 = vector.extract_strided_slice %166 {offsets = [0, 32], sizes = [2, 16], strides = [1, 1]} : vector<2x48xf32> to vector<2x16xf32>
    %218 = vector.extract_strided_slice %164 {offsets = [0, 32], sizes = [2, 16], strides = [1, 1]} : vector<2x48xf32> to vector<2x16xf32>
    %219 = arith.mulf %206, %218 : vector<2x16xf32>
    %220 = arith.addf %217, %219 : vector<2x16xf32>
    %221 = math.tanh %220 : vector<2x16xf32>
    %cst_53 = arith.constant 1.000000e+00 : f32
    %222 = vector.broadcast %cst_53 : f32 to vector<2x16xf32>
    %223 = arith.subf %222, %216 : vector<2x16xf32>
    %224 = arith.mulf %223, %221 : vector<2x16xf32>
    %225 = arith.mulf %216, %156 : vector<2x16xf32>
    %226 = arith.addf %224, %225 : vector<2x16xf32>
    %227 = tpu.concatenate %196, %226 in 0 : vector<2x16xf32>, vector<2x16xf32> -> vector<4x16xf32>
    %cst_54 = arith.constant dense<0.000000e+00> : vector<4x96xf32>
    %228 = tpu.matmul %227, %12, %cst_54 {dimension_numbers = #tpu.dot_dimension_numbers<[1], [0], [0], [1], [0, 0, 1, 1], [], []>} : vector<4x16xf32>, vector<16x96xf32>, vector<4x96xf32> -> vector<4x96xf32>
    %229 = vector.extract_strided_slice %228 {offsets = [0, 0], sizes = [2, 48], strides = [1, 1]} : vector<4x96xf32> to vector<2x48xf32>
    %230 = vector.broadcast %13 : vector<1x48xf32> to vector<2x48xf32>
    %231 = arith.addf %229, %230 : vector<2x48xf32>
    %232 = vector.extract_strided_slice %228 {offsets = [2, 48], sizes = [2, 48], strides = [1, 1]} : vector<4x96xf32> to vector<2x48xf32>
    %233 = vector.broadcast %14 : vector<1x48xf32> to vector<2x48xf32>
    %234 = arith.addf %232, %233 : vector<2x48xf32>
    %235 = vector.extract_strided_slice %11 {offsets = [6, 0], sizes = [2, 48], strides = [1, 1]} : vector<16x96xf32> to vector<2x48xf32>
    %236 = vector.extract_strided_slice %11 {offsets = [8, 48], sizes = [2, 48], strides = [1, 1]} : vector<16x96xf32> to vector<2x48xf32>
    %237 = vector.extract_strided_slice %235 {offsets = [0, 0], sizes = [2, 16], strides = [1, 1]} : vector<2x48xf32> to vector<2x16xf32>
    %238 = vector.extract_strided_slice %231 {offsets = [0, 0], sizes = [2, 16], strides = [1, 1]} : vector<2x48xf32> to vector<2x16xf32>
    %239 = arith.addf %237, %238 : vector<2x16xf32>
    %cst_55 = arith.constant 0.000000e+00 : f32
    %240 = vector.broadcast %cst_55 : f32 to vector<2x16xf32>
    %241 = arith.subf %240, %239 : vector<2x16xf32>
    %242 = math.exp %241 : vector<2x16xf32>
    %cst_56 = arith.constant 1.000000e+00 : f32
    %243 = vector.broadcast %cst_56 : f32 to vector<2x16xf32>
    %244 = arith.addf %243, %242 : vector<2x16xf32>
    %cst_57 = arith.constant 1.000000e+00 : f32
    %245 = vector.broadcast %cst_57 : f32 to vector<2x16xf32>
    %246 = arith.divf %245, %244 : vector<2x16xf32>
    %247 = vector.extract_strided_slice %235 {offsets = [0, 16], sizes = [2, 16], strides = [1, 1]} : vector<2x48xf32> to vector<2x16xf32>
    %248 = vector.extract_strided_slice %231 {offsets = [0, 16], sizes = [2, 16], strides = [1, 1]} : vector<2x48xf32> to vector<2x16xf32>
    %249 = arith.addf %247, %248 : vector<2x16xf32>
    %cst_58 = arith.constant 0.000000e+00 : f32
    %250 = vector.broadcast %cst_58 : f32 to vector<2x16xf32>
    %251 = arith.subf %250, %249 : vector<2x16xf32>
    %252 = math.exp %251 : vector<2x16xf32>
    %cst_59 = arith.constant 1.000000e+00 : f32
    %253 = vector.broadcast %cst_59 : f32 to vector<2x16xf32>
    %254 = arith.addf %253, %252 : vector<2x16xf32>
    %cst_60 = arith.constant 1.000000e+00 : f32
    %255 = vector.broadcast %cst_60 : f32 to vector<2x16xf32>
    %256 = arith.divf %255, %254 : vector<2x16xf32>
    %257 = vector.extract_strided_slice %235 {offsets = [0, 32], sizes = [2, 16], strides = [1, 1]} : vector<2x48xf32> to vector<2x16xf32>
    %258 = vector.extract_strided_slice %231 {offsets = [0, 32], sizes = [2, 16], strides = [1, 1]} : vector<2x48xf32> to vector<2x16xf32>
    %259 = arith.mulf %246, %258 : vector<2x16xf32>
    %260 = arith.addf %257, %259 : vector<2x16xf32>
    %261 = math.tanh %260 : vector<2x16xf32>
    %cst_61 = arith.constant 1.000000e+00 : f32
    %262 = vector.broadcast %cst_61 : f32 to vector<2x16xf32>
    %263 = arith.subf %262, %256 : vector<2x16xf32>
    %264 = arith.mulf %263, %261 : vector<2x16xf32>
    %265 = arith.mulf %256, %196 : vector<2x16xf32>
    %266 = arith.addf %264, %265 : vector<2x16xf32>
    %267 = vector.extract_strided_slice %236 {offsets = [0, 0], sizes = [2, 16], strides = [1, 1]} : vector<2x48xf32> to vector<2x16xf32>
    %268 = vector.extract_strided_slice %234 {offsets = [0, 0], sizes = [2, 16], strides = [1, 1]} : vector<2x48xf32> to vector<2x16xf32>
    %269 = arith.addf %267, %268 : vector<2x16xf32>
    %cst_62 = arith.constant 0.000000e+00 : f32
    %270 = vector.broadcast %cst_62 : f32 to vector<2x16xf32>
    %271 = arith.subf %270, %269 : vector<2x16xf32>
    %272 = math.exp %271 : vector<2x16xf32>
    %cst_63 = arith.constant 1.000000e+00 : f32
    %273 = vector.broadcast %cst_63 : f32 to vector<2x16xf32>
    %274 = arith.addf %273, %272 : vector<2x16xf32>
    %cst_64 = arith.constant 1.000000e+00 : f32
    %275 = vector.broadcast %cst_64 : f32 to vector<2x16xf32>
    %276 = arith.divf %275, %274 : vector<2x16xf32>
    %277 = vector.extract_strided_slice %236 {offsets = [0, 16], sizes = [2, 16], strides = [1, 1]} : vector<2x48xf32> to vector<2x16xf32>
    %278 = vector.extract_strided_slice %234 {offsets = [0, 16], sizes = [2, 16], strides = [1, 1]} : vector<2x48xf32> to vector<2x16xf32>
    %279 = arith.addf %277, %278 : vector<2x16xf32>
    %cst_65 = arith.constant 0.000000e+00 : f32
    %280 = vector.broadcast %cst_65 : f32 to vector<2x16xf32>
    %281 = arith.subf %280, %279 : vector<2x16xf32>
    %282 = math.exp %281 : vector<2x16xf32>
    %cst_66 = arith.constant 1.000000e+00 : f32
    %283 = vector.broadcast %cst_66 : f32 to vector<2x16xf32>
    %284 = arith.addf %283, %282 : vector<2x16xf32>
    %cst_67 = arith.constant 1.000000e+00 : f32
    %285 = vector.broadcast %cst_67 : f32 to vector<2x16xf32>
    %286 = arith.divf %285, %284 : vector<2x16xf32>
    %287 = vector.extract_strided_slice %236 {offsets = [0, 32], sizes = [2, 16], strides = [1, 1]} : vector<2x48xf32> to vector<2x16xf32>
    %288 = vector.extract_strided_slice %234 {offsets = [0, 32], sizes = [2, 16], strides = [1, 1]} : vector<2x48xf32> to vector<2x16xf32>
    %289 = arith.mulf %276, %288 : vector<2x16xf32>
    %290 = arith.addf %287, %289 : vector<2x16xf32>
    %291 = math.tanh %290 : vector<2x16xf32>
    %cst_68 = arith.constant 1.000000e+00 : f32
    %292 = vector.broadcast %cst_68 : f32 to vector<2x16xf32>
    %293 = arith.subf %292, %286 : vector<2x16xf32>
    %294 = arith.mulf %293, %291 : vector<2x16xf32>
    %295 = arith.mulf %286, %226 : vector<2x16xf32>
    %296 = arith.addf %294, %295 : vector<2x16xf32>
    %297 = tpu.concatenate %266, %296 in 0 : vector<2x16xf32>, vector<2x16xf32> -> vector<4x16xf32>
    %cst_69 = arith.constant dense<0.000000e+00> : vector<4x96xf32>
    %298 = tpu.matmul %297, %12, %cst_69 {dimension_numbers = #tpu.dot_dimension_numbers<[1], [0], [0], [1], [0, 0, 1, 1], [], []>} : vector<4x16xf32>, vector<16x96xf32>, vector<4x96xf32> -> vector<4x96xf32>
    %299 = vector.extract_strided_slice %298 {offsets = [0, 0], sizes = [2, 48], strides = [1, 1]} : vector<4x96xf32> to vector<2x48xf32>
    %300 = vector.broadcast %13 : vector<1x48xf32> to vector<2x48xf32>
    %301 = arith.addf %299, %300 : vector<2x48xf32>
    %302 = vector.extract_strided_slice %298 {offsets = [2, 48], sizes = [2, 48], strides = [1, 1]} : vector<4x96xf32> to vector<2x48xf32>
    %303 = vector.broadcast %14 : vector<1x48xf32> to vector<2x48xf32>
    %304 = arith.addf %302, %303 : vector<2x48xf32>
    %305 = vector.extract_strided_slice %11 {offsets = [8, 0], sizes = [2, 48], strides = [1, 1]} : vector<16x96xf32> to vector<2x48xf32>
    %306 = vector.extract_strided_slice %11 {offsets = [6, 48], sizes = [2, 48], strides = [1, 1]} : vector<16x96xf32> to vector<2x48xf32>
    %307 = vector.extract_strided_slice %305 {offsets = [0, 0], sizes = [2, 16], strides = [1, 1]} : vector<2x48xf32> to vector<2x16xf32>
    %308 = vector.extract_strided_slice %301 {offsets = [0, 0], sizes = [2, 16], strides = [1, 1]} : vector<2x48xf32> to vector<2x16xf32>
    %309 = arith.addf %307, %308 : vector<2x16xf32>
    %cst_70 = arith.constant 0.000000e+00 : f32
    %310 = vector.broadcast %cst_70 : f32 to vector<2x16xf32>
    %311 = arith.subf %310, %309 : vector<2x16xf32>
    %312 = math.exp %311 : vector<2x16xf32>
    %cst_71 = arith.constant 1.000000e+00 : f32
    %313 = vector.broadcast %cst_71 : f32 to vector<2x16xf32>
    %314 = arith.addf %313, %312 : vector<2x16xf32>
    %cst_72 = arith.constant 1.000000e+00 : f32
    %315 = vector.broadcast %cst_72 : f32 to vector<2x16xf32>
    %316 = arith.divf %315, %314 : vector<2x16xf32>
    %317 = vector.extract_strided_slice %305 {offsets = [0, 16], sizes = [2, 16], strides = [1, 1]} : vector<2x48xf32> to vector<2x16xf32>
    %318 = vector.extract_strided_slice %301 {offsets = [0, 16], sizes = [2, 16], strides = [1, 1]} : vector<2x48xf32> to vector<2x16xf32>
    %319 = arith.addf %317, %318 : vector<2x16xf32>
    %cst_73 = arith.constant 0.000000e+00 : f32
    %320 = vector.broadcast %cst_73 : f32 to vector<2x16xf32>
    %321 = arith.subf %320, %319 : vector<2x16xf32>
    %322 = math.exp %321 : vector<2x16xf32>
    %cst_74 = arith.constant 1.000000e+00 : f32
    %323 = vector.broadcast %cst_74 : f32 to vector<2x16xf32>
    %324 = arith.addf %323, %322 : vector<2x16xf32>
    %cst_75 = arith.constant 1.000000e+00 : f32
    %325 = vector.broadcast %cst_75 : f32 to vector<2x16xf32>
    %326 = arith.divf %325, %324 : vector<2x16xf32>
    %327 = vector.extract_strided_slice %305 {offsets = [0, 32], sizes = [2, 16], strides = [1, 1]} : vector<2x48xf32> to vector<2x16xf32>
    %328 = vector.extract_strided_slice %301 {offsets = [0, 32], sizes = [2, 16], strides = [1, 1]} : vector<2x48xf32> to vector<2x16xf32>
    %329 = arith.mulf %316, %328 : vector<2x16xf32>
    %330 = arith.addf %327, %329 : vector<2x16xf32>
    %331 = math.tanh %330 : vector<2x16xf32>
    %cst_76 = arith.constant 1.000000e+00 : f32
    %332 = vector.broadcast %cst_76 : f32 to vector<2x16xf32>
    %333 = arith.subf %332, %326 : vector<2x16xf32>
    %334 = arith.mulf %333, %331 : vector<2x16xf32>
    %335 = arith.mulf %326, %266 : vector<2x16xf32>
    %336 = arith.addf %334, %335 : vector<2x16xf32>
    %337 = vector.extract_strided_slice %306 {offsets = [0, 0], sizes = [2, 16], strides = [1, 1]} : vector<2x48xf32> to vector<2x16xf32>
    %338 = vector.extract_strided_slice %304 {offsets = [0, 0], sizes = [2, 16], strides = [1, 1]} : vector<2x48xf32> to vector<2x16xf32>
    %339 = arith.addf %337, %338 : vector<2x16xf32>
    %cst_77 = arith.constant 0.000000e+00 : f32
    %340 = vector.broadcast %cst_77 : f32 to vector<2x16xf32>
    %341 = arith.subf %340, %339 : vector<2x16xf32>
    %342 = math.exp %341 : vector<2x16xf32>
    %cst_78 = arith.constant 1.000000e+00 : f32
    %343 = vector.broadcast %cst_78 : f32 to vector<2x16xf32>
    %344 = arith.addf %343, %342 : vector<2x16xf32>
    %cst_79 = arith.constant 1.000000e+00 : f32
    %345 = vector.broadcast %cst_79 : f32 to vector<2x16xf32>
    %346 = arith.divf %345, %344 : vector<2x16xf32>
    %347 = vector.extract_strided_slice %306 {offsets = [0, 16], sizes = [2, 16], strides = [1, 1]} : vector<2x48xf32> to vector<2x16xf32>
    %348 = vector.extract_strided_slice %304 {offsets = [0, 16], sizes = [2, 16], strides = [1, 1]} : vector<2x48xf32> to vector<2x16xf32>
    %349 = arith.addf %347, %348 : vector<2x16xf32>
    %cst_80 = arith.constant 0.000000e+00 : f32
    %350 = vector.broadcast %cst_80 : f32 to vector<2x16xf32>
    %351 = arith.subf %350, %349 : vector<2x16xf32>
    %352 = math.exp %351 : vector<2x16xf32>
    %cst_81 = arith.constant 1.000000e+00 : f32
    %353 = vector.broadcast %cst_81 : f32 to vector<2x16xf32>
    %354 = arith.addf %353, %352 : vector<2x16xf32>
    %cst_82 = arith.constant 1.000000e+00 : f32
    %355 = vector.broadcast %cst_82 : f32 to vector<2x16xf32>
    %356 = arith.divf %355, %354 : vector<2x16xf32>
    %357 = vector.extract_strided_slice %306 {offsets = [0, 32], sizes = [2, 16], strides = [1, 1]} : vector<2x48xf32> to vector<2x16xf32>
    %358 = vector.extract_strided_slice %304 {offsets = [0, 32], sizes = [2, 16], strides = [1, 1]} : vector<2x48xf32> to vector<2x16xf32>
    %359 = arith.mulf %346, %358 : vector<2x16xf32>
    %360 = arith.addf %357, %359 : vector<2x16xf32>
    %361 = math.tanh %360 : vector<2x16xf32>
    %cst_83 = arith.constant 1.000000e+00 : f32
    %362 = vector.broadcast %cst_83 : f32 to vector<2x16xf32>
    %363 = arith.subf %362, %356 : vector<2x16xf32>
    %364 = arith.mulf %363, %361 : vector<2x16xf32>
    %365 = arith.mulf %356, %296 : vector<2x16xf32>
    %366 = arith.addf %364, %365 : vector<2x16xf32>
    %367 = tpu.concatenate %336, %366 in 0 : vector<2x16xf32>, vector<2x16xf32> -> vector<4x16xf32>
    %cst_84 = arith.constant dense<0.000000e+00> : vector<4x96xf32>
    %368 = tpu.matmul %367, %12, %cst_84 {dimension_numbers = #tpu.dot_dimension_numbers<[1], [0], [0], [1], [0, 0, 1, 1], [], []>} : vector<4x16xf32>, vector<16x96xf32>, vector<4x96xf32> -> vector<4x96xf32>
    %369 = vector.extract_strided_slice %368 {offsets = [0, 0], sizes = [2, 48], strides = [1, 1]} : vector<4x96xf32> to vector<2x48xf32>
    %370 = vector.broadcast %13 : vector<1x48xf32> to vector<2x48xf32>
    %371 = arith.addf %369, %370 : vector<2x48xf32>
    %372 = vector.extract_strided_slice %368 {offsets = [2, 48], sizes = [2, 48], strides = [1, 1]} : vector<4x96xf32> to vector<2x48xf32>
    %373 = vector.broadcast %14 : vector<1x48xf32> to vector<2x48xf32>
    %374 = arith.addf %372, %373 : vector<2x48xf32>
    %375 = vector.extract_strided_slice %11 {offsets = [10, 0], sizes = [2, 48], strides = [1, 1]} : vector<16x96xf32> to vector<2x48xf32>
    %376 = vector.extract_strided_slice %11 {offsets = [4, 48], sizes = [2, 48], strides = [1, 1]} : vector<16x96xf32> to vector<2x48xf32>
    %377 = vector.extract_strided_slice %375 {offsets = [0, 0], sizes = [2, 16], strides = [1, 1]} : vector<2x48xf32> to vector<2x16xf32>
    %378 = vector.extract_strided_slice %371 {offsets = [0, 0], sizes = [2, 16], strides = [1, 1]} : vector<2x48xf32> to vector<2x16xf32>
    %379 = arith.addf %377, %378 : vector<2x16xf32>
    %cst_85 = arith.constant 0.000000e+00 : f32
    %380 = vector.broadcast %cst_85 : f32 to vector<2x16xf32>
    %381 = arith.subf %380, %379 : vector<2x16xf32>
    %382 = math.exp %381 : vector<2x16xf32>
    %cst_86 = arith.constant 1.000000e+00 : f32
    %383 = vector.broadcast %cst_86 : f32 to vector<2x16xf32>
    %384 = arith.addf %383, %382 : vector<2x16xf32>
    %cst_87 = arith.constant 1.000000e+00 : f32
    %385 = vector.broadcast %cst_87 : f32 to vector<2x16xf32>
    %386 = arith.divf %385, %384 : vector<2x16xf32>
    %387 = vector.extract_strided_slice %375 {offsets = [0, 16], sizes = [2, 16], strides = [1, 1]} : vector<2x48xf32> to vector<2x16xf32>
    %388 = vector.extract_strided_slice %371 {offsets = [0, 16], sizes = [2, 16], strides = [1, 1]} : vector<2x48xf32> to vector<2x16xf32>
    %389 = arith.addf %387, %388 : vector<2x16xf32>
    %cst_88 = arith.constant 0.000000e+00 : f32
    %390 = vector.broadcast %cst_88 : f32 to vector<2x16xf32>
    %391 = arith.subf %390, %389 : vector<2x16xf32>
    %392 = math.exp %391 : vector<2x16xf32>
    %cst_89 = arith.constant 1.000000e+00 : f32
    %393 = vector.broadcast %cst_89 : f32 to vector<2x16xf32>
    %394 = arith.addf %393, %392 : vector<2x16xf32>
    %cst_90 = arith.constant 1.000000e+00 : f32
    %395 = vector.broadcast %cst_90 : f32 to vector<2x16xf32>
    %396 = arith.divf %395, %394 : vector<2x16xf32>
    %397 = vector.extract_strided_slice %375 {offsets = [0, 32], sizes = [2, 16], strides = [1, 1]} : vector<2x48xf32> to vector<2x16xf32>
    %398 = vector.extract_strided_slice %371 {offsets = [0, 32], sizes = [2, 16], strides = [1, 1]} : vector<2x48xf32> to vector<2x16xf32>
    %399 = arith.mulf %386, %398 : vector<2x16xf32>
    %400 = arith.addf %397, %399 : vector<2x16xf32>
    %401 = math.tanh %400 : vector<2x16xf32>
    %cst_91 = arith.constant 1.000000e+00 : f32
    %402 = vector.broadcast %cst_91 : f32 to vector<2x16xf32>
    %403 = arith.subf %402, %396 : vector<2x16xf32>
    %404 = arith.mulf %403, %401 : vector<2x16xf32>
    %405 = arith.mulf %396, %336 : vector<2x16xf32>
    %406 = arith.addf %404, %405 : vector<2x16xf32>
    %407 = vector.extract_strided_slice %376 {offsets = [0, 0], sizes = [2, 16], strides = [1, 1]} : vector<2x48xf32> to vector<2x16xf32>
    %408 = vector.extract_strided_slice %374 {offsets = [0, 0], sizes = [2, 16], strides = [1, 1]} : vector<2x48xf32> to vector<2x16xf32>
    %409 = arith.addf %407, %408 : vector<2x16xf32>
    %cst_92 = arith.constant 0.000000e+00 : f32
    %410 = vector.broadcast %cst_92 : f32 to vector<2x16xf32>
    %411 = arith.subf %410, %409 : vector<2x16xf32>
    %412 = math.exp %411 : vector<2x16xf32>
    %cst_93 = arith.constant 1.000000e+00 : f32
    %413 = vector.broadcast %cst_93 : f32 to vector<2x16xf32>
    %414 = arith.addf %413, %412 : vector<2x16xf32>
    %cst_94 = arith.constant 1.000000e+00 : f32
    %415 = vector.broadcast %cst_94 : f32 to vector<2x16xf32>
    %416 = arith.divf %415, %414 : vector<2x16xf32>
    %417 = vector.extract_strided_slice %376 {offsets = [0, 16], sizes = [2, 16], strides = [1, 1]} : vector<2x48xf32> to vector<2x16xf32>
    %418 = vector.extract_strided_slice %374 {offsets = [0, 16], sizes = [2, 16], strides = [1, 1]} : vector<2x48xf32> to vector<2x16xf32>
    %419 = arith.addf %417, %418 : vector<2x16xf32>
    %cst_95 = arith.constant 0.000000e+00 : f32
    %420 = vector.broadcast %cst_95 : f32 to vector<2x16xf32>
    %421 = arith.subf %420, %419 : vector<2x16xf32>
    %422 = math.exp %421 : vector<2x16xf32>
    %cst_96 = arith.constant 1.000000e+00 : f32
    %423 = vector.broadcast %cst_96 : f32 to vector<2x16xf32>
    %424 = arith.addf %423, %422 : vector<2x16xf32>
    %cst_97 = arith.constant 1.000000e+00 : f32
    %425 = vector.broadcast %cst_97 : f32 to vector<2x16xf32>
    %426 = arith.divf %425, %424 : vector<2x16xf32>
    %427 = vector.extract_strided_slice %376 {offsets = [0, 32], sizes = [2, 16], strides = [1, 1]} : vector<2x48xf32> to vector<2x16xf32>
    %428 = vector.extract_strided_slice %374 {offsets = [0, 32], sizes = [2, 16], strides = [1, 1]} : vector<2x48xf32> to vector<2x16xf32>
    %429 = arith.mulf %416, %428 : vector<2x16xf32>
    %430 = arith.addf %427, %429 : vector<2x16xf32>
    %431 = math.tanh %430 : vector<2x16xf32>
    %cst_98 = arith.constant 1.000000e+00 : f32
    %432 = vector.broadcast %cst_98 : f32 to vector<2x16xf32>
    %433 = arith.subf %432, %426 : vector<2x16xf32>
    %434 = arith.mulf %433, %431 : vector<2x16xf32>
    %435 = arith.mulf %426, %366 : vector<2x16xf32>
    %436 = arith.addf %434, %435 : vector<2x16xf32>
    %437 = tpu.concatenate %406, %436 in 0 : vector<2x16xf32>, vector<2x16xf32> -> vector<4x16xf32>
    %cst_99 = arith.constant dense<0.000000e+00> : vector<4x96xf32>
    %438 = tpu.matmul %437, %12, %cst_99 {dimension_numbers = #tpu.dot_dimension_numbers<[1], [0], [0], [1], [0, 0, 1, 1], [], []>} : vector<4x16xf32>, vector<16x96xf32>, vector<4x96xf32> -> vector<4x96xf32>
    %439 = vector.extract_strided_slice %438 {offsets = [0, 0], sizes = [2, 48], strides = [1, 1]} : vector<4x96xf32> to vector<2x48xf32>
    %440 = vector.broadcast %13 : vector<1x48xf32> to vector<2x48xf32>
    %441 = arith.addf %439, %440 : vector<2x48xf32>
    %442 = vector.extract_strided_slice %438 {offsets = [2, 48], sizes = [2, 48], strides = [1, 1]} : vector<4x96xf32> to vector<2x48xf32>
    %443 = vector.broadcast %14 : vector<1x48xf32> to vector<2x48xf32>
    %444 = arith.addf %442, %443 : vector<2x48xf32>
    %445 = vector.extract_strided_slice %11 {offsets = [12, 0], sizes = [2, 48], strides = [1, 1]} : vector<16x96xf32> to vector<2x48xf32>
    %446 = vector.extract_strided_slice %11 {offsets = [2, 48], sizes = [2, 48], strides = [1, 1]} : vector<16x96xf32> to vector<2x48xf32>
    %447 = vector.extract_strided_slice %445 {offsets = [0, 0], sizes = [2, 16], strides = [1, 1]} : vector<2x48xf32> to vector<2x16xf32>
    %448 = vector.extract_strided_slice %441 {offsets = [0, 0], sizes = [2, 16], strides = [1, 1]} : vector<2x48xf32> to vector<2x16xf32>
    %449 = arith.addf %447, %448 : vector<2x16xf32>
    %cst_100 = arith.constant 0.000000e+00 : f32
    %450 = vector.broadcast %cst_100 : f32 to vector<2x16xf32>
    %451 = arith.subf %450, %449 : vector<2x16xf32>
    %452 = math.exp %451 : vector<2x16xf32>
    %cst_101 = arith.constant 1.000000e+00 : f32
    %453 = vector.broadcast %cst_101 : f32 to vector<2x16xf32>
    %454 = arith.addf %453, %452 : vector<2x16xf32>
    %cst_102 = arith.constant 1.000000e+00 : f32
    %455 = vector.broadcast %cst_102 : f32 to vector<2x16xf32>
    %456 = arith.divf %455, %454 : vector<2x16xf32>
    %457 = vector.extract_strided_slice %445 {offsets = [0, 16], sizes = [2, 16], strides = [1, 1]} : vector<2x48xf32> to vector<2x16xf32>
    %458 = vector.extract_strided_slice %441 {offsets = [0, 16], sizes = [2, 16], strides = [1, 1]} : vector<2x48xf32> to vector<2x16xf32>
    %459 = arith.addf %457, %458 : vector<2x16xf32>
    %cst_103 = arith.constant 0.000000e+00 : f32
    %460 = vector.broadcast %cst_103 : f32 to vector<2x16xf32>
    %461 = arith.subf %460, %459 : vector<2x16xf32>
    %462 = math.exp %461 : vector<2x16xf32>
    %cst_104 = arith.constant 1.000000e+00 : f32
    %463 = vector.broadcast %cst_104 : f32 to vector<2x16xf32>
    %464 = arith.addf %463, %462 : vector<2x16xf32>
    %cst_105 = arith.constant 1.000000e+00 : f32
    %465 = vector.broadcast %cst_105 : f32 to vector<2x16xf32>
    %466 = arith.divf %465, %464 : vector<2x16xf32>
    %467 = vector.extract_strided_slice %445 {offsets = [0, 32], sizes = [2, 16], strides = [1, 1]} : vector<2x48xf32> to vector<2x16xf32>
    %468 = vector.extract_strided_slice %441 {offsets = [0, 32], sizes = [2, 16], strides = [1, 1]} : vector<2x48xf32> to vector<2x16xf32>
    %469 = arith.mulf %456, %468 : vector<2x16xf32>
    %470 = arith.addf %467, %469 : vector<2x16xf32>
    %471 = math.tanh %470 : vector<2x16xf32>
    %cst_106 = arith.constant 1.000000e+00 : f32
    %472 = vector.broadcast %cst_106 : f32 to vector<2x16xf32>
    %473 = arith.subf %472, %466 : vector<2x16xf32>
    %474 = arith.mulf %473, %471 : vector<2x16xf32>
    %475 = arith.mulf %466, %406 : vector<2x16xf32>
    %476 = arith.addf %474, %475 : vector<2x16xf32>
    %477 = vector.extract_strided_slice %446 {offsets = [0, 0], sizes = [2, 16], strides = [1, 1]} : vector<2x48xf32> to vector<2x16xf32>
    %478 = vector.extract_strided_slice %444 {offsets = [0, 0], sizes = [2, 16], strides = [1, 1]} : vector<2x48xf32> to vector<2x16xf32>
    %479 = arith.addf %477, %478 : vector<2x16xf32>
    %cst_107 = arith.constant 0.000000e+00 : f32
    %480 = vector.broadcast %cst_107 : f32 to vector<2x16xf32>
    %481 = arith.subf %480, %479 : vector<2x16xf32>
    %482 = math.exp %481 : vector<2x16xf32>
    %cst_108 = arith.constant 1.000000e+00 : f32
    %483 = vector.broadcast %cst_108 : f32 to vector<2x16xf32>
    %484 = arith.addf %483, %482 : vector<2x16xf32>
    %cst_109 = arith.constant 1.000000e+00 : f32
    %485 = vector.broadcast %cst_109 : f32 to vector<2x16xf32>
    %486 = arith.divf %485, %484 : vector<2x16xf32>
    %487 = vector.extract_strided_slice %446 {offsets = [0, 16], sizes = [2, 16], strides = [1, 1]} : vector<2x48xf32> to vector<2x16xf32>
    %488 = vector.extract_strided_slice %444 {offsets = [0, 16], sizes = [2, 16], strides = [1, 1]} : vector<2x48xf32> to vector<2x16xf32>
    %489 = arith.addf %487, %488 : vector<2x16xf32>
    %cst_110 = arith.constant 0.000000e+00 : f32
    %490 = vector.broadcast %cst_110 : f32 to vector<2x16xf32>
    %491 = arith.subf %490, %489 : vector<2x16xf32>
    %492 = math.exp %491 : vector<2x16xf32>
    %cst_111 = arith.constant 1.000000e+00 : f32
    %493 = vector.broadcast %cst_111 : f32 to vector<2x16xf32>
    %494 = arith.addf %493, %492 : vector<2x16xf32>
    %cst_112 = arith.constant 1.000000e+00 : f32
    %495 = vector.broadcast %cst_112 : f32 to vector<2x16xf32>
    %496 = arith.divf %495, %494 : vector<2x16xf32>
    %497 = vector.extract_strided_slice %446 {offsets = [0, 32], sizes = [2, 16], strides = [1, 1]} : vector<2x48xf32> to vector<2x16xf32>
    %498 = vector.extract_strided_slice %444 {offsets = [0, 32], sizes = [2, 16], strides = [1, 1]} : vector<2x48xf32> to vector<2x16xf32>
    %499 = arith.mulf %486, %498 : vector<2x16xf32>
    %500 = arith.addf %497, %499 : vector<2x16xf32>
    %501 = math.tanh %500 : vector<2x16xf32>
    %cst_113 = arith.constant 1.000000e+00 : f32
    %502 = vector.broadcast %cst_113 : f32 to vector<2x16xf32>
    %503 = arith.subf %502, %496 : vector<2x16xf32>
    %504 = arith.mulf %503, %501 : vector<2x16xf32>
    %505 = arith.mulf %496, %436 : vector<2x16xf32>
    %506 = arith.addf %504, %505 : vector<2x16xf32>
    %507 = tpu.concatenate %476, %506 in 0 : vector<2x16xf32>, vector<2x16xf32> -> vector<4x16xf32>
    %cst_114 = arith.constant dense<0.000000e+00> : vector<4x96xf32>
    %508 = tpu.matmul %507, %12, %cst_114 {dimension_numbers = #tpu.dot_dimension_numbers<[1], [0], [0], [1], [0, 0, 1, 1], [], []>} : vector<4x16xf32>, vector<16x96xf32>, vector<4x96xf32> -> vector<4x96xf32>
    %509 = vector.extract_strided_slice %508 {offsets = [0, 0], sizes = [2, 48], strides = [1, 1]} : vector<4x96xf32> to vector<2x48xf32>
    %510 = vector.broadcast %13 : vector<1x48xf32> to vector<2x48xf32>
    %511 = arith.addf %509, %510 : vector<2x48xf32>
    %512 = vector.extract_strided_slice %508 {offsets = [2, 48], sizes = [2, 48], strides = [1, 1]} : vector<4x96xf32> to vector<2x48xf32>
    %513 = vector.broadcast %14 : vector<1x48xf32> to vector<2x48xf32>
    %514 = arith.addf %512, %513 : vector<2x48xf32>
    %515 = vector.extract_strided_slice %11 {offsets = [14, 0], sizes = [2, 48], strides = [1, 1]} : vector<16x96xf32> to vector<2x48xf32>
    %516 = vector.extract_strided_slice %11 {offsets = [0, 48], sizes = [2, 48], strides = [1, 1]} : vector<16x96xf32> to vector<2x48xf32>
    %517 = vector.extract_strided_slice %515 {offsets = [0, 0], sizes = [2, 16], strides = [1, 1]} : vector<2x48xf32> to vector<2x16xf32>
    %518 = vector.extract_strided_slice %511 {offsets = [0, 0], sizes = [2, 16], strides = [1, 1]} : vector<2x48xf32> to vector<2x16xf32>
    %519 = arith.addf %517, %518 : vector<2x16xf32>
    %cst_115 = arith.constant 0.000000e+00 : f32
    %520 = vector.broadcast %cst_115 : f32 to vector<2x16xf32>
    %521 = arith.subf %520, %519 : vector<2x16xf32>
    %522 = math.exp %521 : vector<2x16xf32>
    %cst_116 = arith.constant 1.000000e+00 : f32
    %523 = vector.broadcast %cst_116 : f32 to vector<2x16xf32>
    %524 = arith.addf %523, %522 : vector<2x16xf32>
    %cst_117 = arith.constant 1.000000e+00 : f32
    %525 = vector.broadcast %cst_117 : f32 to vector<2x16xf32>
    %526 = arith.divf %525, %524 : vector<2x16xf32>
    %527 = vector.extract_strided_slice %515 {offsets = [0, 16], sizes = [2, 16], strides = [1, 1]} : vector<2x48xf32> to vector<2x16xf32>
    %528 = vector.extract_strided_slice %511 {offsets = [0, 16], sizes = [2, 16], strides = [1, 1]} : vector<2x48xf32> to vector<2x16xf32>
    %529 = arith.addf %527, %528 : vector<2x16xf32>
    %cst_118 = arith.constant 0.000000e+00 : f32
    %530 = vector.broadcast %cst_118 : f32 to vector<2x16xf32>
    %531 = arith.subf %530, %529 : vector<2x16xf32>
    %532 = math.exp %531 : vector<2x16xf32>
    %cst_119 = arith.constant 1.000000e+00 : f32
    %533 = vector.broadcast %cst_119 : f32 to vector<2x16xf32>
    %534 = arith.addf %533, %532 : vector<2x16xf32>
    %cst_120 = arith.constant 1.000000e+00 : f32
    %535 = vector.broadcast %cst_120 : f32 to vector<2x16xf32>
    %536 = arith.divf %535, %534 : vector<2x16xf32>
    %537 = vector.extract_strided_slice %515 {offsets = [0, 32], sizes = [2, 16], strides = [1, 1]} : vector<2x48xf32> to vector<2x16xf32>
    %538 = vector.extract_strided_slice %511 {offsets = [0, 32], sizes = [2, 16], strides = [1, 1]} : vector<2x48xf32> to vector<2x16xf32>
    %539 = arith.mulf %526, %538 : vector<2x16xf32>
    %540 = arith.addf %537, %539 : vector<2x16xf32>
    %541 = math.tanh %540 : vector<2x16xf32>
    %cst_121 = arith.constant 1.000000e+00 : f32
    %542 = vector.broadcast %cst_121 : f32 to vector<2x16xf32>
    %543 = arith.subf %542, %536 : vector<2x16xf32>
    %544 = arith.mulf %543, %541 : vector<2x16xf32>
    %545 = arith.mulf %536, %476 : vector<2x16xf32>
    %546 = arith.addf %544, %545 : vector<2x16xf32>
    %547 = vector.extract_strided_slice %516 {offsets = [0, 0], sizes = [2, 16], strides = [1, 1]} : vector<2x48xf32> to vector<2x16xf32>
    %548 = vector.extract_strided_slice %514 {offsets = [0, 0], sizes = [2, 16], strides = [1, 1]} : vector<2x48xf32> to vector<2x16xf32>
    %549 = arith.addf %547, %548 : vector<2x16xf32>
    %cst_122 = arith.constant 0.000000e+00 : f32
    %550 = vector.broadcast %cst_122 : f32 to vector<2x16xf32>
    %551 = arith.subf %550, %549 : vector<2x16xf32>
    %552 = math.exp %551 : vector<2x16xf32>
    %cst_123 = arith.constant 1.000000e+00 : f32
    %553 = vector.broadcast %cst_123 : f32 to vector<2x16xf32>
    %554 = arith.addf %553, %552 : vector<2x16xf32>
    %cst_124 = arith.constant 1.000000e+00 : f32
    %555 = vector.broadcast %cst_124 : f32 to vector<2x16xf32>
    %556 = arith.divf %555, %554 : vector<2x16xf32>
    %557 = vector.extract_strided_slice %516 {offsets = [0, 16], sizes = [2, 16], strides = [1, 1]} : vector<2x48xf32> to vector<2x16xf32>
    %558 = vector.extract_strided_slice %514 {offsets = [0, 16], sizes = [2, 16], strides = [1, 1]} : vector<2x48xf32> to vector<2x16xf32>
    %559 = arith.addf %557, %558 : vector<2x16xf32>
    %cst_125 = arith.constant 0.000000e+00 : f32
    %560 = vector.broadcast %cst_125 : f32 to vector<2x16xf32>
    %561 = arith.subf %560, %559 : vector<2x16xf32>
    %562 = math.exp %561 : vector<2x16xf32>
    %cst_126 = arith.constant 1.000000e+00 : f32
    %563 = vector.broadcast %cst_126 : f32 to vector<2x16xf32>
    %564 = arith.addf %563, %562 : vector<2x16xf32>
    %cst_127 = arith.constant 1.000000e+00 : f32
    %565 = vector.broadcast %cst_127 : f32 to vector<2x16xf32>
    %566 = arith.divf %565, %564 : vector<2x16xf32>
    %567 = vector.extract_strided_slice %516 {offsets = [0, 32], sizes = [2, 16], strides = [1, 1]} : vector<2x48xf32> to vector<2x16xf32>
    %568 = vector.extract_strided_slice %514 {offsets = [0, 32], sizes = [2, 16], strides = [1, 1]} : vector<2x48xf32> to vector<2x16xf32>
    %569 = arith.mulf %556, %568 : vector<2x16xf32>
    %570 = arith.addf %567, %569 : vector<2x16xf32>
    %571 = math.tanh %570 : vector<2x16xf32>
    %cst_128 = arith.constant 1.000000e+00 : f32
    %572 = vector.broadcast %cst_128 : f32 to vector<2x16xf32>
    %573 = arith.subf %572, %566 : vector<2x16xf32>
    %574 = arith.mulf %573, %571 : vector<2x16xf32>
    %575 = arith.mulf %566, %506 : vector<2x16xf32>
    %576 = arith.addf %574, %575 : vector<2x16xf32>
    %577 = tpu.concatenate %56, %576 in 1 : vector<2x16xf32>, vector<2x16xf32> -> vector<2x32xf32>
    %578 = vector.shape_cast %577 : vector<2x32xf32> to vector<2x1x32xf32>
    %579 = tpu.concatenate %126, %506 in 1 : vector<2x16xf32>, vector<2x16xf32> -> vector<2x32xf32>
    %580 = vector.shape_cast %579 : vector<2x32xf32> to vector<2x1x32xf32>
    %581 = tpu.concatenate %196, %436 in 1 : vector<2x16xf32>, vector<2x16xf32> -> vector<2x32xf32>
    %582 = vector.shape_cast %581 : vector<2x32xf32> to vector<2x1x32xf32>
    %583 = tpu.concatenate %266, %366 in 1 : vector<2x16xf32>, vector<2x16xf32> -> vector<2x32xf32>
    %584 = vector.shape_cast %583 : vector<2x32xf32> to vector<2x1x32xf32>
    %585 = tpu.concatenate %336, %296 in 1 : vector<2x16xf32>, vector<2x16xf32> -> vector<2x32xf32>
    %586 = vector.shape_cast %585 : vector<2x32xf32> to vector<2x1x32xf32>
    %587 = tpu.concatenate %406, %226 in 1 : vector<2x16xf32>, vector<2x16xf32> -> vector<2x32xf32>
    %588 = vector.shape_cast %587 : vector<2x32xf32> to vector<2x1x32xf32>
    %589 = tpu.concatenate %476, %156 in 1 : vector<2x16xf32>, vector<2x16xf32> -> vector<2x32xf32>
    %590 = vector.shape_cast %589 : vector<2x32xf32> to vector<2x1x32xf32>
    %591 = tpu.concatenate %546, %86 in 1 : vector<2x16xf32>, vector<2x16xf32> -> vector<2x32xf32>
    %592 = vector.shape_cast %591 : vector<2x32xf32> to vector<2x1x32xf32>
    %593 = tpu.concatenate %578, %580, %582, %584, %586, %588, %590, %592 in 1 : vector<2x1x32xf32>, vector<2x1x32xf32>, vector<2x1x32xf32>, vector<2x1x32xf32>, vector<2x1x32xf32>, vector<2x1x32xf32>, vector<2x1x32xf32>, vector<2x1x32xf32> -> vector<2x8x32xf32>
    %c0_129 = arith.constant 0 : index
    %c0_130 = arith.constant 0 : index
    %c0_131 = arith.constant 0 : index
    %594 = vector.load %arg1[%c0_129, %c0_130, %c0_131] : memref<2x9x1xi32, #tpu.memory_space<vmem>>, vector<2x9x1xi32>
    %595 = tpu.iota {dimensions = array<i32: 2>} : vector<2x9x8xi32>
    %596 = vector.broadcast %594 : vector<2x9x1xi32> to vector<2x9x8xi32>
    %597 = arith.cmpi eq, %596, %595 : vector<2x9x8xi32>
    %598 = arith.extui %597 : vector<2x9x8xi1> to vector<2x9x8xi32>
    %599 = arith.sitofp %598 : vector<2x9x8xi32> to vector<2x9x8xf32>
    "tpu.trace_start"() <{level = 10 : i32, message = "bks,bsh->bkh"}> : () -> ()
    %cst_132 = arith.constant dense<0.000000e+00> : vector<2x9x32xf32>
    %600 = tpu.matmul %599, %593, %cst_132 {dimension_numbers = #tpu.dot_dimension_numbers<[2], [1], [1], [2], [0, 0, 0, 1, 1, 2], [0], [0]>} : vector<2x9x8xf32>, vector<2x8x32xf32>, vector<2x9x32xf32> -> vector<2x9x32xf32>
    "tpu.trace_stop"() : () -> ()
    %601 = vector.extract_strided_slice %600 {offsets = [0, 0, 0], sizes = [2, 4, 32], strides = [1, 1, 1]} : vector<2x9x32xf32> to vector<2x4x32xf32>
    %602 = vector.extract_strided_slice %600 {offsets = [0, 4, 0], sizes = [2, 4, 32], strides = [1, 1, 1]} : vector<2x9x32xf32> to vector<2x4x32xf32>
    %603 = vector.extract_strided_slice %600 {offsets = [0, 8, 0], sizes = [2, 1, 16], strides = [1, 1, 1]} : vector<2x9x32xf32> to vector<2x1x16xf32>
    %604 = vector.shape_cast %603 : vector<2x1x16xf32> to vector<2x16xf32>
    %605 = tpu.concatenate %604, %576 in 1 : vector<2x16xf32>, vector<2x16xf32> -> vector<2x32xf32>
    %606 = vector.extract_strided_slice %601 {offsets = [0, 0, 0], sizes = [2, 3, 32], strides = [1, 1, 1]} : vector<2x4x32xf32> to vector<2x3x32xf32>
    %607 = vector.extract_strided_slice %601 {offsets = [0, 3, 0], sizes = [2, 1, 32], strides = [1, 1, 1]} : vector<2x4x32xf32> to vector<2x1x32xf32>
    %608 = vector.shape_cast %607 : vector<2x1x32xf32> to vector<2x32xf32>
    %609 = vector.extract_strided_slice %602 {offsets = [0, 0, 0], sizes = [2, 3, 32], strides = [1, 1, 1]} : vector<2x4x32xf32> to vector<2x3x32xf32>
    %c0_133 = arith.constant 0 : index
    %c0_134 = arith.constant 0 : index
    %c0_135 = arith.constant 0 : index
    %610 = vector.load %arg8[%c0_133, %c0_134, %c0_135] : memref<2x8x24xf32, #tpu.memory_space<vmem>>, vector<2x8x24xf32>
    %c0_136 = arith.constant 0 : index
    %c0_137 = arith.constant 0 : index
    %c0_138 = arith.constant 0 : index
    %611 = vector.load %arg11[%c0_136, %c0_137, %c0_138] : memref<2x8x8xf32, #tpu.memory_space<vmem>>, vector<2x8x8xf32>
    %c0_139 = arith.constant 0 : index
    %c0_140 = arith.constant 0 : index
    %612 = vector.load %arg4[%c0_139, %c0_140] : memref<24x148xf32, #tpu.memory_space<vmem>>, vector<24x148xf32>
    %613 = vector.shape_cast %610 : vector<2x8x24xf32> to vector<16x24xf32>
    %614 = arith.mulf %610, %610 : vector<2x8x24xf32>
    %cst_141 = arith.constant dense<0.000000e+00> : vector<2x24xf32>
    %615 = vector.multi_reduction <add>, %614, %cst_141 [1] : vector<2x8x24xf32> to vector<2x24xf32>
    %616 = vector.shape_cast %615 : vector<2x24xf32> to vector<2x1x24xf32>
    %617 = math.sqrt %616 : vector<2x1x24xf32>
    %cst_142 = arith.constant 9.99999996E-13 : f32
    %618 = vector.broadcast %cst_142 : f32 to vector<2x1x24xf32>
    %619 = arith.addf %617, %618 : vector<2x1x24xf32>
    %620 = vector.broadcast %619 : vector<2x1x24xf32> to vector<2x8x24xf32>
    %621 = arith.divf %610, %620 : vector<2x8x24xf32>
    %622 = vector.shape_cast %621 : vector<2x8x24xf32> to vector<16x24xf32>
    %623 = vector.extract_strided_slice %612 {offsets = [0, 64], sizes = [24, 32], strides = [1, 1]} : vector<24x148xf32> to vector<24x32xf32>
    %cst_143 = arith.constant dense<0.000000e+00> : vector<16x32xf32>
    %624 = tpu.matmul %622, %623, %cst_143 {dimension_numbers = #tpu.dot_dimension_numbers<[1], [0], [0], [1], [0, 0, 1, 1], [], []>} : vector<16x24xf32>, vector<24x32xf32>, vector<16x32xf32> -> vector<16x32xf32>
    %625 = vector.shape_cast %624 : vector<16x32xf32> to vector<2x8x32xf32>
    %626 = vector.extract_strided_slice %612 {offsets = [0, 0], sizes = [24, 64], strides = [1, 1]} : vector<24x148xf32> to vector<24x64xf32>
    %cst_144 = arith.constant dense<0.000000e+00> : vector<16x64xf32>
    %627 = tpu.matmul %613, %626, %cst_144 {dimension_numbers = #tpu.dot_dimension_numbers<[1], [0], [0], [1], [0, 0, 1, 1], [], []>} : vector<16x24xf32>, vector<24x64xf32>, vector<16x64xf32> -> vector<16x64xf32>
    %628 = vector.extract_strided_slice %0 {offsets = [3, 0], sizes = [1, 64], strides = [1, 1]} : vector<16x128xf32> to vector<1x64xf32>
    %629 = vector.broadcast %628 : vector<1x64xf32> to vector<16x64xf32>
    %630 = arith.addf %627, %629 : vector<16x64xf32>
    %cst_145 = arith.constant 0.000000e+00 : f32
    %631 = vector.broadcast %cst_145 : f32 to vector<16x64xf32>
    %632 = arith.maximumf %630, %631 : vector<16x64xf32>
    %633 = vector.extract_strided_slice %632 {offsets = [0, 0], sizes = [16, 32], strides = [1, 1]} : vector<16x64xf32> to vector<16x32xf32>
    %634 = vector.shape_cast %633 : vector<16x32xf32> to vector<2x8x32xf32>
    %635 = vector.extract_strided_slice %632 {offsets = [0, 32], sizes = [16, 32], strides = [1, 1]} : vector<16x64xf32> to vector<16x32xf32>
    %636 = vector.shape_cast %635 : vector<16x32xf32> to vector<2x8x32xf32>
    %c0_146 = arith.constant 0 : index
    %c0_147 = arith.constant 0 : index
    %637 = vector.load %arg5[%c0_146, %c0_147] : memref<32x128xf32, #tpu.memory_space<vmem>>, vector<32x128xf32>
    %638 = vector.extract_strided_slice %0 {offsets = [15, 0], sizes = [1, 2], strides = [1, 1]} : vector<16x128xf32> to vector<1x2xf32>
    %639 = vector.extract_strided_slice %638 {offsets = [0, 0], sizes = [1, 1], strides = [1, 1]} : vector<1x2xf32> to vector<1x1xf32>
    %640 = vector.extract_strided_slice %638 {offsets = [0, 1], sizes = [1, 1], strides = [1, 1]} : vector<1x2xf32> to vector<1x1xf32>
    %641 = vector.shape_cast %606 : vector<2x3x32xf32> to vector<6x32xf32>
    %642 = vector.extract_strided_slice %637 {offsets = [0, 0], sizes = [32, 32], strides = [1, 1]} : vector<32x128xf32> to vector<32x32xf32>
    %cst_148 = arith.constant dense<0.000000e+00> : vector<6x32xf32>
    %643 = tpu.matmul %641, %642, %cst_148 {dimension_numbers = #tpu.dot_dimension_numbers<[1], [0], [0], [1], [0, 0, 1, 1], [], []>} : vector<6x32xf32>, vector<32x32xf32>, vector<6x32xf32> -> vector<6x32xf32>
    %644 = vector.extract_strided_slice %0 {offsets = [4, 0], sizes = [1, 32], strides = [1, 1]} : vector<16x128xf32> to vector<1x32xf32>
    %645 = vector.broadcast %644 : vector<1x32xf32> to vector<6x32xf32>
    %646 = arith.addf %643, %645 : vector<6x32xf32>
    %cst_149 = arith.constant 0.000000e+00 : f32
    %647 = vector.broadcast %cst_149 : f32 to vector<6x32xf32>
    %648 = arith.maximumf %646, %647 : vector<6x32xf32>
    %649 = vector.extract_strided_slice %0 {offsets = [12, 0], sizes = [1, 32], strides = [1, 1]} : vector<16x128xf32> to vector<1x32xf32>
    %650 = vector.broadcast %649 : vector<1x32xf32> to vector<6x32xf32>
    %651 = arith.mulf %648, %650 : vector<6x32xf32>
    %652 = vector.shape_cast %651 : vector<6x32xf32> to vector<2x3x32xf32>
    "tpu.trace_start"() <{level = 10 : i32, message = "bsm,bnm->bsn"}> : () -> ()
    %cst_150 = arith.constant dense<0.000000e+00> : vector<2x3x8xf32>
    %653 = tpu.matmul %652, %634, %cst_150 {dimension_numbers = #tpu.dot_dimension_numbers<[2], [2], [1], [1], [0, 0, 0, 1, 1, 1], [0], [0]>} : vector<2x3x32xf32>, vector<2x8x32xf32>, vector<2x3x8xf32> -> vector<2x3x8xf32>
    "tpu.trace_stop"() : () -> ()
    %654 = vector.shape_cast %639 : vector<1x1xf32> to vector<1x1x1xf32>
    %655 = vector.broadcast %654 : vector<1x1x1xf32> to vector<2x3x8xf32>
    %656 = arith.addf %653, %655 : vector<2x3x8xf32>
    %657 = vector.extract_strided_slice %637 {offsets = [0, 32], sizes = [32, 32], strides = [1, 1]} : vector<32x128xf32> to vector<32x32xf32>
    %cst_151 = arith.constant dense<0.000000e+00> : vector<2x32xf32>
    %658 = tpu.matmul %608, %657, %cst_151 {dimension_numbers = #tpu.dot_dimension_numbers<[1], [0], [0], [1], [0, 0, 1, 1], [], []>} : vector<2x32xf32>, vector<32x32xf32>, vector<2x32xf32> -> vector<2x32xf32>
    %659 = vector.extract_strided_slice %0 {offsets = [5, 0], sizes = [1, 32], strides = [1, 1]} : vector<16x128xf32> to vector<1x32xf32>
    %660 = vector.broadcast %659 : vector<1x32xf32> to vector<2x32xf32>
    %661 = arith.addf %658, %660 : vector<2x32xf32>
    %cst_152 = arith.constant 0.000000e+00 : f32
    %662 = vector.broadcast %cst_152 : f32 to vector<2x32xf32>
    %663 = arith.maximumf %661, %662 : vector<2x32xf32>
    %664 = vector.extract_strided_slice %0 {offsets = [13, 0], sizes = [1, 32], strides = [1, 1]} : vector<16x128xf32> to vector<1x32xf32>
    %665 = vector.broadcast %664 : vector<1x32xf32> to vector<2x32xf32>
    %666 = arith.mulf %663, %665 : vector<2x32xf32>
    %667 = vector.shape_cast %666 : vector<2x32xf32> to vector<2x1x32xf32>
    %668 = vector.broadcast %667 : vector<2x1x32xf32> to vector<2x8x32xf32>
    %669 = arith.mulf %636, %668 : vector<2x8x32xf32>
    %cst_153 = arith.constant dense<0.000000e+00> : vector<2x8xf32>
    %670 = vector.multi_reduction <add>, %669, %cst_153 [2] : vector<2x8x32xf32> to vector<2x8xf32>
    %671 = vector.broadcast %640 : vector<1x1xf32> to vector<2x8xf32>
    %672 = arith.addf %670, %671 : vector<2x8xf32>
    %cst_154 = arith.constant dense<0xFF800000> : vector<2x3xf32>
    %673 = vector.multi_reduction <maximumf>, %656, %cst_154 [2] : vector<2x3x8xf32> to vector<2x3xf32>
    %674 = vector.shape_cast %673 : vector<2x3xf32> to vector<2x3x1xf32>
    %675 = vector.broadcast %674 : vector<2x3x1xf32> to vector<2x3x8xf32>
    %676 = arith.subf %656, %675 : vector<2x3x8xf32>
    %677 = math.exp %676 : vector<2x3x8xf32>
    %cst_155 = arith.constant dense<0.000000e+00> : vector<2x3xf32>
    %678 = vector.multi_reduction <add>, %677, %cst_155 [2] : vector<2x3x8xf32> to vector<2x3xf32>
    %679 = vector.shape_cast %678 : vector<2x3xf32> to vector<2x3x1xf32>
    %680 = tpu.reciprocal %679 {approx = true} : vector<2x3x1xf32> -> vector<2x3x1xf32>
    %681 = vector.broadcast %680 : vector<2x3x1xf32> to vector<2x3x8xf32>
    %682 = arith.mulf %677, %681 : vector<2x3x8xf32>
    "tpu.trace_start"() <{level = 10 : i32, message = "bsn,bnd->bsd"}> : () -> ()
    %cst_156 = arith.constant dense<0.000000e+00> : vector<2x3x24xf32>
    %683 = tpu.matmul %682, %610, %cst_156 {dimension_numbers = #tpu.dot_dimension_numbers<[2], [1], [1], [2], [0, 0, 0, 1, 1, 2], [0], [0]>} : vector<2x3x8xf32>, vector<2x8x24xf32>, vector<2x3x24xf32> -> vector<2x3x24xf32>
    "tpu.trace_stop"() : () -> ()
    %684 = vector.shape_cast %683 : vector<2x3x24xf32> to vector<6x24xf32>
    %685 = vector.extract_strided_slice %612 {offsets = [0, 96], sizes = [24, 20], strides = [1, 1]} : vector<24x148xf32> to vector<24x20xf32>
    %cst_157 = arith.constant dense<0.000000e+00> : vector<6x20xf32>
    %686 = tpu.matmul %684, %685, %cst_157 {dimension_numbers = #tpu.dot_dimension_numbers<[1], [0], [0], [1], [0, 0, 1, 1], [], []>} : vector<6x24xf32>, vector<24x20xf32>, vector<6x20xf32> -> vector<6x20xf32>
    %687 = vector.extract_strided_slice %0 {offsets = [7, 0], sizes = [1, 20], strides = [1, 1]} : vector<16x128xf32> to vector<1x20xf32>
    %688 = vector.broadcast %687 : vector<1x20xf32> to vector<6x20xf32>
    %689 = arith.addf %686, %688 : vector<6x20xf32>
    %690 = vector.shape_cast %689 : vector<6x20xf32> to vector<2x3x20xf32>
    %c0_158 = arith.constant 0 : index
    %c0_159 = arith.constant 0 : index
    %c0_160 = arith.constant 0 : index
    %691 = vector.load %arg9[%c0_158, %c0_159, %c0_160] : memref<2x4x20xf32, #tpu.memory_space<vmem>>, vector<2x4x20xf32>
    %692 = vector.extract_strided_slice %691 {offsets = [0, 0, 0], sizes = [2, 3, 20], strides = [1, 1, 1]} : vector<2x4x20xf32> to vector<2x3x20xf32>
    %cst_161 = arith.constant 0.000000e+00 : f32
    %693 = vector.broadcast %cst_161 : f32 to vector<2x3x20xf32>
    %694 = arith.maximumf %690, %693 : vector<2x3x20xf32>
    %695 = arith.mulf %690, %692 : vector<2x3x20xf32>
    %696 = arith.subf %694, %695 : vector<2x3x20xf32>
    %697 = math.absf %690 : vector<2x3x20xf32>
    %cst_162 = arith.constant 0.000000e+00 : f32
    %698 = vector.broadcast %cst_162 : f32 to vector<2x3x20xf32>
    %699 = arith.subf %698, %697 : vector<2x3x20xf32>
    %700 = math.exp %699 : vector<2x3x20xf32>
    %cst_163 = arith.constant 1.000000e+00 : f32
    %701 = vector.broadcast %cst_163 : f32 to vector<2x3x20xf32>
    %702 = arith.addf %701, %700 : vector<2x3x20xf32>
    %703 = math.log %702 : vector<2x3x20xf32>
    %704 = arith.addf %696, %703 : vector<2x3x20xf32>
    %cst_164 = arith.constant dense<0.000000e+00> : vector<2x3xf32>
    %705 = vector.multi_reduction <add>, %704, %cst_164 [2] : vector<2x3x20xf32> to vector<2x3xf32>
    %cst_165 = arith.constant 2.000000e+01 : f32
    %706 = vector.broadcast %cst_165 : f32 to vector<2x3xf32>
    %707 = arith.divf %705, %706 : vector<2x3xf32>
    %708 = vector.shape_cast %609 : vector<2x3x32xf32> to vector<6x32xf32>
    %709 = vector.extract_strided_slice %637 {offsets = [0, 64], sizes = [32, 32], strides = [1, 1]} : vector<32x128xf32> to vector<32x32xf32>
    %cst_166 = arith.constant dense<0.000000e+00> : vector<6x32xf32>
    %710 = tpu.matmul %708, %709, %cst_166 {dimension_numbers = #tpu.dot_dimension_numbers<[1], [0], [0], [1], [0, 0, 1, 1], [], []>} : vector<6x32xf32>, vector<32x32xf32>, vector<6x32xf32> -> vector<6x32xf32>
    %711 = vector.extract_strided_slice %0 {offsets = [6, 0], sizes = [1, 32], strides = [1, 1]} : vector<16x128xf32> to vector<1x32xf32>
    %712 = vector.broadcast %711 : vector<1x32xf32> to vector<6x32xf32>
    %713 = arith.addf %710, %712 : vector<6x32xf32>
    %714 = vector.extract_strided_slice %0 {offsets = [14, 0], sizes = [1, 32], strides = [1, 1]} : vector<16x128xf32> to vector<1x32xf32>
    %715 = vector.broadcast %714 : vector<1x32xf32> to vector<6x32xf32>
    %716 = arith.mulf %713, %715 : vector<6x32xf32>
    %717 = vector.shape_cast %716 : vector<6x32xf32> to vector<2x3x32xf32>
    "tpu.trace_start"() <{level = 10 : i32, message = "bse,bne->bsn"}> : () -> ()
    %cst_167 = arith.constant dense<0.000000e+00> : vector<2x3x8xf32>
    %718 = tpu.matmul %717, %625, %cst_167 {dimension_numbers = #tpu.dot_dimension_numbers<[2], [2], [1], [1], [0, 0, 0, 1, 1, 1], [0], [0]>} : vector<2x3x32xf32>, vector<2x8x32xf32>, vector<2x3x8xf32> -> vector<2x3x8xf32>
    "tpu.trace_stop"() : () -> ()
    %cst_168 = arith.constant dense<0xFF800000> : vector<2x3xf32>
    %719 = vector.multi_reduction <maximumf>, %718, %cst_168 [2] : vector<2x3x8xf32> to vector<2x3xf32>
    %720 = vector.shape_cast %719 : vector<2x3xf32> to vector<2x3x1xf32>
    %721 = vector.broadcast %720 : vector<2x3x1xf32> to vector<2x3x8xf32>
    %722 = arith.subf %718, %721 : vector<2x3x8xf32>
    %723 = math.exp %722 : vector<2x3x8xf32>
    "tpu.trace_start"() <{level = 10 : i32, message = "bsi,bij->bsj"}> : () -> ()
    %cst_169 = arith.constant dense<0.000000e+00> : vector<2x3x8xf32>
    %724 = tpu.matmul %723, %611, %cst_169 {dimension_numbers = #tpu.dot_dimension_numbers<[2], [1], [1], [2], [0, 0, 0, 1, 1, 2], [0], [0]>} : vector<2x3x8xf32>, vector<2x8x8xf32>, vector<2x3x8xf32> -> vector<2x3x8xf32>
    %cst_170 = arith.constant 0.000000e+00 : f32
    "tpu.trace_stop"() : () -> ()
    %725 = vector.broadcast %cst_170 : f32 to vector<2x1x8xf32>
    %726 = vector.extract_strided_slice %656 {offsets = [0, 0, 0], sizes = [2, 2, 8], strides = [1, 1, 1]} : vector<2x3x8xf32> to vector<2x2x8xf32>
    %727 = tpu.concatenate %725, %726 in 1 : vector<2x1x8xf32>, vector<2x2x8xf32> -> vector<2x3x8xf32>
    %cst_171 = arith.constant 0.000000e+00 : f32
    %728 = vector.broadcast %cst_171 : f32 to vector<2x3x8xf32>
    %729 = arith.cmpf ogt, %724, %728 : vector<2x3x8xf32>
    %730 = tpu.reciprocal %724 {approx = true} : vector<2x3x8xf32> -> vector<2x3x8xf32>
    %cst_172 = arith.constant 0.000000e+00 : f32
    %731 = vector.broadcast %cst_172 : f32 to vector<2x3x8xf32>
    %732 = arith.select %729, %730, %731 : vector<2x3x8xi1>, vector<2x3x8xf32>
    %733 = arith.mulf %727, %732 : vector<2x3x8xf32>
    "tpu.trace_start"() <{level = 10 : i32, message = "bsj,bij->bsi"}> : () -> ()
    %cst_173 = arith.constant dense<0.000000e+00> : vector<2x3x8xf32>
    %734 = tpu.matmul %733, %611, %cst_173 {dimension_numbers = #tpu.dot_dimension_numbers<[2], [2], [1], [1], [0, 0, 0, 1, 1, 1], [0], [0]>} : vector<2x3x8xf32>, vector<2x8x8xf32>, vector<2x3x8xf32> -> vector<2x3x8xf32>
    "tpu.trace_stop"() : () -> ()
    %735 = arith.mulf %723, %734 : vector<2x3x8xf32>
    %cst_174 = arith.constant 0.000000e+00 : f32
    %736 = vector.broadcast %cst_174 : f32 to vector<2x3x8xf32>
    %737 = arith.cmpf ogt, %724, %736 : vector<2x3x8xf32>
    %cst_175 = arith.constant 0.000000e+00 : f32
    %738 = vector.broadcast %cst_175 : f32 to vector<2x3x8xf32>
    %739 = arith.select %737, %738, %727 : vector<2x3x8xi1>, vector<2x3x8xf32>
    %cst_176 = arith.constant dense<0.000000e+00> : vector<2x3xf32>
    %740 = vector.multi_reduction <add>, %739, %cst_176 [2] : vector<2x3x8xf32> to vector<2x3xf32>
    %741 = vector.shape_cast %740 : vector<2x3xf32> to vector<2x3x1xf32>
    %cst_177 = arith.constant 1.250000e-01 : f32
    %742 = vector.broadcast %cst_177 : f32 to vector<2x3x1xf32>
    %743 = arith.mulf %741, %742 : vector<2x3x1xf32>
    %744 = vector.broadcast %743 : vector<2x3x1xf32> to vector<2x3x8xf32>
    %745 = arith.addf %735, %744 : vector<2x3x8xf32>
    %cst_178 = arith.constant 0.000000e+00 : f32
    %746 = vector.broadcast %cst_178 : f32 to vector<2x1x8xf32>
    %747 = vector.extract_strided_slice %745 {offsets = [0, 0, 0], sizes = [2, 2, 8], strides = [1, 1, 1]} : vector<2x3x8xf32> to vector<2x2x8xf32>
    %748 = tpu.concatenate %746, %747 in 1 : vector<2x1x8xf32>, vector<2x2x8xf32> -> vector<2x3x8xf32>
    %cst_179 = arith.constant dense<0xFF800000> : vector<2x3xf32>
    %749 = vector.multi_reduction <maximumf>, %656, %cst_179 [2] : vector<2x3x8xf32> to vector<2x3xf32>
    %750 = vector.shape_cast %749 : vector<2x3xf32> to vector<2x3x1xf32>
    %751 = vector.broadcast %750 : vector<2x3x1xf32> to vector<2x3x8xf32>
    %752 = arith.subf %656, %751 : vector<2x3x8xf32>
    %753 = math.exp %752 : vector<2x3x8xf32>
    %cst_180 = arith.constant dense<0.000000e+00> : vector<2x3xf32>
    %754 = vector.multi_reduction <add>, %753, %cst_180 [2] : vector<2x3x8xf32> to vector<2x3xf32>
    %755 = vector.shape_cast %754 : vector<2x3xf32> to vector<2x3x1xf32>
    %756 = math.log %755 : vector<2x3x1xf32>
    %757 = vector.broadcast %756 : vector<2x3x1xf32> to vector<2x3x8xf32>
    %758 = arith.subf %752, %757 : vector<2x3x8xf32>
    %cst_181 = arith.constant dense<0xFF800000> : vector<2x3xf32>
    %759 = vector.multi_reduction <maximumf>, %748, %cst_181 [2] : vector<2x3x8xf32> to vector<2x3xf32>
    %760 = vector.shape_cast %759 : vector<2x3xf32> to vector<2x3x1xf32>
    %761 = vector.broadcast %760 : vector<2x3x1xf32> to vector<2x3x8xf32>
    %762 = arith.subf %748, %761 : vector<2x3x8xf32>
    %763 = math.exp %762 : vector<2x3x8xf32>
    %cst_182 = arith.constant dense<0.000000e+00> : vector<2x3xf32>
    %764 = vector.multi_reduction <add>, %763, %cst_182 [2] : vector<2x3x8xf32> to vector<2x3xf32>
    %765 = vector.shape_cast %764 : vector<2x3xf32> to vector<2x3x1xf32>
    %766 = math.log %765 : vector<2x3x1xf32>
    %767 = vector.broadcast %766 : vector<2x3x1xf32> to vector<2x3x8xf32>
    %768 = arith.subf %762, %767 : vector<2x3x8xf32>
    %769 = math.exp %758 : vector<2x3x8xf32>
    %770 = arith.subf %758, %768 : vector<2x3x8xf32>
    %771 = arith.mulf %769, %770 : vector<2x3x8xf32>
    %cst_183 = arith.constant dense<0.000000e+00> : vector<2x3xf32>
    %772 = vector.multi_reduction <add>, %771, %cst_183 [2] : vector<2x3x8xf32> to vector<2x3xf32>
    %cst_184 = arith.constant 1.000000e-01 : f32
    %773 = vector.broadcast %cst_184 : f32 to vector<2x3xf32>
    %774 = arith.mulf %773, %772 : vector<2x3xf32>
    %cst_185 = arith.constant dense<0xFF800000> : vector<2xf32>
    %775 = vector.multi_reduction <maximumf>, %672, %cst_185 [1] : vector<2x8xf32> to vector<2xf32>
    %776 = vector.shape_cast %775 : vector<2xf32> to vector<2x1xf32>
    %777 = vector.broadcast %776 : vector<2x1xf32> to vector<2x8xf32>
    %778 = arith.subf %672, %777 : vector<2x8xf32>
    %779 = math.exp %778 : vector<2x8xf32>
    %cst_186 = arith.constant dense<0.000000e+00> : vector<2xf32>
    %780 = vector.multi_reduction <add>, %779, %cst_186 [1] : vector<2x8xf32> to vector<2xf32>
    %781 = vector.shape_cast %780 : vector<2xf32> to vector<2x1xf32>
    %782 = math.log %781 : vector<2x1xf32>
    %783 = vector.broadcast %782 : vector<2x1xf32> to vector<2x8xf32>
    %784 = arith.subf %778, %783 : vector<2x8xf32>
    %785 = vector.extract_strided_slice %745 {offsets = [0, 2, 0], sizes = [2, 1, 8], strides = [1, 1, 1]} : vector<2x3x8xf32> to vector<2x1x8xf32>
    %786 = vector.shape_cast %785 : vector<2x1x8xf32> to vector<2x8xf32>
    %cst_187 = arith.constant dense<0xFF800000> : vector<2xf32>
    %787 = vector.multi_reduction <maximumf>, %786, %cst_187 [1] : vector<2x8xf32> to vector<2xf32>
    %788 = vector.shape_cast %787 : vector<2xf32> to vector<2x1xf32>
    %789 = vector.broadcast %788 : vector<2x1xf32> to vector<2x8xf32>
    %790 = arith.subf %786, %789 : vector<2x8xf32>
    %791 = math.exp %790 : vector<2x8xf32>
    %cst_188 = arith.constant dense<0.000000e+00> : vector<2xf32>
    %792 = vector.multi_reduction <add>, %791, %cst_188 [1] : vector<2x8xf32> to vector<2xf32>
    %793 = vector.shape_cast %792 : vector<2xf32> to vector<2x1xf32>
    %794 = math.log %793 : vector<2x1xf32>
    %795 = vector.broadcast %794 : vector<2x1xf32> to vector<2x8xf32>
    %796 = arith.subf %790, %795 : vector<2x8xf32>
    %797 = math.exp %784 : vector<2x8xf32>
    %798 = arith.subf %784, %796 : vector<2x8xf32>
    %799 = arith.mulf %797, %798 : vector<2x8xf32>
    %cst_189 = arith.constant dense<0.000000e+00> : vector<2xf32>
    %800 = vector.multi_reduction <add>, %799, %cst_189 [1] : vector<2x8xf32> to vector<2xf32>
    %801 = vector.shape_cast %800 : vector<2xf32> to vector<2x1xf32>
    %cst_190 = arith.constant 1.000000e-01 : f32
    %802 = vector.broadcast %cst_190 : f32 to vector<2x1xf32>
    %803 = arith.mulf %802, %801 : vector<2x1xf32>
    %804 = tpu.iota {dimensions = array<i32: 1>} : vector<2x3xi32>
    %c0_i32 = arith.constant 0 : i32
    %805 = vector.broadcast %c0_i32 : i32 to vector<2x3xi32>
    %806 = arith.cmpi eq, %804, %805 : vector<2x3xi32>
    %cst_191 = arith.constant 0.000000e+00 : f32
    %807 = vector.broadcast %cst_191 : f32 to vector<2x3xf32>
    %808 = arith.select %806, %807, %774 : vector<2x3xi1>, vector<2x3xf32>
    %809 = arith.addf %707, %808 : vector<2x3xf32>
    %c0_192 = arith.constant 0 : index
    %c0_193 = arith.constant 0 : index
    %810 = vector.load %arg10[%c0_192, %c0_193] : memref<2x4xf32, #tpu.memory_space<vmem>>, vector<2x4xf32>
    %811 = vector.extract_strided_slice %810 {offsets = [0, 0], sizes = [2, 3], strides = [1, 1]} : vector<2x4xf32> to vector<2x3xf32>
    %812 = arith.mulf %809, %811 : vector<2x3xf32>
    %cst_194 = arith.constant dense<0.000000e+00> : vector<2xf32>
    %813 = vector.multi_reduction <add>, %812, %cst_194 [1] : vector<2x3xf32> to vector<2xf32>
    %814 = vector.shape_cast %813 : vector<2xf32> to vector<2x1xf32>
    %815 = arith.addf %814, %803 : vector<2x1xf32>
    %cst_195 = arith.constant dense<0xFF800000> : vector<2xf32>
    %816 = vector.multi_reduction <maximumf>, %672, %cst_195 [1] : vector<2x8xf32> to vector<2xf32>
    %817 = vector.shape_cast %816 : vector<2xf32> to vector<2x1xf32>
    %818 = vector.broadcast %817 : vector<2x1xf32> to vector<2x8xf32>
    %819 = arith.subf %672, %818 : vector<2x8xf32>
    %820 = math.exp %819 : vector<2x8xf32>
    %cst_196 = arith.constant dense<0.000000e+00> : vector<2xf32>
    %821 = vector.multi_reduction <add>, %820, %cst_196 [1] : vector<2x8xf32> to vector<2xf32>
    %822 = vector.shape_cast %821 : vector<2xf32> to vector<2x1xf32>
    %823 = tpu.reciprocal %822 {approx = true} : vector<2x1xf32> -> vector<2x1xf32>
    %824 = vector.broadcast %823 : vector<2x1xf32> to vector<2x8xf32>
    %825 = arith.mulf %820, %824 : vector<2x8xf32>
    %826 = vector.shape_cast %825 : vector<2x8xf32> to vector<2x8x1xf32>
    %827 = vector.broadcast %826 : vector<2x8x1xf32> to vector<2x8x24xf32>
    %828 = arith.mulf %610, %827 : vector<2x8x24xf32>
    %cst_197 = arith.constant dense<0.000000e+00> : vector<2x24xf32>
    %829 = vector.multi_reduction <add>, %828, %cst_197 [1] : vector<2x8x24xf32> to vector<2x24xf32>
    %c0_198 = arith.constant 0 : index
    %c0_199 = arith.constant 0 : index
    %830 = vector.load %arg6[%c0_198, %c0_199] : memref<32x42xf32, #tpu.memory_space<vmem>>, vector<32x42xf32>
    %831 = vector.extract_strided_slice %612 {offsets = [0, 116], sizes = [24, 32], strides = [1, 1]} : vector<24x148xf32> to vector<24x32xf32>
    %cst_200 = arith.constant dense<0.000000e+00> : vector<2x32xf32>
    %832 = tpu.matmul %829, %831, %cst_200 {dimension_numbers = #tpu.dot_dimension_numbers<[1], [0], [0], [1], [0, 0, 1, 1], [], []>} : vector<2x24xf32>, vector<24x32xf32>, vector<2x32xf32> -> vector<2x32xf32>
    %833 = vector.extract_strided_slice %0 {offsets = [8, 0], sizes = [1, 32], strides = [1, 1]} : vector<16x128xf32> to vector<1x32xf32>
    %834 = vector.broadcast %833 : vector<1x32xf32> to vector<2x32xf32>
    %835 = arith.addf %832, %834 : vector<2x32xf32>
    %836 = vector.extract_strided_slice %637 {offsets = [0, 96], sizes = [32, 32], strides = [1, 1]} : vector<32x128xf32> to vector<32x32xf32>
    %cst_201 = arith.constant dense<0.000000e+00> : vector<2x32xf32>
    %837 = tpu.matmul %605, %836, %cst_201 {dimension_numbers = #tpu.dot_dimension_numbers<[1], [0], [0], [1], [0, 0, 1, 1], [], []>} : vector<2x32xf32>, vector<32x32xf32>, vector<2x32xf32> -> vector<2x32xf32>
    %838 = vector.extract_strided_slice %0 {offsets = [9, 0], sizes = [1, 32], strides = [1, 1]} : vector<16x128xf32> to vector<1x32xf32>
    %839 = vector.broadcast %838 : vector<1x32xf32> to vector<2x32xf32>
    %840 = arith.addf %837, %839 : vector<2x32xf32>
    %841 = arith.mulf %835, %840 : vector<2x32xf32>
    %842 = vector.extract_strided_slice %830 {offsets = [0, 0], sizes = [32, 32], strides = [1, 1]} : vector<32x42xf32> to vector<32x32xf32>
    %cst_202 = arith.constant dense<0.000000e+00> : vector<2x32xf32>
    %843 = tpu.matmul %841, %842, %cst_202 {dimension_numbers = #tpu.dot_dimension_numbers<[1], [0], [0], [1], [0, 0, 1, 1], [], []>} : vector<2x32xf32>, vector<32x32xf32>, vector<2x32xf32> -> vector<2x32xf32>
    %844 = vector.extract_strided_slice %0 {offsets = [10, 0], sizes = [1, 32], strides = [1, 1]} : vector<16x128xf32> to vector<1x32xf32>
    %845 = vector.broadcast %844 : vector<1x32xf32> to vector<2x32xf32>
    %846 = arith.addf %843, %845 : vector<2x32xf32>
    %cst_203 = arith.constant 0.000000e+00 : f32
    %847 = vector.broadcast %cst_203 : f32 to vector<2x32xf32>
    %848 = arith.maximumf %846, %847 : vector<2x32xf32>
    %849 = vector.extract_strided_slice %830 {offsets = [0, 32], sizes = [32, 10], strides = [1, 1]} : vector<32x42xf32> to vector<32x10xf32>
    %cst_204 = arith.constant dense<0.000000e+00> : vector<2x10xf32>
    %850 = tpu.matmul %848, %849, %cst_204 {dimension_numbers = #tpu.dot_dimension_numbers<[1], [0], [0], [1], [0, 0, 1, 1], [], []>} : vector<2x32xf32>, vector<32x10xf32>, vector<2x10xf32> -> vector<2x10xf32>
    %851 = vector.extract_strided_slice %0 {offsets = [11, 0], sizes = [1, 10], strides = [1, 1]} : vector<16x128xf32> to vector<1x10xf32>
    %852 = vector.broadcast %851 : vector<1x10xf32> to vector<2x10xf32>
    %853 = arith.addf %850, %852 : vector<2x10xf32>
    %cst_205 = arith.constant 0.000000e+00 : f32
    %854 = vector.broadcast %cst_205 : f32 to vector<2x117xf32>
    %855 = tpu.concatenate %853, %815, %854 in 1 : vector<2x10xf32>, vector<2x1xf32>, vector<2x117xf32> -> vector<2x128xf32>
    %c0_206 = arith.constant 0 : index
    %c0_207 = arith.constant 0 : index
    %856 = vector.load %arg12[%c0_206, %c0_207] : memref<2x128xf32, #tpu.memory_space<vmem>>, vector<2x128xf32>
    tpu.vector_store %arg12[%c0_206, %c0_207], %855 {strides = array<i32>} : memref<2x128xf32, #tpu.memory_space<vmem>>, vector<2x128xf32>,
    return
  }
}

</mosaic_0001>

<llo_original>
// kernel: net_forward.1
$region0: #{net_forward.1}
  #allocation0 [shape = 'u32[]', space=smem, size = 0x4, offset = 0x4, fixed_abs, tag = 'smem constant byte address 0x4 - core index']
  #allocation1 [shape = 'u32[72,128]{1,0:T(1,128)}', space=vmem, size = 0x9000, scoped, tag = 'internal scratch']
  %s0 = inlined_call_operand.vmem [shape: s32[16,1], index: 0, kind: input, shape index: {}]
  %s1 = inlined_call_operand.vmem [shape: s32[2,9,1], index: 1, kind: input, shape index: {}]
  %s2 = inlined_call_operand.vmem [shape: f32[20,96], index: 2, kind: input, shape index: {}]
  %s3 = inlined_call_operand.hbm [shape: f32[16,96], index: 3, kind: input, shape index: {}]
  %s4 = inlined_call_operand.vmem [shape: f32[24,148], index: 4, kind: input, shape index: {}]
  %s5 = inlined_call_operand.hbm [shape: f32[32,128], index: 5, kind: input, shape index: {}]
  %s6 = inlined_call_operand.hbm [shape: f32[32,42], index: 6, kind: input, shape index: {}]
  %s7 = inlined_call_operand.hbm [shape: f32[16,128], index: 7, kind: input, shape index: {}]
  %s8 = inlined_call_operand.hbm [shape: f32[2,8,24], index: 8, kind: input, shape index: {}]
  %s9 = inlined_call_operand.vmem [shape: f32[2,4,20], index: 9, kind: input, shape index: {}]
  %s10 = inlined_call_operand.vmem [shape: f32[2,4], index: 10, kind: input, shape index: {}]
  %s11 = inlined_call_operand.hbm [shape: f32[2,8,8], index: 11, kind: input, shape index: {}]
  %s12 = inlined_call_operand.vmem [shape: f32[2,128], index: 12, kind: output, shape index: {}]
  %s13 = sld [smem:[#allocation0]]
  $region82: #{net_forward.1} parent=0
    _
  %s15 = ssub.s32 1, %s13
  %s16 = scalar_select 0, %s15, %s13
  $region1: #{net_forward.1} parent=0
    #allocation2 [shape = 'u8[8192]{0}', space=vmem, size = 0x2000, scoped, tag = 'input window, operand 3, single buffered']
    #allocation3 [shape = 's32[1]{0}', space=sflag, size = 0x4, scoped, tag = 'scoped memory for net_forward.1']
    #allocation4 [shape = 'u8[16384]{0}', space=vmem, size = 0x4000, scoped, tag = 'input window, operand 5, single buffered']
    #allocation5 [shape = 's32[1]{0}', space=sflag, size = 0x4, scoped, tag = 'scoped memory for net_forward.1']
    #allocation6 [shape = 'u8[16384]{0}', space=vmem, size = 0x4000, scoped, tag = 'input window, operand 6, single buffered']
    #allocation7 [shape = 'u8[8192]{0}', space=vmem, size = 0x2000, scoped, tag = 'input window, operand 7, single buffered']
    #allocation8 [shape = 's32[1]{0}', space=sflag, size = 0x4, scoped, tag = 'scoped memory for net_forward.1']
    #allocation9 [shape = 'u8[8192]{0}', space=vmem, size = 0x2000, scoped, tag = 'input window, operand 8, single buffered']
    #allocation10 [shape = 'u8[8192]{0}', space=vmem, size = 0x2000, scoped, tag = 'input window, operand 11, single buffered']
    #allocation11 [shape = 's32[1]{0}', space=sflag, size = 0x4, scoped, tag = 'scoped memory for net_forward.1']
    %17 = vsyncpa [#allocation3], 0
    %18 = vsyncpa [#allocation5], 0
    %19 = vsyncpa [#allocation8], 0
    %20 = vsyncpa [#allocation11], 0
    // Predicated region
    $region2: #{net_forward.1} parent=1 // pred_check
      _
    $region3: #{net_forward.1} parent=1 // pred_check_branch
      %22 = sbr.rel (0) target = $region5
    $region4: #{net_forward.1} parent=1 // pred_region
      _
    $region5: #{net_forward.1} parent=1 // pred_fallthru
      _
    // Predicated region
    $region6: #{net_forward.1} parent=1 // pred_check
      _
    $region7: #{net_forward.1} parent=1 // pred_check_branch
      %24 = sbr.rel (0) target = $region9
    $region8: #{net_forward.1} parent=1 // pred_region
      _
    $region9: #{net_forward.1} parent=1 // pred_fallthru
      _
    // Predicated region
    $region10: #{net_forward.1} parent=1 // pred_check
      _
    $region11: #{net_forward.1} parent=1 // pred_check_branch
      %26 = sbr.rel (0) target = $region13
    $region12: #{net_forward.1} parent=1 // pred_region
      _
    $region13: #{net_forward.1} parent=1 // pred_fallthru
      _
    // Predicated region
    $region14: #{net_forward.1} parent=1 // pred_check
      _
    $region15: #{net_forward.1} parent=1 // pred_check_branch
      %28 = sbr.rel (0) target = $region17
    $region16: #{net_forward.1} parent=1 // pred_region
      %30 = vsyncadd [#allocation3], 0
      %s31 = sshll.u32 %s3, 4
      %s32 = int_to_ptr.hbm [resolvable:$true] %s31
      %s33 = sshll.u32 [#allocation2], 4
      %s34 = int_to_ptr.vmem [resolvable:$true] %s33
      %39 = dma.hbm_to_vmem [thread:$0]  %s32, 256, %s34, [#allocation3], 128, 128, 8
    $region17: #{net_forward.1} parent=1 // pred_fallthru
      _
    // Predicated region
    $region18: #{net_forward.1} parent=1 // pred_check
      _
    $region19: #{net_forward.1} parent=1 // pred_check_branch
      %41 = sbr.rel (0) target = $region21
    $region20: #{net_forward.1} parent=1 // pred_region
      _
    $region21: #{net_forward.1} parent=1 // pred_fallthru
      _
    // Predicated region
    $region22: #{net_forward.1} parent=1 // pred_check
      _
    $region23: #{net_forward.1} parent=1 // pred_check_branch
      %43 = sbr.rel (0) target = $region25
    $region24: #{net_forward.1} parent=1 // pred_region
      %45 = vsyncadd [#allocation5], 0
      %s46 = sshll.u32 %s5, 4
      %s47 = int_to_ptr.hbm [resolvable:$true] %s46
      %s48 = sshll.u32 [#allocation4], 4
      %s49 = int_to_ptr.vmem [resolvable:$true] %s48
      %54 = dma.hbm_to_vmem [thread:$0]  %s47, 512, %s49, [#allocation5], 128, 128, 8
    $region25: #{net_forward.1} parent=1 // pred_fallthru
      _
    // Predicated region
    $region26: #{net_forward.1} parent=1 // pred_check
      _
    $region27: #{net_forward.1} parent=1 // pred_check_branch
      %56 = sbr.rel (0) target = $region29
    $region28: #{net_forward.1} parent=1 // pred_region
      %58 = vsyncadd [#allocation5], 0
      %s59 = sshll.u32 %s6, 4
      %s60 = int_to_ptr.hbm [resolvable:$true] %s59
      %s61 = sshll.u32 [#allocation6], 4
      %s62 = int_to_ptr.vmem [resolvable:$true] %s61
      %67 = dma.hbm_to_vmem [thread:$0]  %s60, 512, %s62, [#allocation5], 128, 128, 8
    $region29: #{net_forward.1} parent=1 // pred_fallthru
      _
    // Predicated region
    $region30: #{net_forward.1} parent=1 // pred_check
      _
    $region31: #{net_forward.1} parent=1 // pred_check_branch
      %69 = sbr.rel (0) target = $region33
    $region32: #{net_forward.1} parent=1 // pred_region
      %71 = vsyncadd [#allocation8], 0
      %s72 = sshll.u32 %s7, 4
      %s73 = int_to_ptr.hbm [resolvable:$true] %s72
      %s74 = sshll.u32 [#allocation7], 4
      %s75 = int_to_ptr.vmem [resolvable:$true] %s74
      %80 = dma.hbm_to_vmem [thread:$0]  %s73, 256, %s75, [#allocation8], 128, 128, 8
    $region33: #{net_forward.1} parent=1 // pred_fallthru
      _
    // Predicated region
    $region34: #{net_forward.1} parent=1 // pred_check
      _
    $region35: #{net_forward.1} parent=1 // pred_check_branch
      %82 = sbr.rel (0) target = $region37
    $region36: #{net_forward.1} parent=1 // pred_region
      %84 = vsyncadd [#allocation8], 0
      %s85 = sshll.u32 %s8, 4
      %s86 = int_to_ptr.hbm [resolvable:$true] %s85
      %s87 = sshll.u32 [#allocation9], 4
      %s88 = int_to_ptr.vmem [resolvable:$true] %s87
      %93 = dma.hbm_to_vmem [thread:$0]  %s86, 256, %s88, [#allocation8], 128, 128, 8
    $region37: #{net_forward.1} parent=1 // pred_fallthru
      _
    // Predicated region
    $region38: #{net_forward.1} parent=1 // pred_check
      _
    $region39: #{net_forward.1} parent=1 // pred_check_branch
      %95 = sbr.rel (0) target = $region41
    $region40: #{net_forward.1} parent=1 // pred_region
      _
    $region41: #{net_forward.1} parent=1 // pred_fallthru
      _
    // Predicated region
    $region42: #{net_forward.1} parent=1 // pred_check
      _
    $region43: #{net_forward.1} parent=1 // pred_check_branch
      %97 = sbr.rel (0) target = $region45
    $region44: #{net_forward.1} parent=1 // pred_region
      _
    $region45: #{net_forward.1} parent=1 // pred_fallthru
      _
    // Predicated region
    $region46: #{net_forward.1} parent=1 // pred_check
      _
    $region47: #{net_forward.1} parent=1 // pred_check_branch
      %99 = sbr.rel (0) target = $region49
    $region48: #{net_forward.1} parent=1 // pred_region
      %101 = vsyncadd [#allocation11], 0
      %s102 = sshll.u32 %s11, 4
      %s103 = int_to_ptr.hbm [resolvable:$true] %s102
      %s104 = sshll.u32 [#allocation10], 4
      %s105 = int_to_ptr.vmem [resolvable:$true] %s104
      %110 = dma.hbm_to_vmem [thread:$0]  %s103, 256, %s105, [#allocation11], 128, 128, 8
    $region49: #{net_forward.1} parent=1 // pred_fallthru
      _
    // Predicated region
    $region50: #{net_forward.1} parent=1 // pred_check
      _
    $region51: #{net_forward.1} parent=1 // pred_check_branch
      %112 = sbr.rel (0) target = $region53
    $region52: #{net_forward.1} parent=1 // pred_region
      %114 = dma.done [#allocation3], 256
    $region53: #{net_forward.1} parent=1 // pred_fallthru
      _
    // Predicated region
    $region54: #{net_forward.1} parent=1 // pred_check
      _
    $region55: #{net_forward.1} parent=1 // pred_check_branch
      %116 = sbr.rel (0) target = $region57
    $region56: #{net_forward.1} parent=1 // pred_region
      %118 = dma.done [#allocation5], 512
    $region57: #{net_forward.1} parent=1 // pred_fallthru
      _
    // Predicated region
    $region58: #{net_forward.1} parent=1 // pred_check
      _
    $region59: #{net_forward.1} parent=1 // pred_check_branch
      %120 = sbr.rel (0) target = $region61
    $region60: #{net_forward.1} parent=1 // pred_region
      %122 = dma.done [#allocation5], 512
    $region61: #{net_forward.1} parent=1 // pred_fallthru
      _
    // Predicated region
    $region62: #{net_forward.1} parent=1 // pred_check
      _
    $region63: #{net_forward.1} parent=1 // pred_check_branch
      %124 = sbr.rel (0) target = $region65
    $region64: #{net_forward.1} parent=1 // pred_region
      %126 = dma.done [#allocation8], 256
    $region65: #{net_forward.1} parent=1 // pred_fallthru
      _
    // Predicated region
    $region66: #{net_forward.1} parent=1 // pred_check
      _
    $region67: #{net_forward.1} parent=1 // pred_check_branch
      %128 = sbr.rel (0) target = $region69
    $region68: #{net_forward.1} parent=1 // pred_region
      %130 = dma.done [#allocation8], 256
    $region69: #{net_forward.1} parent=1 // pred_fallthru
      _
    // Predicated region
    $region70: #{net_forward.1} parent=1 // pred_check
      _
    $region71: #{net_forward.1} parent=1 // pred_check_branch
      %132 = sbr.rel (0) target = $region73
    $region72: #{net_forward.1} parent=1 // pred_region
      %134 = dma.done [#allocation11], 256
    $region73: #{net_forward.1} parent=1 // pred_fallthru
      _
    %v135 = vld [vmem:[#allocation7] sm:$0xff]
    %v136 = vld [vmem:[#allocation7 + $0x8] sm:$0xff]
    %v137 = vld [vmem:[%s0] sm:$0xff]
    %v138 = vld [vmem:[%s0 + $0x8] sm:$0xff]
    %v139 = vlaneseq
    %v140 = vand.u32 %v139, 127
    %141 = vset.pattern.permute.xlu0 0
    %142 = vperm.xlu0 %141, %v137
    %v143 = vpop.permute.xlu0 %142
    %144 = vset.pattern.permute.xlu0 0
    %145 = vperm.xlu0 %144, %v138
    %v146 = vpop.permute.xlu0 %145
    %vm147 = vcmp.eq.s32.totalorder %v143, %v140
    %vm148 = vcmp.eq.s32.totalorder %v146, %v140
    %v149 = vsel %vm147, 1, 0
    %v150 = vsel %vm148, 1, 0
    %v151 = vcvt.s32.f32 %v149
    %v152 = vcvt.s32.f32 %v150
    %v153 = vld [vmem:[%s2] sm:$0xff]
    %v154 = vld [vmem:[%s2 + $0x8] sm:$0xff]
    %v155 = vld [vmem:[%s2 + $0x10] sm:$0xf]
    %v156 = vperm.slane %v135, 0
    %vm157 = vcmask 162816
    %v159 = vsel %vm157, %v151, 0
    %v162 = vsel %vm157, %v152, 0
    %vm164 = vcmask 1043456
    %v166 = vsel %vm164, %v155, 0
    %168 = vmatpush.msra.mxu0 0.0
    %169 = vmatpush.msra.mxu0 0.0
    %170 = vmatpush.msra.mxu0 0.0
    %171 = vmatpush.msra.mxu0 0.0
    %172 = vmatpush.msra.mxu0 0.0
    %173 = vmatpush.msra.mxu0 0.0
    %174 = vmatpush.msra.mxu0 0.0
    %175 = vmatpush.msra.mxu0 0.0
    %176 = vmatpush.msra.mxu0 0.0
    %177 = vmatpush.msra.mxu0 0.0
    %178 = vmatpush.msra.mxu0 0.0
    %179 = vmatpush.msra.mxu0 0.0
    %180 = vmatpush.msra.mxu0 0.0
    %181 = vmatpush.msra.mxu0 %v166
    %182 = vmatpush.msra.mxu0 %v154
    %183 = vmatpush.msra.mxu0 %v153
    %184 = vmatmul.f32.gmra.mxu0 %v159
    %v185 = vpop.f32.mrf.mxu0
    %v186 = vadd.f32 %v156, %v185
    %187 = vmatmul.f32.gmra.mxu0 %v162
    %v188 = vpop.f32.mrf.mxu0
    %v189 = vadd.f32 %v156, %v188
    %190 = vdwg.mxu0
    %v191 = vld [vmem:[#allocation2] sm:$0xff]
    %v192 = vld [vmem:[#allocation2 + $0x8] sm:$0xff]
    %vm193 = vcmask 130048
    %v195 = vsel %vm193, 0.0, 0
    %197 = vmatpush.msra.mxu0 0.0
    %198 = vmatpush.msra.mxu0 0.0
    %199 = vmatpush.msra.mxu0 0.0
    %200 = vmatpush.msra.mxu0 0.0
    %201 = vmatpush.msra.mxu0 0.0
    %202 = vmatpush.msra.mxu0 0.0
    %203 = vmatpush.msra.mxu0 0.0
    %204 = vmatpush.msra.mxu0 0.0
    %205 = vmatpush.msra.mxu0 0.0
    %206 = vmatpush.msra.mxu0 0.0
    %207 = vmatpush.msra.mxu0 0.0
    %208 = vmatpush.msra.mxu0 0.0
    %209 = vmatpush.msra.mxu0 0.0
    %210 = vmatpush.msra.mxu0 0.0
    %211 = vmatpush.msra.mxu0 %v192
    %212 = vmatpush.msra.mxu0 %v191
    %213 = vmatmul.f32.gmra.mxu0 %v195
    %v214 = vpop.f32.mrf.mxu0
    %v215 = vadd.f32 0.0, %v214
    %216 = vdwg.mxu0
    %v217 = vperm.slane %v135, 1
    %v218 = vadd.f32 %v215, %v217
    %v219 = vperm.slane %v135, 2
    %221 = vrot.lane.b32.xlu0 %v219, 48
    %v222 = vpop.permute.xlu0 %221
    %v224 = vadd.f32 %v215, %v222
    %v225 = vadd.f32 %v186, %v218
    %v226 = vsub.f32 0.0, %v225
    %v227 = vmul.f32 %v226, 1.442695
    %v228 = vpow.pop %v227
    %v229 = vadd.f32 %v228, 1.0
    %v230 = vrcp.pop %v229
    %v231 = vmul.f32 %v229, %v230
    %v232 = vsub.f32 1.0, %v231
    %v233 = vmul.f32 %v230, %v232
    %v234 = vadd.f32 %v230, %v233
    %vm235 = vweird.f32 %v229
    %vm236 = vweird.f32 %v230
    %vm237 = vmor %vm235, %vm236
    %v238 = vsel %vm237, %v230, %v234
    %v239 = vand.u32 2147483647, %v229
    %vm240 = vcmp.eq.f32.partialorder %v239, 8.507059e+37
    %v241 = vand.u32 %v229, 2147483648
    %v242 = vor.u32 1.1754944e-38, %v241
    %v243 = vsel %vm240, %v242, %v238
    %v244 = vmul.f32 1.0, %v243
    %246 = vrot.lane.b32.xlu0 %v218, 96
    %v247 = vpop.permute.xlu0 %246
    %v249 = vmul.f32 %v244, %v247
    %251 = vrot.lane.b32.xlu0 %v249, 32
    %v252 = vpop.permute.xlu0 %251
    %v254 = vadd.f32 %v186, %v252
    %v255 = vtanh.pop %v254
    %v256 = vsub.f32 1.0, %v244
    %258 = vrot.lane.b32.xlu0 %v255, 112
    %v259 = vpop.permute.xlu0 %258
    %v261 = vmul.f32 %v256, %v259
    %v262 = vmul.f32 %v244, 0.0
    %v263 = vadd.f32 %v261, %v262
    %v265 = vrot.slane %v224, 4
    %v267 = vadd.f32 %v189, %v265
    %v268 = vsub.f32 0.0, %v267
    %v269 = vmul.f32 %v268, 1.442695
    %v270 = vpow.pop %v269
    %v271 = vadd.f32 %v270, 1.0
    %v272 = vrcp.pop %v271
    %v273 = vmul.f32 %v271, %v272
    %v274 = vsub.f32 1.0, %v273
    %v275 = vmul.f32 %v272, %v274
    %v276 = vadd.f32 %v272, %v275
    %vm277 = vweird.f32 %v271
    %vm278 = vweird.f32 %v272
    %vm279 = vmor %vm277, %vm278
    %v280 = vsel %vm279, %v272, %v276
    %v281 = vand.u32 2147483647, %v271
    %vm282 = vcmp.eq.f32.partialorder %v281, 8.507059e+37
    %v283 = vand.u32 %v271, 2147483648
    %v284 = vor.u32 1.1754944e-38, %v283
    %v285 = vsel %vm282, %v284, %v280
    %v286 = vmul.f32 1.0, %v285
    %287 = vrot.lane.b32.xlu0 %v265, 96
    %v288 = vpop.permute.xlu0 %287
    %v290 = vmul.f32 %v286, %v288
    %292 = vrot.lane.b32.xlu0 %v290, 32
    %v293 = vpop.permute.xlu0 %292
    %v295 = vadd.f32 %v189, %v293
    %v296 = vtanh.pop %v295
    %v297 = vsub.f32 1.0, %v286
    %299 = vrot.lane.b32.xlu0 %v296, 112
    %v300 = vpop.permute.xlu0 %299
    %v302 = vmul.f32 %v297, %v300
    %v303 = vmul.f32 %v286, 0.0
    %v304 = vadd.f32 %v302, %v303
    %v306 = vrot.slane %v304, 4
    %307 = vrot.lane.b32.xlu0 %v306, 80
    %v308 = vpop.permute.xlu0 %307
    %vm310 = vcmask 1041408
    %v311 = vsel %vm310, %v263, %v308
    %313 = vrot.lane.b32.xlu0 %v311, 112
    %v314 = vpop.permute.xlu0 %313
    %v315 = vsel %vm193, %v314, 0
    %317 = vmatpush.msra.mxu0 0.0
    %318 = vmatpush.msra.mxu0 0.0
    %319 = vmatpush.msra.mxu0 0.0
    %320 = vmatpush.msra.mxu0 0.0
    %321 = vmatpush.msra.mxu0 0.0
    %322 = vmatpush.msra.mxu0 0.0
    %323 = vmatpush.msra.mxu0 0.0
    %324 = vmatpush.msra.mxu0 0.0
    %325 = vmatpush.msra.mxu0 0.0
    %326 = vmatpush.msra.mxu0 0.0
    %327 = vmatpush.msra.mxu0 0.0
    %328 = vmatpush.msra.mxu0 0.0
    %329 = vmatpush.msra.mxu0 0.0
    %330 = vmatpush.msra.mxu0 0.0
    %331 = vmatpush.msra.mxu0 %v192
    %332 = vmatpush.msra.mxu0 %v191
    %333 = vmatmul.f32.gmra.mxu0 %v315
    %v334 = vpop.f32.mrf.mxu0
    %v335 = vadd.f32 0.0, %v334
    %336 = vdwg.mxu0
    %v337 = vadd.f32 %v335, %v217
    %v338 = vadd.f32 %v335, %v222
    %v340 = vrot.slane %v337, 6
    %v342 = vadd.f32 %v186, %v340
    %v343 = vsub.f32 0.0, %v342
    %v344 = vmul.f32 %v343, 1.442695
    %v345 = vpow.pop %v344
    %v346 = vadd.f32 %v345, 1.0
    %v347 = vrcp.pop %v346
    %v348 = vmul.f32 %v346, %v347
    %v349 = vsub.f32 1.0, %v348
    %v350 = vmul.f32 %v347, %v349
    %v351 = vadd.f32 %v347, %v350
    %vm352 = vweird.f32 %v346
    %vm353 = vweird.f32 %v347
    %vm354 = vmor %vm352, %vm353
    %v355 = vsel %vm354, %v347, %v351
    %v356 = vand.u32 2147483647, %v346
    %vm357 = vcmp.eq.f32.partialorder %v356, 8.507059e+37
    %v358 = vand.u32 %v346, 2147483648
    %v359 = vor.u32 1.1754944e-38, %v358
    %v360 = vsel %vm357, %v359, %v355
    %v361 = vmul.f32 1.0, %v360
    %362 = vrot.lane.b32.xlu0 %v340, 96
    %v363 = vpop.permute.xlu0 %362
    %v365 = vmul.f32 %v361, %v363
    %367 = vrot.lane.b32.xlu0 %v365, 32
    %v368 = vpop.permute.xlu0 %367
    %v370 = vadd.f32 %v186, %v368
    %v371 = vtanh.pop %v370
    %v372 = vsub.f32 1.0, %v361
    %374 = vrot.lane.b32.xlu0 %v371, 112
    %v375 = vpop.permute.xlu0 %374
    %v377 = vmul.f32 %v372, %v375
    %v379 = vrot.slane %v263, 6
    %v381 = vmul.f32 %v361, %v379
    %v382 = vadd.f32 %v377, %v381
    %v384 = vrot.slane %v338, 6
    %v386 = vadd.f32 %v189, %v384
    %v387 = vsub.f32 0.0, %v386
    %v388 = vmul.f32 %v387, 1.442695
    %v389 = vpow.pop %v388
    %v390 = vadd.f32 %v389, 1.0
    %v391 = vrcp.pop %v390
    %v392 = vmul.f32 %v390, %v391
    %v393 = vsub.f32 1.0, %v392
    %v394 = vmul.f32 %v391, %v393
    %v395 = vadd.f32 %v391, %v394
    %vm396 = vweird.f32 %v390
    %vm397 = vweird.f32 %v391
    %vm398 = vmor %vm396, %vm397
    %v399 = vsel %vm398, %v391, %v395
    %v400 = vand.u32 2147483647, %v390
    %vm401 = vcmp.eq.f32.partialorder %v400, 8.507059e+37
    %v402 = vand.u32 %v390, 2147483648
    %v403 = vor.u32 1.1754944e-38, %v402
    %v404 = vsel %vm401, %v403, %v399
    %v405 = vmul.f32 1.0, %v404
    %406 = vrot.lane.b32.xlu0 %v384, 96
    %v407 = vpop.permute.xlu0 %406
    %v409 = vmul.f32 %v405, %v407
    %411 = vrot.lane.b32.xlu0 %v409, 32
    %v412 = vpop.permute.xlu0 %411
    %v414 = vadd.f32 %v189, %v412
    %v415 = vtanh.pop %v414
    %v416 = vsub.f32 1.0, %v405
    %418 = vrot.lane.b32.xlu0 %v415, 112
    %v419 = vpop.permute.xlu0 %418
    %v421 = vmul.f32 %v416, %v419
    %v422 = vrot.slane %v304, 2
    %v424 = vmul.f32 %v405, %v422
    %v425 = vadd.f32 %v421, %v424
    %v427 = vrot.slane %v382, 2
    %v430 = vrot.slane %v425, 2
    %431 = vrot.lane.b32.xlu0 %v430, 80
    %v432 = vpop.permute.xlu0 %431
    %v434 = vsel %vm310, %v427, %v432
    %436 = vrot.lane.b32.xlu0 %v434, 112
    %v437 = vpop.permute.xlu0 %436
    %v438 = vsel %vm193, %v437, 0
    %440 = vmatpush.msra.mxu0 0.0
    %441 = vmatpush.msra.mxu0 0.0
    %442 = vmatpush.msra.mxu0 0.0
    %443 = vmatpush.msra.mxu0 0.0
    %444 = vmatpush.msra.mxu0 0.0
    %445 = vmatpush.msra.mxu0 0.0
    %446 = vmatpush.msra.mxu0 0.0
    %447 = vmatpush.msra.mxu0 0.0
    %448 = vmatpush.msra.mxu0 0.0
    %449 = vmatpush.msra.mxu0 0.0
    %450 = vmatpush.msra.mxu0 0.0
    %451 = vmatpush.msra.mxu0 0.0
    %452 = vmatpush.msra.mxu0 0.0
    %453 = vmatpush.msra.mxu0 0.0
    %454 = vmatpush.msra.mxu0 %v192
    %455 = vmatpush.msra.mxu0 %v191
    %456 = vmatmul.f32.gmra.mxu0 %v438
    %v457 = vpop.f32.mrf.mxu0
    %v458 = vadd.f32 0.0, %v457
    %459 = vdwg.mxu0
    %v460 = vadd.f32 %v458, %v217
    %v461 = vadd.f32 %v458, %v222
    %v463 = vrot.slane %v460, 4
    %v465 = vadd.f32 %v186, %v463
    %v466 = vsub.f32 0.0, %v465
    %v467 = vmul.f32 %v466, 1.442695
    %v468 = vpow.pop %v467
    %v469 = vadd.f32 %v468, 1.0
    %v470 = vrcp.pop %v469
    %v471 = vmul.f32 %v469, %v470
    %v472 = vsub.f32 1.0, %v471
    %v473 = vmul.f32 %v470, %v472
    %v474 = vadd.f32 %v470, %v473
    %vm475 = vweird.f32 %v469
    %vm476 = vweird.f32 %v470
    %vm477 = vmor %vm475, %vm476
    %v478 = vsel %vm477, %v470, %v474
    %v479 = vand.u32 2147483647, %v469
    %vm480 = vcmp.eq.f32.partialorder %v479, 8.507059e+37
    %v481 = vand.u32 %v469, 2147483648
    %v482 = vor.u32 1.1754944e-38, %v481
    %v483 = vsel %vm480, %v482, %v478
    %v484 = vmul.f32 1.0, %v483
    %485 = vrot.lane.b32.xlu0 %v463, 96
    %v486 = vpop.permute.xlu0 %485
    %v488 = vmul.f32 %v484, %v486
    %490 = vrot.lane.b32.xlu0 %v488, 32
    %v491 = vpop.permute.xlu0 %490
    %v493 = vadd.f32 %v186, %v491
    %v494 = vtanh.pop %v493
    %v495 = vsub.f32 1.0, %v484
    %497 = vrot.lane.b32.xlu0 %v494, 112
    %v498 = vpop.permute.xlu0 %497
    %v500 = vmul.f32 %v495, %v498
    %v501 = vrot.slane %v382, 6
    %v503 = vmul.f32 %v484, %v501
    %v504 = vadd.f32 %v500, %v503
    %v505 = vadd.f32 %v189, %v461
    %v506 = vsub.f32 0.0, %v505
    %v507 = vmul.f32 %v506, 1.442695
    %v508 = vpow.pop %v507
    %v509 = vadd.f32 %v508, 1.0
    %v510 = vrcp.pop %v509
    %v511 = vmul.f32 %v509, %v510
    %v512 = vsub.f32 1.0, %v511
    %v513 = vmul.f32 %v510, %v512
    %v514 = vadd.f32 %v510, %v513
    %vm515 = vweird.f32 %v509
    %vm516 = vweird.f32 %v510
    %vm517 = vmor %vm515, %vm516
    %v518 = vsel %vm517, %v510, %v514
    %v519 = vand.u32 2147483647, %v509
    %vm520 = vcmp.eq.f32.partialorder %v519, 8.507059e+37
    %v521 = vand.u32 %v509, 2147483648
    %v522 = vor.u32 1.1754944e-38, %v521
    %v523 = vsel %vm520, %v522, %v518
    %v524 = vmul.f32 1.0, %v523
    %526 = vrot.lane.b32.xlu0 %v461, 96
    %v527 = vpop.permute.xlu0 %526
    %v529 = vmul.f32 %v524, %v527
    %531 = vrot.lane.b32.xlu0 %v529, 32
    %v532 = vpop.permute.xlu0 %531
    %v534 = vadd.f32 %v189, %v532
    %v535 = vtanh.pop %v534
    %v536 = vsub.f32 1.0, %v524
    %538 = vrot.lane.b32.xlu0 %v535, 112
    %v539 = vpop.permute.xlu0 %538
    %v541 = vmul.f32 %v536, %v539
    %v543 = vmul.f32 %v524, %v430
    %v544 = vadd.f32 %v541, %v543
    %v546 = vrot.slane %v504, 4
    %549 = vrot.lane.b32.xlu0 %v544, 80
    %v550 = vpop.permute.xlu0 %549
    %v552 = vsel %vm310, %v546, %v550
    %554 = vrot.lane.b32.xlu0 %v552, 112
    %v555 = vpop.permute.xlu0 %554
    %v556 = vsel %vm193, %v555, 0
    %558 = vmatpush.msra.mxu0 0.0
    %559 = vmatpush.msra.mxu0 0.0
    %560 = vmatpush.msra.mxu0 0.0
    %561 = vmatpush.msra.mxu0 0.0
    %562 = vmatpush.msra.mxu0 0.0
    %563 = vmatpush.msra.mxu0 0.0
    %564 = vmatpush.msra.mxu0 0.0
    %565 = vmatpush.msra.mxu0 0.0
    %566 = vmatpush.msra.mxu0 0.0
    %567 = vmatpush.msra.mxu0 0.0
    %568 = vmatpush.msra.mxu0 0.0
    %569 = vmatpush.msra.mxu0 0.0
    %570 = vmatpush.msra.mxu0 0.0
    %571 = vmatpush.msra.mxu0 0.0
    %572 = vmatpush.msra.mxu0 %v192
    %573 = vmatpush.msra.mxu0 %v191
    %574 = vmatmul.f32.gmra.mxu0 %v556
    %v575 = vpop.f32.mrf.mxu0
    %v576 = vadd.f32 0.0, %v575
    %577 = vdwg.mxu0
    %v578 = vadd.f32 %v576, %v217
    %v579 = vadd.f32 %v576, %v222
    %v581 = vrot.slane %v578, 2
    %v583 = vadd.f32 %v186, %v581
    %v584 = vsub.f32 0.0, %v583
    %v585 = vmul.f32 %v584, 1.442695
    %v586 = vpow.pop %v585
    %v587 = vadd.f32 %v586, 1.0
    %v588 = vrcp.pop %v587
    %v589 = vmul.f32 %v587, %v588
    %v590 = vsub.f32 1.0, %v589
    %v591 = vmul.f32 %v588, %v590
    %v592 = vadd.f32 %v588, %v591
    %vm593 = vweird.f32 %v587
    %vm594 = vweird.f32 %v588
    %vm595 = vmor %vm593, %vm594
    %v596 = vsel %vm595, %v588, %v592
    %v597 = vand.u32 2147483647, %v587
    %vm598 = vcmp.eq.f32.partialorder %v597, 8.507059e+37
    %v599 = vand.u32 %v587, 2147483648
    %v600 = vor.u32 1.1754944e-38, %v599
    %v601 = vsel %vm598, %v600, %v596
    %v602 = vmul.f32 1.0, %v601
    %603 = vrot.lane.b32.xlu0 %v581, 96
    %v604 = vpop.permute.xlu0 %603
    %v606 = vmul.f32 %v602, %v604
    %608 = vrot.lane.b32.xlu0 %v606, 32
    %v609 = vpop.permute.xlu0 %608
    %v611 = vadd.f32 %v186, %v609
    %v612 = vtanh.pop %v611
    %v613 = vsub.f32 1.0, %v602
    %615 = vrot.lane.b32.xlu0 %v612, 112
    %v616 = vpop.permute.xlu0 %615
    %v618 = vmul.f32 %v613, %v616
    %v619 = vrot.slane %v504, 6
    %v621 = vmul.f32 %v602, %v619
    %v622 = vadd.f32 %v618, %v621
    %v624 = vrot.slane %v579, 2
    %v626 = vadd.f32 %v189, %v624
    %v627 = vsub.f32 0.0, %v626
    %v628 = vmul.f32 %v627, 1.442695
    %v629 = vpow.pop %v628
    %v630 = vadd.f32 %v629, 1.0
    %v631 = vrcp.pop %v630
    %v632 = vmul.f32 %v630, %v631
    %v633 = vsub.f32 1.0, %v632
    %v634 = vmul.f32 %v631, %v633
    %v635 = vadd.f32 %v631, %v634
    %vm636 = vweird.f32 %v630
    %vm637 = vweird.f32 %v631
    %vm638 = vmor %vm636, %vm637
    %v639 = vsel %vm638, %v631, %v635
    %v640 = vand.u32 2147483647, %v630
    %vm641 = vcmp.eq.f32.partialorder %v640, 8.507059e+37
    %v642 = vand.u32 %v630, 2147483648
    %v643 = vor.u32 1.1754944e-38, %v642
    %v644 = vsel %vm641, %v643, %v639
    %v645 = vmul.f32 1.0, %v644
    %646 = vrot.lane.b32.xlu0 %v624, 96
    %v647 = vpop.permute.xlu0 %646
    %v649 = vmul.f32 %v645, %v647
    %651 = vrot.lane.b32.xlu0 %v649, 32
    %v652 = vpop.permute.xlu0 %651
    %v654 = vadd.f32 %v189, %v652
    %v655 = vtanh.pop %v654
    %v656 = vsub.f32 1.0, %v645
    %658 = vrot.lane.b32.xlu0 %v655, 112
    %v659 = vpop.permute.xlu0 %658
    %v661 = vmul.f32 %v656, %v659
    %v662 = vrot.slane %v544, 2
    %v664 = vmul.f32 %v645, %v662
    %v665 = vadd.f32 %v661, %v664
    %v667 = vrot.slane %v622, 6
    %v670 = vrot.slane %v665, 6
    %671 = vrot.lane.b32.xlu0 %v670, 80
    %v672 = vpop.permute.xlu0 %671
    %v674 = vsel %vm310, %v667, %v672
    %676 = vrot.lane.b32.xlu0 %v674, 112
    %v677 = vpop.permute.xlu0 %676
    %v678 = vsel %vm193, %v677, 0
    %680 = vmatpush.msra.mxu0 0.0
    %681 = vmatpush.msra.mxu0 0.0
    %682 = vmatpush.msra.mxu0 0.0
    %683 = vmatpush.msra.mxu0 0.0
    %684 = vmatpush.msra.mxu0 0.0
    %685 = vmatpush.msra.mxu0 0.0
    %686 = vmatpush.msra.mxu0 0.0
    %687 = vmatpush.msra.mxu0 0.0
    %688 = vmatpush.msra.mxu0 0.0
    %689 = vmatpush.msra.mxu0 0.0
    %690 = vmatpush.msra.mxu0 0.0
    %691 = vmatpush.msra.mxu0 0.0
    %692 = vmatpush.msra.mxu0 0.0
    %693 = vmatpush.msra.mxu0 0.0
    %694 = vmatpush.msra.mxu0 %v192
    %695 = vmatpush.msra.mxu0 %v191
    %696 = vmatmul.f32.gmra.mxu0 %v678
    %v697 = vpop.f32.mrf.mxu0
    %v698 = vadd.f32 0.0, %v697
    %699 = vdwg.mxu0
    %v700 = vadd.f32 %v698, %v217
    %v701 = vadd.f32 %v698, %v222
    %v702 = vadd.f32 %v189, %v700
    %v703 = vsub.f32 0.0, %v702
    %v704 = vmul.f32 %v703, 1.442695
    %v705 = vpow.pop %v704
    %v706 = vadd.f32 %v705, 1.0
    %v707 = vrcp.pop %v706
    %v708 = vmul.f32 %v706, %v707
    %v709 = vsub.f32 1.0, %v708
    %v710 = vmul.f32 %v707, %v709
    %v711 = vadd.f32 %v707, %v710
    %vm712 = vweird.f32 %v706
    %vm713 = vweird.f32 %v707
    %vm714 = vmor %vm712, %vm713
    %v715 = vsel %vm714, %v707, %v711
    %v716 = vand.u32 2147483647, %v706
    %vm717 = vcmp.eq.f32.partialorder %v716, 8.507059e+37
    %v718 = vand.u32 %v706, 2147483648
    %v719 = vor.u32 1.1754944e-38, %v718
    %v720 = vsel %vm717, %v719, %v715
    %v721 = vmul.f32 1.0, %v720
    %723 = vrot.lane.b32.xlu0 %v700, 96
    %v724 = vpop.permute.xlu0 %723
    %v726 = vmul.f32 %v721, %v724
    %728 = vrot.lane.b32.xlu0 %v726, 32
    %v729 = vpop.permute.xlu0 %728
    %v731 = vadd.f32 %v189, %v729
    %v732 = vtanh.pop %v731
    %v733 = vsub.f32 1.0, %v721
    %735 = vrot.lane.b32.xlu0 %v732, 112
    %v736 = vpop.permute.xlu0 %735
    %v738 = vmul.f32 %v733, %v736
    %v739 = vmul.f32 %v721, %v667
    %v740 = vadd.f32 %v738, %v739
    %v742 = vrot.slane %v701, 4
    %v744 = vadd.f32 %v186, %v742
    %v745 = vsub.f32 0.0, %v744
    %v746 = vmul.f32 %v745, 1.442695
    %v747 = vpow.pop %v746
    %v748 = vadd.f32 %v747, 1.0
    %v749 = vrcp.pop %v748
    %v750 = vmul.f32 %v748, %v749
    %v751 = vsub.f32 1.0, %v750
    %v752 = vmul.f32 %v749, %v751
    %v753 = vadd.f32 %v749, %v752
    %vm754 = vweird.f32 %v748
    %vm755 = vweird.f32 %v749
    %vm756 = vmor %vm754, %vm755
    %v757 = vsel %vm756, %v749, %v753
    %v758 = vand.u32 2147483647, %v748
    %vm759 = vcmp.eq.f32.partialorder %v758, 8.507059e+37
    %v760 = vand.u32 %v748, 2147483648
    %v761 = vor.u32 1.1754944e-38, %v760
    %v762 = vsel %vm759, %v761, %v757
    %v763 = vmul.f32 1.0, %v762
    %764 = vrot.lane.b32.xlu0 %v742, 96
    %v765 = vpop.permute.xlu0 %764
    %v767 = vmul.f32 %v763, %v765
    %769 = vrot.lane.b32.xlu0 %v767, 32
    %v770 = vpop.permute.xlu0 %769
    %v772 = vadd.f32 %v186, %v770
    %v773 = vtanh.pop %v772
    %v774 = vsub.f32 1.0, %v763
    %776 = vrot.lane.b32.xlu0 %v773, 112
    %v777 = vpop.permute.xlu0 %776
    %v779 = vmul.f32 %v774, %v777
    %v780 = vrot.slane %v665, 2
    %v782 = vmul.f32 %v763, %v780
    %v783 = vadd.f32 %v779, %v782
    %v785 = vrot.slane %v783, 4
    %786 = vrot.lane.b32.xlu0 %v785, 80
    %v787 = vpop.permute.xlu0 %786
    %v789 = vsel %vm310, %v740, %v787
    %791 = vrot.lane.b32.xlu0 %v789, 112
    %v792 = vpop.permute.xlu0 %791
    %v793 = vsel %vm193, %v792, 0
    %795 = vmatpush.msra.mxu0 0.0
    %796 = vmatpush.msra.mxu0 0.0
    %797 = vmatpush.msra.mxu0 0.0
    %798 = vmatpush.msra.mxu0 0.0
    %799 = vmatpush.msra.mxu0 0.0
    %800 = vmatpush.msra.mxu0 0.0
    %801 = vmatpush.msra.mxu0 0.0
    %802 = vmatpush.msra.mxu0 0.0
    %803 = vmatpush.msra.mxu0 0.0
    %804 = vmatpush.msra.mxu0 0.0
    %805 = vmatpush.msra.mxu0 0.0
    %806 = vmatpush.msra.mxu0 0.0
    %807 = vmatpush.msra.mxu0 0.0
    %808 = vmatpush.msra.mxu0 0.0
    %809 = vmatpush.msra.mxu0 %v192
    %810 = vmatpush.msra.mxu0 %v191
    %811 = vmatmul.f32.gmra.mxu0 %v793
    %v812 = vpop.f32.mrf.mxu0
    %v813 = vadd.f32 0.0, %v812
    %814 = vdwg.mxu0
    %v815 = vadd.f32 %v813, %v217
    %v816 = vadd.f32 %v813, %v222
    %v818 = vrot.slane %v815, 6
    %v820 = vadd.f32 %v189, %v818
    %v821 = vsub.f32 0.0, %v820
    %v822 = vmul.f32 %v821, 1.442695
    %v823 = vpow.pop %v822
    %v824 = vadd.f32 %v823, 1.0
    %v825 = vrcp.pop %v824
    %v826 = vmul.f32 %v824, %v825
    %v827 = vsub.f32 1.0, %v826
    %v828 = vmul.f32 %v825, %v827
    %v829 = vadd.f32 %v825, %v828
    %vm830 = vweird.f32 %v824
    %vm831 = vweird.f32 %v825
    %vm832 = vmor %vm830, %vm831
    %v833 = vsel %vm832, %v825, %v829
    %v834 = vand.u32 2147483647, %v824
    %vm835 = vcmp.eq.f32.partialorder %v834, 8.507059e+37
    %v836 = vand.u32 %v824, 2147483648
    %v837 = vor.u32 1.1754944e-38, %v836
    %v838 = vsel %vm835, %v837, %v833
    %v839 = vmul.f32 1.0, %v838
    %840 = vrot.lane.b32.xlu0 %v818, 96
    %v841 = vpop.permute.xlu0 %840
    %v843 = vmul.f32 %v839, %v841
    %845 = vrot.lane.b32.xlu0 %v843, 32
    %v846 = vpop.permute.xlu0 %845
    %v848 = vadd.f32 %v189, %v846
    %v849 = vtanh.pop %v848
    %v850 = vsub.f32 1.0, %v839
    %852 = vrot.lane.b32.xlu0 %v849, 112
    %v853 = vpop.permute.xlu0 %852
    %v855 = vmul.f32 %v850, %v853
    %v857 = vrot.slane %v740, 6
    %v859 = vmul.f32 %v839, %v857
    %v860 = vadd.f32 %v855, %v859
    %v862 = vrot.slane %v816, 6
    %v864 = vadd.f32 %v186, %v862
    %v865 = vsub.f32 0.0, %v864
    %v866 = vmul.f32 %v865, 1.442695
    %v867 = vpow.pop %v866
    %v868 = vadd.f32 %v867, 1.0
    %v869 = vrcp.pop %v868
    %v870 = vmul.f32 %v868, %v869
    %v871 = vsub.f32 1.0, %v870
    %v872 = vmul.f32 %v869, %v871
    %v873 = vadd.f32 %v869, %v872
    %vm874 = vweird.f32 %v868
    %vm875 = vweird.f32 %v869
    %vm876 = vmor %vm874, %vm875
    %v877 = vsel %vm876, %v869, %v873
    %v878 = vand.u32 2147483647, %v868
    %vm879 = vcmp.eq.f32.partialorder %v878, 8.507059e+37
    %v880 = vand.u32 %v868, 2147483648
    %v881 = vor.u32 1.1754944e-38, %v880
    %v882 = vsel %vm879, %v881, %v877
    %v883 = vmul.f32 1.0, %v882
    %884 = vrot.lane.b32.xlu0 %v862, 96
    %v885 = vpop.permute.xlu0 %884
    %v887 = vmul.f32 %v883, %v885
    %889 = vrot.lane.b32.xlu0 %v887, 32
    %v890 = vpop.permute.xlu0 %889
    %v892 = vadd.f32 %v186, %v890
    %v893 = vtanh.pop %v892
    %v894 = vsub.f32 1.0, %v883
    %896 = vrot.lane.b32.xlu0 %v893, 112
    %v897 = vpop.permute.xlu0 %896
    %v899 = vmul.f32 %v894, %v897
    %v900 = vrot.slane %v783, 2
    %v902 = vmul.f32 %v883, %v900
    %v903 = vadd.f32 %v899, %v902
    %v905 = vrot.slane %v860, 2
    %v908 = vrot.slane %v903, 2
    %909 = vrot.lane.b32.xlu0 %v908, 80
    %v910 = vpop.permute.xlu0 %909
    %v912 = vsel %vm310, %v905, %v910
    %914 = vrot.lane.b32.xlu0 %v912, 112
    %v915 = vpop.permute.xlu0 %914
    %v916 = vsel %vm193, %v915, 0
    %918 = vmatpush.msra.mxu0 0.0
    %919 = vmatpush.msra.mxu0 0.0
    %920 = vmatpush.msra.mxu0 0.0
    %921 = vmatpush.msra.mxu0 0.0
    %922 = vmatpush.msra.mxu0 0.0
    %923 = vmatpush.msra.mxu0 0.0
    %924 = vmatpush.msra.mxu0 0.0
    %925 = vmatpush.msra.mxu0 0.0
    %926 = vmatpush.msra.mxu0 0.0
    %927 = vmatpush.msra.mxu0 0.0
    %928 = vmatpush.msra.mxu0 0.0
    %929 = vmatpush.msra.mxu0 0.0
    %930 = vmatpush.msra.mxu0 0.0
    %931 = vmatpush.msra.mxu0 0.0
    %932 = vmatpush.msra.mxu0 %v192
    %933 = vmatpush.msra.mxu0 %v191
    %934 = vmatmul.f32.gmra.mxu0 %v916
    %v935 = vpop.f32.mrf.mxu0
    %v936 = vadd.f32 0.0, %v935
    %937 = vdwg.mxu0
    %v938 = vadd.f32 %v936, %v217
    %v939 = vadd.f32 %v936, %v222
    %v941 = vrot.slane %v938, 4
    %v943 = vadd.f32 %v189, %v941
    %v944 = vsub.f32 0.0, %v943
    %v945 = vmul.f32 %v944, 1.442695
    %v946 = vpow.pop %v945
    %v947 = vadd.f32 %v946, 1.0
    %v948 = vrcp.pop %v947
    %v949 = vmul.f32 %v947, %v948
    %v950 = vsub.f32 1.0, %v949
    %v951 = vmul.f32 %v948, %v950
    %v952 = vadd.f32 %v948, %v951
    %vm953 = vweird.f32 %v947
    %vm954 = vweird.f32 %v948
    %vm955 = vmor %vm953, %vm954
    %v956 = vsel %vm955, %v948, %v952
    %v957 = vand.u32 2147483647, %v947
    %vm958 = vcmp.eq.f32.partialorder %v957, 8.507059e+37
    %v959 = vand.u32 %v947, 2147483648
    %v960 = vor.u32 1.1754944e-38, %v959
    %v961 = vsel %vm958, %v960, %v956
    %v962 = vmul.f32 1.0, %v961
    %963 = vrot.lane.b32.xlu0 %v941, 96
    %v964 = vpop.permute.xlu0 %963
    %v966 = vmul.f32 %v962, %v964
    %968 = vrot.lane.b32.xlu0 %v966, 32
    %v969 = vpop.permute.xlu0 %968
    %v971 = vadd.f32 %v189, %v969
    %v972 = vtanh.pop %v971
    %v973 = vsub.f32 1.0, %v962
    %975 = vrot.lane.b32.xlu0 %v972, 112
    %v976 = vpop.permute.xlu0 %975
    %v978 = vmul.f32 %v973, %v976
    %v979 = vrot.slane %v860, 6
    %v981 = vmul.f32 %v962, %v979
    %v982 = vadd.f32 %v978, %v981
    %v983 = vadd.f32 %v186, %v939
    %v984 = vsub.f32 0.0, %v983
    %v985 = vmul.f32 %v984, 1.442695
    %v986 = vpow.pop %v985
    %v987 = vadd.f32 %v986, 1.0
    %v988 = vrcp.pop %v987
    %v989 = vmul.f32 %v987, %v988
    %v990 = vsub.f32 1.0, %v989
    %v991 = vmul.f32 %v988, %v990
    %v992 = vadd.f32 %v988, %v991
    %vm993 = vweird.f32 %v987
    %vm994 = vweird.f32 %v988
    %vm995 = vmor %vm993, %vm994
    %v996 = vsel %vm995, %v988, %v992
    %v997 = vand.u32 2147483647, %v987
    %vm998 = vcmp.eq.f32.partialorder %v997, 8.507059e+37
    %v999 = vand.u32 %v987, 2147483648
    %v1000 = vor.u32 1.1754944e-38, %v999
    %v1001 = vsel %vm998, %v1000, %v996
    %v1002 = vmul.f32 1.0, %v1001
    %1004 = vrot.lane.b32.xlu0 %v939, 96
    %v1005 = vpop.permute.xlu0 %1004
    %v1007 = vmul.f32 %v1002, %v1005
    %1009 = vrot.lane.b32.xlu0 %v1007, 32
    %v1010 = vpop.permute.xlu0 %1009
    %v1012 = vadd.f32 %v186, %v1010
    %v1013 = vtanh.pop %v1012
    %v1014 = vsub.f32 1.0, %v1002
    %1016 = vrot.lane.b32.xlu0 %v1013, 112
    %v1017 = vpop.permute.xlu0 %1016
    %v1019 = vmul.f32 %v1014, %v1017
    %v1021 = vmul.f32 %v1002, %v908
    %v1022 = vadd.f32 %v1019, %v1021
    %v1024 = vrot.slane %v982, 4
    %1027 = vrot.lane.b32.xlu0 %v1022, 80
    %v1028 = vpop.permute.xlu0 %1027
    %v1030 = vsel %vm310, %v1024, %v1028
    %1032 = vrot.lane.b32.xlu0 %v1030, 112
    %v1033 = vpop.permute.xlu0 %1032
    %v1034 = vsel %vm193, %v1033, 0
    %1036 = vmatpush.msra.mxu0 0.0
    %1037 = vmatpush.msra.mxu0 0.0
    %1038 = vmatpush.msra.mxu0 0.0
    %1039 = vmatpush.msra.mxu0 0.0
    %1040 = vmatpush.msra.mxu0 0.0
    %1041 = vmatpush.msra.mxu0 0.0
    %1042 = vmatpush.msra.mxu0 0.0
    %1043 = vmatpush.msra.mxu0 0.0
    %1044 = vmatpush.msra.mxu0 0.0
    %1045 = vmatpush.msra.mxu0 0.0
    %1046 = vmatpush.msra.mxu0 0.0
    %1047 = vmatpush.msra.mxu0 0.0
    %1048 = vmatpush.msra.mxu0 0.0
    %1049 = vmatpush.msra.mxu0 0.0
    %1050 = vmatpush.msra.mxu0 %v192
    %1051 = vmatpush.msra.mxu0 %v191
    %1052 = vmatmul.f32.gmra.mxu0 %v1034
    %v1053 = vpop.f32.mrf.mxu0
    %v1054 = vadd.f32 0.0, %v1053
    %1055 = vdwg.mxu0
    %v1056 = vadd.f32 %v1054, %v217
    %v1057 = vadd.f32 %v1054, %v222
    %v1059 = vrot.slane %v1056, 2
    %v1061 = vadd.f32 %v189, %v1059
    %v1062 = vsub.f32 0.0, %v1061
    %v1063 = vmul.f32 %v1062, 1.442695
    %v1064 = vpow.pop %v1063
    %v1065 = vadd.f32 %v1064, 1.0
    %v1066 = vrcp.pop %v1065
    %v1067 = vmul.f32 %v1065, %v1066
    %v1068 = vsub.f32 1.0, %v1067
    %v1069 = vmul.f32 %v1066, %v1068
    %v1070 = vadd.f32 %v1066, %v1069
    %vm1071 = vweird.f32 %v1065
    %vm1072 = vweird.f32 %v1066
    %vm1073 = vmor %vm1071, %vm1072
    %v1074 = vsel %vm1073, %v1066, %v1070
    %v1075 = vand.u32 2147483647, %v1065
    %vm1076 = vcmp.eq.f32.partialorder %v1075, 8.507059e+37
    %v1077 = vand.u32 %v1065, 2147483648
    %v1078 = vor.u32 1.1754944e-38, %v1077
    %v1079 = vsel %vm1076, %v1078, %v1074
    %v1080 = vmul.f32 1.0, %v1079
    %1081 = vrot.lane.b32.xlu0 %v1059, 96
    %v1082 = vpop.permute.xlu0 %1081
    %v1084 = vmul.f32 %v1080, %v1082
    %1086 = vrot.lane.b32.xlu0 %v1084, 32
    %v1087 = vpop.permute.xlu0 %1086
    %v1089 = vadd.f32 %v189, %v1087
    %v1090 = vtanh.pop %v1089
    %v1091 = vsub.f32 1.0, %v1080
    %1093 = vrot.lane.b32.xlu0 %v1090, 112
    %v1094 = vpop.permute.xlu0 %1093
    %v1096 = vmul.f32 %v1091, %v1094
    %v1097 = vrot.slane %v982, 6
    %v1099 = vmul.f32 %v1080, %v1097
    %v1100 = vadd.f32 %v1096, %v1099
    %v1102 = vrot.slane %v1057, 2
    %v1104 = vadd.f32 %v186, %v1102
    %v1105 = vsub.f32 0.0, %v1104
    %v1106 = vmul.f32 %v1105, 1.442695
    %v1107 = vpow.pop %v1106
    %v1108 = vadd.f32 %v1107, 1.0
    %v1109 = vrcp.pop %v1108
    %v1110 = vmul.f32 %v1108, %v1109
    %v1111 = vsub.f32 1.0, %v1110
    %v1112 = vmul.f32 %v1109, %v1111
    %v1113 = vadd.f32 %v1109, %v1112
    %vm1114 = vweird.f32 %v1108
    %vm1115 = vweird.f32 %v1109
    %vm1116 = vmor %vm1114, %vm1115
    %v1117 = vsel %vm1116, %v1109, %v1113
    %v1118 = vand.u32 2147483647, %v1108
    %vm1119 = vcmp.eq.f32.partialorder %v1118, 8.507059e+37
    %v1120 = vand.u32 %v1108, 2147483648
    %v1121 = vor.u32 1.1754944e-38, %v1120
    %v1122 = vsel %vm1119, %v1121, %v1117
    %v1123 = vmul.f32 1.0, %v1122
    %1124 = vrot.lane.b32.xlu0 %v1102, 96
    %v1125 = vpop.permute.xlu0 %1124
    %v1127 = vmul.f32 %v1123, %v1125
    %1129 = vrot.lane.b32.xlu0 %v1127, 32
    %v1130 = vpop.permute.xlu0 %1129
    %v1132 = vadd.f32 %v186, %v1130
    %v1133 = vtanh.pop %v1132
    %v1134 = vsub.f32 1.0, %v1123
    %1136 = vrot.lane.b32.xlu0 %v1133, 112
    %v1137 = vpop.permute.xlu0 %1136
    %v1139 = vmul.f32 %v1134, %v1137
    %v1140 = vrot.slane %v1022, 2
    %v1142 = vmul.f32 %v1123, %v1140
    %v1143 = vadd.f32 %v1139, %v1142
    %1144 = vrot.lane.b32.xlu0 %v263, 112
    %v1145 = vpop.permute.xlu0 %1144
    %1148 = vrot.lane.b32.xlu0 %v1143, 80
    %v1149 = vpop.permute.xlu0 %1148
    %v1151 = vsel %vm193, %v1145, %v1149
    %v1153 = vrot.slane %v1151, 1
    %1155 = vrot.lane.b32.xlu0 %v382, 112
    %v1156 = vpop.permute.xlu0 %1155
    %v1158 = vsel %vm193, %v1156, %v1028
    %1160 = vst [vmem:[#allocation1] sm:$0xff] %v1158
    %s1161 = scalar_lea.vmem [#allocation1], 2
    %v1162 = vld [vmem:[%s1161] ss:$9 sm:$0xff]
    %s1163 = scalar_lea.vmem [#allocation1], 3
    %v1164 = vld [vmem:[%s1163] ss:$9 sm:$0xff]
    %1165 = vrot.lane.b32.xlu0 %v504, 112
    %v1166 = vpop.permute.xlu0 %1165
    %1168 = vrot.lane.b32.xlu0 %v903, 80
    %v1169 = vpop.permute.xlu0 %1168
    %v1171 = vsel %vm193, %v1166, %v1169
    %1173 = vst [vmem:[#allocation1] sm:$0xff] %v1171
    %s1174 = scalar_lea.vmem [#allocation1], 4
    %v1175 = vld [vmem:[%s1174] ss:$9 sm:$0xff]
    %s1176 = scalar_lea.vmem [#allocation1], 5
    %v1177 = vld [vmem:[%s1176] ss:$9 sm:$0xff]
    %1178 = vrot.lane.b32.xlu0 %v622, 112
    %v1179 = vpop.permute.xlu0 %1178
    %1181 = vrot.lane.b32.xlu0 %v783, 80
    %v1182 = vpop.permute.xlu0 %1181
    %v1184 = vsel %vm193, %v1179, %v1182
    %1186 = vst [vmem:[#allocation1] sm:$0xff] %v1184
    %s1187 = scalar_lea.vmem [#allocation1], 6
    %v1188 = vld [vmem:[%s1187] ss:$9 sm:$0xff]
    %s1189 = scalar_lea.vmem [#allocation1], 7
    %v1190 = vld [vmem:[%s1189] ss:$9 sm:$0xff]
    %1191 = vrot.lane.b32.xlu0 %v740, 112
    %v1192 = vpop.permute.xlu0 %1191
    %1194 = vrot.lane.b32.xlu0 %v665, 80
    %v1195 = vpop.permute.xlu0 %1194
    %v1197 = vsel %vm193, %v1192, %v1195
    %v1199 = vrot.slane %v1197, 1
    %1200 = vrot.lane.b32.xlu0 %v860, 112
    %v1201 = vpop.permute.xlu0 %1200
    %v1203 = vsel %vm193, %v1201, %v550
    %1205 = vst [vmem:[#allocation1] sm:$0xff] %v1203
    %s1206 = scalar_lea.vmem [#allocation1], 2
    %v1207 = vld [vmem:[%s1206] ss:$9 sm:$0xff]
    %s1208 = scalar_lea.vmem [#allocation1], 3
    %v1209 = vld [vmem:[%s1208] ss:$9 sm:$0xff]
    %1210 = vrot.lane.b32.xlu0 %v982, 112
    %v1211 = vpop.permute.xlu0 %1210
    %1213 = vrot.lane.b32.xlu0 %v425, 80
    %v1214 = vpop.permute.xlu0 %1213
    %v1216 = vsel %vm193, %v1211, %v1214
    %1218 = vst [vmem:[#allocation1] sm:$0xff] %v1216
    %s1219 = scalar_lea.vmem [#allocation1], 4
    %v1220 = vld [vmem:[%s1219] ss:$9 sm:$0xff]
    %s1221 = scalar_lea.vmem [#allocation1], 5
    %v1222 = vld [vmem:[%s1221] ss:$9 sm:$0xff]
    %1224 = vrot.lane.b32.xlu0 %v1100, 112
    %v1225 = vpop.permute.xlu0 %1224
    %1227 = vrot.lane.b32.xlu0 %v304, 80
    %v1228 = vpop.permute.xlu0 %1227
    %v1230 = vsel %vm193, %v1225, %v1228
    %1232 = vst [vmem:[#allocation1] sm:$0xff] %v1230
    %s1233 = scalar_lea.vmem [#allocation1], 6
    %v1234 = vld [vmem:[%s1233] ss:$9 sm:$0xff]
    %s1235 = scalar_lea.vmem [#allocation1], 7
    %v1236 = vld [vmem:[%s1235] ss:$9 sm:$0xff]
    %v1237 = vperm.slane %v1162, 0
    %v1238 = vperm.slane %v1164, 0
    %v1241 = vperm.slane %v1175, 0
    %v1242 = vperm.slane %v1177, 0
    %v1245 = vperm.slane %v1188, 0
    %v1246 = vperm.slane %v1190, 0
    %v1249 = vperm.slane %v1197, 0
    %v1250 = vperm.slane %v1199, 0
    %v1253 = vperm.slane %v1207, 0
    %v1254 = vperm.slane %v1209, 0
    %v1257 = vperm.slane %v1220, 0
    %v1258 = vperm.slane %v1222, 0
    %v1261 = vperm.slane %v1234, 0
    %v1262 = vperm.slane %v1236, 0
    %vm1265 = vcmask 1040384
    %v1266 = vsel %vm1265, %v1151, %v1237
    %v1267 = vsel %vm1265, %v1153, %v1238
    %v1268 = vsel %vm310, %v1266, %v1241
    %v1269 = vsel %vm310, %v1267, %v1242
    %vm1270 = vcmask 1042432
    %v1271 = vsel %vm1270, %v1268, %v1245
    %v1272 = vsel %vm1270, %v1269, %v1246
    %v1273 = vsel %vm164, %v1271, %v1249
    %v1274 = vsel %vm164, %v1272, %v1250
    %vm1275 = vcmask 1044480
    %v1276 = vsel %vm1275, %v1273, %v1253
    %v1277 = vsel %vm1275, %v1274, %v1254
    %vm1278 = vcmask 1045504
    %v1279 = vsel %vm1278, %v1276, %v1257
    %v1280 = vsel %vm1278, %v1277, %v1258
    %vm1281 = vcmask 1046528
    %v1282 = vsel %vm1281, %v1279, %v1261
    %v1283 = vsel %vm1281, %v1280, %v1262
    %v1284 = vld [vmem:[%s1] sm:$0xff]
    %v1285 = vld [vmem:[%s1 + $0x8] sm:$0x1]
    %v1286 = vld [vmem:[%s1 + $0x10] sm:$0xff]
    %v1287 = vld [vmem:[%s1 + $0x18] sm:$0x1]
    %1288 = vset.pattern.permute.xlu0 0
    %1289 = vperm.xlu0 %1288, %v1284
    %v1290 = vpop.permute.xlu0 %1289
    %1291 = vset.pattern.permute.xlu0 0
    %1292 = vperm.xlu0 %1291, %v1285
    %v1293 = vpop.permute.xlu0 %1292
    %1294 = vset.pattern.permute.xlu0 0
    %1295 = vperm.xlu0 %1294, %v1286
    %v1296 = vpop.permute.xlu0 %1295
    %1297 = vset.pattern.permute.xlu0 0
    %1298 = vperm.xlu0 %1297, %v1287
    %v1299 = vpop.permute.xlu0 %1298
    %vm1300 = vcmp.eq.s32.totalorder %v1290, %v140
    %vm1301 = vcmp.eq.s32.totalorder %v1293, %v140
    %vm1302 = vcmp.eq.s32.totalorder %v1296, %v140
    %vm1303 = vcmp.eq.s32.totalorder %v1299, %v140
    %v1304 = vsel %vm1300, 1, 0
    %v1305 = vsel %vm1301, 1, 0
    %v1306 = vsel %vm1302, 1, 0
    %v1307 = vsel %vm1303, 1, 0
    %v1308 = vcvt.s32.f32 %v1304
    %v1309 = vcvt.s32.f32 %v1305
    %v1310 = vcvt.s32.f32 %v1306
    %v1311 = vcvt.s32.f32 %v1307
    %vm1312 = vcmask 64512
    %v1314 = vsel %vm1312, %v1308, 0
    %v1317 = vsel %vm1312, %v1309, 0
    %1319 = vmatpush.msra.mxu0 0.0
    %1320 = vmatpush.msra.mxu0 0.0
    %1321 = vmatpush.msra.mxu0 0.0
    %1322 = vmatpush.msra.mxu0 0.0
    %1323 = vmatpush.msra.mxu0 0.0
    %1324 = vmatpush.msra.mxu0 0.0
    %1325 = vmatpush.msra.mxu0 0.0
    %1326 = vmatpush.msra.mxu0 0.0
    %1327 = vmatpush.msra.mxu0 0.0
    %1328 = vmatpush.msra.mxu0 0.0
    %1329 = vmatpush.msra.mxu0 0.0
    %1330 = vmatpush.msra.mxu0 0.0
    %1331 = vmatpush.msra.mxu0 0.0
    %1332 = vmatpush.msra.mxu0 0.0
    %1333 = vmatpush.msra.mxu0 0.0
    %1334 = vmatpush.msra.mxu0 %v1282
    %1335 = vmatmul.f32.gmra.mxu0 %v1314
    %v1336 = vpop.f32.mrf.mxu0
    %v1337 = vadd.f32 0.0, %v1336
    %1338 = vmatmul.f32.gmra.mxu0 %v1317
    %v1339 = vpop.f32.mrf.mxu0
    %v1340 = vadd.f32 0.0, %v1339
    %1341 = vdwg.mxu0
    %v1343 = vsel %vm1312, %v1310, 0
    %v1346 = vsel %vm1312, %v1311, 0
    %1348 = vmatpush.msra.mxu0 0.0
    %1349 = vmatpush.msra.mxu0 0.0
    %1350 = vmatpush.msra.mxu0 0.0
    %1351 = vmatpush.msra.mxu0 0.0
    %1352 = vmatpush.msra.mxu0 0.0
    %1353 = vmatpush.msra.mxu0 0.0
    %1354 = vmatpush.msra.mxu0 0.0
    %1355 = vmatpush.msra.mxu0 0.0
    %1356 = vmatpush.msra.mxu0 0.0
    %1357 = vmatpush.msra.mxu0 0.0
    %1358 = vmatpush.msra.mxu0 0.0
    %1359 = vmatpush.msra.mxu0 0.0
    %1360 = vmatpush.msra.mxu0 0.0
    %1361 = vmatpush.msra.mxu0 0.0
    %1362 = vmatpush.msra.mxu0 0.0
    %1363 = vmatpush.msra.mxu0 %v1283
    %1364 = vmatmul.f32.gmra.mxu0 %v1343
    %v1365 = vpop.f32.mrf.mxu0
    %v1366 = vadd.f32 0.0, %v1365
    %1367 = vmatmul.f32.gmra.mxu0 %v1346
    %v1368 = vpop.f32.mrf.mxu0
    %v1369 = vadd.f32 0.0, %v1368
    %1370 = vdwg.mxu0
    %v1373 = vrot.slane %v1369, 7
    %vm1374 = vcmask 1041409
    %v1375 = vsel %vm1374, %v1373, %v1340
    %v1377 = vsel %vm193, %v1375, %v1149
    %v1378 = vld [vmem:[#allocation9] sm:$0xff]
    %v1379 = vld [vmem:[#allocation9 + $0x8] sm:$0xff]
    %v1380 = vld [vmem:[#allocation10] sm:$0xff]
    %v1381 = vld [vmem:[#allocation10 + $0x8] sm:$0xff]
    %v1382 = vld [vmem:[%s4] sm:$0xff]
    %v1383 = vld [vmem:[%s4 + $0x8] sm:$0xff]
    %v1384 = vld [vmem:[%s4 + $0x10] sm:$0xff]
    %v1385 = vld [vmem:[%s4 + $0x18] sm:$0xff]
    %v1386 = vld [vmem:[%s4 + $0x20] sm:$0xff]
    %v1387 = vld [vmem:[%s4 + $0x28] sm:$0xff]
    %v1388 = vmul.f32 %v1378, %v1378
    %v1389 = vmul.f32 %v1379, %v1379
    %vm1390 = vcmask 195584
    %v1391 = vsel %vm1390, %v1388, 0.0
    %v1392 = vrot.slane %v1391, 4
    %v1393 = vadd.f32 %v1391, %v1392
    %v1394 = vrot.slane %v1393, 2
    %v1395 = vadd.f32 %v1393, %v1394
    %v1396 = vrot.slane %v1395, 1
    %v1397 = vadd.f32 %v1395, %v1396
    %v1398 = vsel %vm1390, %v1389, 0.0
    %v1399 = vrot.slane %v1398, 4
    %v1400 = vadd.f32 %v1398, %v1399
    %v1401 = vrot.slane %v1400, 2
    %v1402 = vadd.f32 %v1400, %v1401
    %v1403 = vrot.slane %v1402, 1
    %v1404 = vadd.f32 %v1402, %v1403
    %v1405 = vrsqrt.pop %v1397
    %v1406 = vmul.f32 %v1405, %v1397
    %v1407 = vmul.f32 %v1406, %v1405
    %v1408 = vmul.f32 0.5, %v1407
    %v1409 = vsub.f32 1.5, %v1408
    %v1410 = vmul.f32 %v1405, %v1409
    %v1411 = vmul.f32 %v1397, %v1410
    %vm1412 = vcmp.eq.f32.partialorder %v1397, inf
    %v1413 = vsel %vm1412, %v1397, %v1411
    %vm1414 = vcmp.eq.f32.partialorder %v1397, 0.0
    %v1415 = vand.u32 %v1397, 2147483648
    %v1416 = vsel %vm1414, %v1415, %v1413
    %v1417 = vrsqrt.pop %v1404
    %v1418 = vmul.f32 %v1417, %v1404
    %v1419 = vmul.f32 %v1418, %v1417
    %v1420 = vmul.f32 0.5, %v1419
    %v1421 = vsub.f32 1.5, %v1420
    %v1422 = vmul.f32 %v1417, %v1421
    %v1423 = vmul.f32 %v1404, %v1422
    %vm1424 = vcmp.eq.f32.partialorder %v1404, inf
    %v1425 = vsel %vm1424, %v1404, %v1423
    %vm1426 = vcmp.eq.f32.partialorder %v1404, 0.0
    %v1427 = vand.u32 %v1404, 2147483648
    %v1428 = vsel %vm1426, %v1427, %v1425
    %v1429 = vadd.f32 %v1416, 1e-12
    %v1430 = vadd.f32 %v1428, 1e-12
    %v1431 = vrcp.pop %v1429
    %v1432 = vmul.f32 %v1429, %v1431
    %v1433 = vsub.f32 1.0, %v1432
    %v1434 = vmul.f32 %v1431, %v1433
    %v1435 = vadd.f32 %v1431, %v1434
    %vm1436 = vweird.f32 %v1429
    %vm1437 = vweird.f32 %v1431
    %vm1438 = vmor %vm1436, %vm1437
    %v1439 = vsel %vm1438, %v1431, %v1435
    %v1440 = vand.u32 2147483647, %v1429
    %vm1441 = vcmp.eq.f32.partialorder %v1440, 8.507059e+37
    %v1442 = vand.u32 %v1429, 2147483648
    %v1443 = vor.u32 1.1754944e-38, %v1442
    %v1444 = vsel %vm1441, %v1443, %v1439
    %v1445 = vmul.f32 %v1378, %v1444
    %v1446 = vrcp.pop %v1430
    %v1447 = vmul.f32 %v1430, %v1446
    %v1448 = vsub.f32 1.0, %v1447
    %v1449 = vmul.f32 %v1446, %v1448
    %v1450 = vadd.f32 %v1446, %v1449
    %vm1451 = vweird.f32 %v1430
    %vm1452 = vweird.f32 %v1446
    %vm1453 = vmor %vm1451, %vm1452
    %v1454 = vsel %vm1453, %v1446, %v1450
    %v1455 = vand.u32 2147483647, %v1430
    %vm1456 = vcmp.eq.f32.partialorder %v1455, 8.507059e+37
    %v1457 = vand.u32 %v1430, 2147483648
    %v1458 = vor.u32 1.1754944e-38, %v1457
    %v1459 = vsel %vm1456, %v1458, %v1454
    %v1460 = vmul.f32 %v1379, %v1459
    %1464 = vrot.lane.b32.xlu0 %v1382, 64
    %v1465 = vpop.permute.xlu0 %1464
    %1466 = vrot.lane.b32.xlu0 %v1384, 64
    %v1467 = vpop.permute.xlu0 %1466
    %1468 = vrot.lane.b32.xlu0 %v1386, 64
    %v1469 = vpop.permute.xlu0 %1468
    %v1474 = vsel %vm1390, %v1445, 0
    %v1477 = vsel %vm1390, %v1460, 0
    %1479 = vmatpush.msra.mxu0 0.0
    %1480 = vmatpush.msra.mxu0 0.0
    %1481 = vmatpush.msra.mxu0 0.0
    %1482 = vmatpush.msra.mxu0 0.0
    %1483 = vmatpush.msra.mxu0 0.0
    %1484 = vmatpush.msra.mxu0 0.0
    %1485 = vmatpush.msra.mxu0 0.0
    %1486 = vmatpush.msra.mxu0 0.0
    %1487 = vmatpush.msra.mxu0 0.0
    %1488 = vmatpush.msra.mxu0 0.0
    %1489 = vmatpush.msra.mxu0 0.0
    %1490 = vmatpush.msra.mxu0 0.0
    %1491 = vmatpush.msra.mxu0 0.0
    %1492 = vmatpush.msra.mxu0 %v1469
    %1493 = vmatpush.msra.mxu0 %v1467
    %1494 = vmatpush.msra.mxu0 %v1465
    %1495 = vmatmul.f32.gmra.mxu0 %v1474
    %v1496 = vpop.f32.mrf.mxu0
    %v1497 = vadd.f32 0.0, %v1496
    %1498 = vmatmul.f32.gmra.mxu0 %v1477
    %v1499 = vpop.f32.mrf.mxu0
    %v1500 = vadd.f32 0.0, %v1499
    %1501 = vdwg.mxu0
    %v1502 = vperm.slane %v135, 3
    %v1504 = vsel %vm1390, %v1378, 0
    %v1507 = vsel %vm1390, %v1379, 0
    %1509 = vmatpush.msra.mxu0 0.0
    %1510 = vmatpush.msra.mxu0 0.0
    %1511 = vmatpush.msra.mxu0 0.0
    %1512 = vmatpush.msra.mxu0 0.0
    %1513 = vmatpush.msra.mxu0 0.0
    %1514 = vmatpush.msra.mxu0 0.0
    %1515 = vmatpush.msra.mxu0 0.0
    %1516 = vmatpush.msra.mxu0 0.0
    %1517 = vmatpush.msra.mxu0 0.0
    %1518 = vmatpush.msra.mxu0 0.0
    %1519 = vmatpush.msra.mxu0 0.0
    %1520 = vmatpush.msra.mxu0 0.0
    %1521 = vmatpush.msra.mxu0 0.0
    %1522 = vmatpush.msra.mxu0 %v1386
    %1523 = vmatpush.msra.mxu0 %v1384
    %1524 = vmatpush.msra.mxu0 %v1382
    %1525 = vmatmul.f32.gmra.mxu0 %v1504
    %v1526 = vpop.f32.mrf.mxu0
    %v1527 = vadd.f32 %v1502, %v1526
    %1528 = vmatmul.f32.gmra.mxu0 %v1507
    %v1529 = vpop.f32.mrf.mxu0
    %v1530 = vadd.f32 %v1502, %v1529
    %1531 = vdwg.mxu0
    %v1532 = vmax.f32 %v1527, 0.0
    %v1533 = vmax.f32 %v1530, 0.0
    %v1534 = vld [vmem:[#allocation4] sm:$0xff]
    %v1535 = vld [vmem:[#allocation4 + $0x8] sm:$0xff]
    %v1536 = vld [vmem:[#allocation4 + $0x10] sm:$0xff]
    %v1537 = vld [vmem:[#allocation4 + $0x18] sm:$0xff]
    %v1540 = vrot.slane %v1337, 1
    %v1541 = vrot.slane %v1337, 2
    %v1542 = vrot.slane %v1366, 1
    %v1543 = vrot.slane %v1366, 2
    %v1544 = vperm.slane %v135, 4
    %1545 = vst [vmem:[#allocation1] ss:$9 sm:$0xff] %v1337
    %s1546 = scalar_lea.vmem [#allocation1], 1
    %1547 = vst [vmem:[%s1546] ss:$9 sm:$0xff] %v1540
    %s1548 = scalar_lea.vmem [#allocation1], 2
    %1549 = vst [vmem:[%s1548] ss:$9 sm:$0xff] %v1541
    %s1550 = scalar_lea.vmem [#allocation1], 3
    %1551 = vst [vmem:[%s1550] ss:$9 sm:$0xff] %v1366
    %s1552 = scalar_lea.vmem [#allocation1], 4
    %1553 = vst [vmem:[%s1552] ss:$9 sm:$0xff] %v1542
    %s1554 = scalar_lea.vmem [#allocation1], 5
    %1555 = vst [vmem:[%s1554] ss:$9 sm:$0xff] %v1543
    %v1556 = vld [vmem:[#allocation1] sm:$0xff]
    %vm1557 = vcmask 261120
    %v1558 = vsel %vm1557, %v1556, 0
    %1560 = vmatpush.msra.mxu0 0.0
    %1561 = vmatpush.msra.mxu0 0.0
    %1562 = vmatpush.msra.mxu0 0.0
    %1563 = vmatpush.msra.mxu0 0.0
    %1564 = vmatpush.msra.mxu0 0.0
    %1565 = vmatpush.msra.mxu0 0.0
    %1566 = vmatpush.msra.mxu0 0.0
    %1567 = vmatpush.msra.mxu0 0.0
    %1568 = vmatpush.msra.mxu0 0.0
    %1569 = vmatpush.msra.mxu0 0.0
    %1570 = vmatpush.msra.mxu0 0.0
    %1571 = vmatpush.msra.mxu0 0.0
    %1572 = vmatpush.msra.mxu0 %v1537
    %1573 = vmatpush.msra.mxu0 %v1536
    %1574 = vmatpush.msra.mxu0 %v1535
    %1575 = vmatpush.msra.mxu0 %v1534
    %1576 = vmatmul.f32.gmra.mxu0 %v1558
    %v1577 = vpop.f32.mrf.mxu0
    %v1578 = vadd.f32 %v1544, %v1577
    %1579 = vdwg.mxu0
    %v1580 = vmax.f32 %v1578, 0.0
    %v1581 = vperm.slane %v136, 4
    %v1582 = vmul.f32 %v1580, %v1581
    %v1584 = vrot.slane %v1582, 1
    %v1585 = vrot.slane %v1582, 2
    %v1586 = vrot.slane %v1582, 3
    %v1587 = vrot.slane %v1582, 4
    %v1588 = vrot.slane %v1582, 5
    %v1590 = vrot.slane %v136, 7
    %s1591 = vtos %v1590
    %v1592 = vstv %s1591
    %1594 = vst [vmem:[#allocation1] ss:$9 sm:$0xff] %v1582
    %s1595 = scalar_lea.vmem [#allocation1], 1
    %1596 = vst [vmem:[%s1595] ss:$9 sm:$0xff] %v1584
    %s1597 = scalar_lea.vmem [#allocation1], 2
    %1598 = vst [vmem:[%s1597] ss:$9 sm:$0xff] %v1585
    %v1599 = vld [vmem:[#allocation1] sm:$0xff]
    %v1600 = vsel %vm1557, %v1599, 0
    %v1603 = vsel %vm1557, %v1532, 0
    %1605 = vmatpush.xpose.msra.mxu0 0.0
    %1606 = vmatpush.xpose.msra.mxu0 0.0
    %1607 = vmatpush.xpose.msra.mxu0 0.0
    %1608 = vmatpush.xpose.msra.mxu0 0.0
    %1609 = vmatpush.xpose.msra.mxu0 0.0
    %1610 = vmatpush.xpose.msra.mxu0 0.0
    %1611 = vmatpush.xpose.msra.mxu0 0.0
    %1612 = vmatpush.xpose.msra.mxu0 0.0
    %1613 = vmatpush.xpose.msra.mxu0 0.0
    %1614 = vmatpush.xpose.msra.mxu0 0.0
    %1615 = vmatpush.xpose.msra.mxu0 0.0
    %1616 = vmatpush.xpose.msra.mxu0 0.0
    %1617 = vmatpush.xpose.msra.mxu0 0.0
    %1618 = vmatpush.xpose.msra.mxu0 0.0
    %1619 = vmatpush.xpose.msra.mxu0 0.0
    %1620 = vmatpush.xpose.msra.mxu0 %v1603
    %1621 = vmatmul.f32.gmra.mxu0 %v1600
    %v1622 = vpop.f32.mrf.mxu0
    %v1623 = vadd.f32 %v1592, %v1622
    %1624 = vdwg.mxu0
    %1625 = vst [vmem:[#allocation1] ss:$9 sm:$0xff] %v1586
    %s1626 = scalar_lea.vmem [#allocation1], 1
    %1627 = vst [vmem:[%s1626] ss:$9 sm:$0xff] %v1587
    %s1628 = scalar_lea.vmem [#allocation1], 2
    %1629 = vst [vmem:[%s1628] ss:$9 sm:$0xff] %v1588
    %v1630 = vld [vmem:[#allocation1] sm:$0xff]
    %v1631 = vsel %vm1557, %v1630, 0
    %v1634 = vsel %vm1557, %v1533, 0
    %1636 = vmatpush.xpose.msra.mxu0 0.0
    %1637 = vmatpush.xpose.msra.mxu0 0.0
    %1638 = vmatpush.xpose.msra.mxu0 0.0
    %1639 = vmatpush.xpose.msra.mxu0 0.0
    %1640 = vmatpush.xpose.msra.mxu0 0.0
    %1641 = vmatpush.xpose.msra.mxu0 0.0
    %1642 = vmatpush.xpose.msra.mxu0 0.0
    %1643 = vmatpush.xpose.msra.mxu0 0.0
    %1644 = vmatpush.xpose.msra.mxu0 0.0
    %1645 = vmatpush.xpose.msra.mxu0 0.0
    %1646 = vmatpush.xpose.msra.mxu0 0.0
    %1647 = vmatpush.xpose.msra.mxu0 0.0
    %1648 = vmatpush.xpose.msra.mxu0 0.0
    %1649 = vmatpush.xpose.msra.mxu0 0.0
    %1650 = vmatpush.xpose.msra.mxu0 0.0
    %1651 = vmatpush.xpose.msra.mxu0 %v1634
    %1652 = vmatmul.f32.gmra.mxu0 %v1631
    %v1653 = vpop.f32.mrf.mxu0
    %v1654 = vadd.f32 %v1592, %v1653
    %1655 = vdwg.mxu0
    %v1656 = vperm.slane %v135, 5
    %v1657 = vrot.slane %v1337, 3
    %v1658 = vsel %vm1374, %v1543, %v1657
    %1663 = vrot.lane.b32.xlu0 %v1534, 96
    %v1664 = vpop.permute.xlu0 %1663
    %1665 = vrot.lane.b32.xlu0 %v1535, 96
    %v1666 = vpop.permute.xlu0 %1665
    %1667 = vrot.lane.b32.xlu0 %v1536, 96
    %v1668 = vpop.permute.xlu0 %1667
    %1669 = vrot.lane.b32.xlu0 %v1537, 96
    %v1670 = vpop.permute.xlu0 %1669
    %v1675 = vsel %vm1557, %v1658, 0
    %1677 = vmatpush.msra.mxu0 0.0
    %1678 = vmatpush.msra.mxu0 0.0
    %1679 = vmatpush.msra.mxu0 0.0
    %1680 = vmatpush.msra.mxu0 0.0
    %1681 = vmatpush.msra.mxu0 0.0
    %1682 = vmatpush.msra.mxu0 0.0
    %1683 = vmatpush.msra.mxu0 0.0
    %1684 = vmatpush.msra.mxu0 0.0
    %1685 = vmatpush.msra.mxu0 0.0
    %1686 = vmatpush.msra.mxu0 0.0
    %1687 = vmatpush.msra.mxu0 0.0
    %1688 = vmatpush.msra.mxu0 0.0
    %1689 = vmatpush.msra.mxu0 %v1670
    %1690 = vmatpush.msra.mxu0 %v1668
    %1691 = vmatpush.msra.mxu0 %v1666
    %1692 = vmatpush.msra.mxu0 %v1664
    %1693 = vmatmul.f32.gmra.mxu0 %v1675
    %v1694 = vpop.f32.mrf.mxu0
    %v1695 = vadd.f32 %v1656, %v1694
    %1696 = vdwg.mxu0
    %v1697 = vmax.f32 %v1695, 0.0
    %v1698 = vperm.slane %v136, 5
    %v1699 = vmul.f32 %v1697, %v1698
    %v1701 = vrot.slane %v1699, 1
    %v1702 = vperm.slane %v1699, 0
    %v1703 = vperm.slane %v1701, 0
    %1704 = vrot.lane.b32.xlu0 %v1702, 32
    %v1705 = vpop.permute.xlu0 %1704
    %1706 = vrot.lane.b32.xlu0 %v1703, 32
    %v1707 = vpop.permute.xlu0 %1706
    %v1710 = vmul.f32 %v1532, %v1705
    %v1711 = vmul.f32 %v1533, %v1707
    %1714 = vrot.lane.b32.xlu0 %v1710, 96
    %v1715 = vpop.permute.xlu0 %1714
    %1716 = vrot.lane.b32.xlu0 %v1711, 96
    %v1717 = vpop.permute.xlu0 %1716
    %v1720 = vsel %vm1557, %v1715, 0.0
    %1721 = vadd.xlane.f32.xlu0 %v1720
    %v1722 = vpop.xlane.xlu0 %1721
    %v1723 = vsel %vm1557, %v1717, 0.0
    %1724 = vadd.xlane.f32.xlu0 %v1723
    %v1725 = vpop.xlane.xlu0 %1724
    %1726 = vrot.lane.b32.xlu0 %v1590, 127
    %v1727 = vpop.permute.xlu0 %1726
    %s1728 = vtos %v1727
    %v1729 = vstv %s1728
    %v1731 = vadd.f32 %v1722, %v1729
    %v1732 = vadd.f32 %v1725, %v1729
    %vm1733 = vcmask 59392
    %v1734 = vsel %vm1733, %v1623, -inf
    %1735 = vmax.xlane.f32.xlu0 %v1734
    %v1736 = vpop.xlane.xlu0 %1735
    %v1737 = vsel %vm1733, %v1654, -inf
    %1738 = vmax.xlane.f32.xlu0 %v1737
    %v1739 = vpop.xlane.xlu0 %1738
    %v1740 = vsub.f32 %v1623, %v1736
    %v1741 = vsub.f32 %v1654, %v1739
    %v1742 = vmul.f32 %v1740, 1.442695
    %v1743 = vpow.pop %v1742
    %v1744 = vmul.f32 %v1741, 1.442695
    %v1745 = vpow.pop %v1744
    %v1746 = vsel %vm1733, %v1743, 0.0
    %1747 = vadd.xlane.f32.xlu0 %v1746
    %v1748 = vpop.xlane.xlu0 %1747
    %v1749 = vsel %vm1733, %v1745, 0.0
    %1750 = vadd.xlane.f32.xlu0 %v1749
    %v1751 = vpop.xlane.xlu0 %1750
    %v1752 = vrcp.pop %v1748
    %v1753 = vrcp.pop %v1751
    %v1754 = vmul.f32 %v1743, %v1752
    %v1755 = vmul.f32 %v1745, %v1753
    %v1757 = vsel %vm1312, %v1754, 0
    %1759 = vmatpush.msra.mxu0 0.0
    %1760 = vmatpush.msra.mxu0 0.0
    %1761 = vmatpush.msra.mxu0 0.0
    %1762 = vmatpush.msra.mxu0 0.0
    %1763 = vmatpush.msra.mxu0 0.0
    %1764 = vmatpush.msra.mxu0 0.0
    %1765 = vmatpush.msra.mxu0 0.0
    %1766 = vmatpush.msra.mxu0 0.0
    %1767 = vmatpush.msra.mxu0 0.0
    %1768 = vmatpush.msra.mxu0 0.0
    %1769 = vmatpush.msra.mxu0 0.0
    %1770 = vmatpush.msra.mxu0 0.0
    %1771 = vmatpush.msra.mxu0 0.0
    %1772 = vmatpush.msra.mxu0 0.0
    %1773 = vmatpush.msra.mxu0 0.0
    %1774 = vmatpush.msra.mxu0 %v1378
    %1775 = vmatmul.f32.gmra.mxu0 %v1757
    %v1776 = vpop.f32.mrf.mxu0
    %v1777 = vadd.f32 0.0, %v1776
    %1778 = vdwg.mxu0
    %v1780 = vsel %vm1312, %v1755, 0
    %1782 = vmatpush.msra.mxu0 0.0
    %1783 = vmatpush.msra.mxu0 0.0
    %1784 = vmatpush.msra.mxu0 0.0
    %1785 = vmatpush.msra.mxu0 0.0
    %1786 = vmatpush.msra.mxu0 0.0
    %1787 = vmatpush.msra.mxu0 0.0
    %1788 = vmatpush.msra.mxu0 0.0
    %1789 = vmatpush.msra.mxu0 0.0
    %1790 = vmatpush.msra.mxu0 0.0
    %1791 = vmatpush.msra.mxu0 0.0
    %1792 = vmatpush.msra.mxu0 0.0
    %1793 = vmatpush.msra.mxu0 0.0
    %1794 = vmatpush.msra.mxu0 0.0
    %1795 = vmatpush.msra.mxu0 0.0
    %1796 = vmatpush.msra.mxu0 0.0
    %1797 = vmatpush.msra.mxu0 %v1379
    %1798 = vmatmul.f32.gmra.mxu0 %v1780
    %v1799 = vpop.f32.mrf.mxu0
    %v1800 = vadd.f32 0.0, %v1799
    %1801 = vdwg.mxu0
    %v1804 = vrot.slane %v1777, 1
    %v1805 = vrot.slane %v1777, 2
    %v1806 = vrot.slane %v1800, 1
    %v1807 = vrot.slane %v1800, 2
    %v1808 = vperm.slane %v135, 7
    %1809 = vst [vmem:[#allocation1] ss:$9 sm:$0xff] %v1777
    %s1810 = scalar_lea.vmem [#allocation1], 1
    %1811 = vst [vmem:[%s1810] ss:$9 sm:$0xff] %v1804
    %s1812 = scalar_lea.vmem [#allocation1], 2
    %1813 = vst [vmem:[%s1812] ss:$9 sm:$0xff] %v1805
    %s1814 = scalar_lea.vmem [#allocation1], 3
    %1815 = vst [vmem:[%s1814] ss:$9 sm:$0xff] %v1800
    %s1816 = scalar_lea.vmem [#allocation1], 4
    %1817 = vst [vmem:[%s1816] ss:$9 sm:$0xff] %v1806
    %s1818 = scalar_lea.vmem [#allocation1], 5
    %1819 = vst [vmem:[%s1818] ss:$9 sm:$0xff] %v1807
    %v1820 = vld [vmem:[#allocation1] sm:$0xff]
    %1821 = vrot.lane.b32.xlu0 %v1382, 32
    %v1822 = vpop.permute.xlu0 %1821
    %1823 = vrot.lane.b32.xlu0 %v1384, 32
    %v1824 = vpop.permute.xlu0 %1823
    %1825 = vrot.lane.b32.xlu0 %v1386, 32
    %v1826 = vpop.permute.xlu0 %1825
    %v1830 = vsel %vm1390, %v1820, 0
    %1832 = vmatpush.msra.mxu0 0.0
    %1833 = vmatpush.msra.mxu0 0.0
    %1834 = vmatpush.msra.mxu0 0.0
    %1835 = vmatpush.msra.mxu0 0.0
    %1836 = vmatpush.msra.mxu0 0.0
    %1837 = vmatpush.msra.mxu0 0.0
    %1838 = vmatpush.msra.mxu0 0.0
    %1839 = vmatpush.msra.mxu0 0.0
    %1840 = vmatpush.msra.mxu0 0.0
    %1841 = vmatpush.msra.mxu0 0.0
    %1842 = vmatpush.msra.mxu0 0.0
    %1843 = vmatpush.msra.mxu0 0.0
    %1844 = vmatpush.msra.mxu0 0.0
    %1845 = vmatpush.msra.mxu0 %v1826
    %1846 = vmatpush.msra.mxu0 %v1824
    %1847 = vmatpush.msra.mxu0 %v1822
    %1848 = vmatmul.f32.gmra.mxu0 %v1830
    %v1849 = vpop.f32.mrf.mxu0
    %v1850 = vadd.f32 %v1808, %v1849
    %1851 = vdwg.mxu0
    %v1853 = vrot.slane %v1850, 1
    %v1854 = vrot.slane %v1850, 2
    %v1855 = vrot.slane %v1850, 3
    %v1856 = vrot.slane %v1850, 4
    %v1857 = vrot.slane %v1850, 5
    %v1863 = vld [vmem:[%s9] sm:$0xf]
    %v1864 = vld [vmem:[%s9 + $0x4] sm:$0xf]
    %v1865 = vmax.f32 %v1850, 0.0
    %v1866 = vmax.f32 %v1853, 0.0
    %v1867 = vmax.f32 %v1854, 0.0
    %v1868 = vmax.f32 %v1855, 0.0
    %v1869 = vmax.f32 %v1856, 0.0
    %v1870 = vmax.f32 %v1857, 0.0
    %v1873 = vrot.slane %v1863, 1
    %v1874 = vrot.slane %v1863, 2
    %v1875 = vrot.slane %v1864, 1
    %v1876 = vrot.slane %v1864, 2
    %v1881 = vmul.f32 %v1850, %v1863
    %v1882 = vmul.f32 %v1853, %v1873
    %v1883 = vmul.f32 %v1854, %v1874
    %v1884 = vmul.f32 %v1855, %v1864
    %v1885 = vmul.f32 %v1856, %v1875
    %v1886 = vmul.f32 %v1857, %v1876
    %v1887 = vsub.f32 %v1865, %v1881
    %v1888 = vsub.f32 %v1866, %v1882
    %v1889 = vsub.f32 %v1867, %v1883
    %v1890 = vsub.f32 %v1868, %v1884
    %v1891 = vsub.f32 %v1869, %v1885
    %v1892 = vsub.f32 %v1870, %v1886
    %v1893 = vand.u32 2147483647, %v1850
    %v1894 = vand.u32 2147483647, %v1853
    %v1895 = vand.u32 2147483647, %v1854
    %v1896 = vand.u32 2147483647, %v1855
    %v1897 = vand.u32 2147483647, %v1856
    %v1898 = vand.u32 2147483647, %v1857
    %v1899 = vsub.f32 0.0, %v1893
    %v1900 = vsub.f32 0.0, %v1894
    %v1901 = vsub.f32 0.0, %v1895
    %v1902 = vsub.f32 0.0, %v1896
    %v1903 = vsub.f32 0.0, %v1897
    %v1904 = vsub.f32 0.0, %v1898
    %v1905 = vmul.f32 %v1899, 1.442695
    %v1906 = vpow.pop %v1905
    %v1907 = vmul.f32 %v1900, 1.442695
    %v1908 = vpow.pop %v1907
    %v1909 = vmul.f32 %v1901, 1.442695
    %v1910 = vpow.pop %v1909
    %v1911 = vmul.f32 %v1902, 1.442695
    %v1912 = vpow.pop %v1911
    %v1913 = vmul.f32 %v1903, 1.442695
    %v1914 = vpow.pop %v1913
    %v1915 = vmul.f32 %v1904, 1.442695
    %v1916 = vpow.pop %v1915
    %v1917 = vadd.f32 %v1906, 1.0
    %v1918 = vadd.f32 %v1908, 1.0
    %v1919 = vadd.f32 %v1910, 1.0
    %v1920 = vadd.f32 %v1912, 1.0
    %v1921 = vadd.f32 %v1914, 1.0
    %v1922 = vadd.f32 %v1916, 1.0
    %v1923 = vlog2.pop %v1917
    %v1924 = vmul.f32 %v1923, 0.6931472
    %v1925 = vlog2.pop %v1918
    %v1926 = vmul.f32 %v1925, 0.6931472
    %v1927 = vlog2.pop %v1919
    %v1928 = vmul.f32 %v1927, 0.6931472
    %v1929 = vlog2.pop %v1920
    %v1930 = vmul.f32 %v1929, 0.6931472
    %v1931 = vlog2.pop %v1921
    %v1932 = vmul.f32 %v1931, 0.6931472
    %v1933 = vlog2.pop %v1922
    %v1934 = vmul.f32 %v1933, 0.6931472
    %v1935 = vadd.f32 %v1887, %v1924
    %v1936 = vadd.f32 %v1888, %v1926
    %v1937 = vadd.f32 %v1889, %v1928
    %v1938 = vadd.f32 %v1890, %v1930
    %v1939 = vadd.f32 %v1891, %v1932
    %v1940 = vadd.f32 %v1892, %v1934
    %1947 = vst [vmem:[#allocation1] ss:$9 sm:$0xff] %v1935
    %s1948 = scalar_lea.vmem [#allocation1], 1
    %1949 = vst [vmem:[%s1948] ss:$9 sm:$0xff] %v1936
    %s1950 = scalar_lea.vmem [#allocation1], 2
    %1951 = vst [vmem:[%s1950] ss:$9 sm:$0xff] %v1937
    %v1952 = vld [vmem:[#allocation1] sm:$0xff]
    %1953 = vst [vmem:[#allocation1] ss:$9 sm:$0xff] %v1938
    %1954 = vst [vmem:[%s1948] ss:$9 sm:$0xff] %v1939
    %1955 = vst [vmem:[%s1950] ss:$9 sm:$0xff] %v1940
    %v1956 = vld [vmem:[#allocation1] sm:$0xff]
    %vm1959 = vcmask 157696
    %v1960 = vsel %vm1959, %v1952, 0.0
    %1961 = vadd.xlane.f32.xlu0 %v1960
    %v1962 = vpop.xlane.xlu0 %1961
    %v1963 = vsel %vm1959, %v1956, 0.0
    %1964 = vadd.xlane.f32.xlu0 %v1963
    %v1965 = vpop.xlane.xlu0 %1964
    %v1966 = vrcp.pop 20.0
    %v1967 = vmul.f32 20.0, %v1966
    %v1968 = vsub.f32 1.0, %v1967
    %v1969 = vmul.f32 %v1966, %v1968
    %v1970 = vadd.f32 %v1966, %v1969
    %vm1971 = vweird.f32 %v1966
    %v1972 = vsel %vm1971, %v1966, %v1970
    %v1973 = vmul.f32 %v1962, %v1972
    %v1974 = vmul.f32 %v1965, %v1972
    %1975 = vst [vmem:[#allocation1] sm:$0xff] %v1337
    %s1976 = scalar_lea.vmem [#allocation1], 4
    %v1977 = vld [vmem:[%s1976] ss:$9 sm:$0xff]
    %s1978 = scalar_lea.vmem [#allocation1], 5
    %v1979 = vld [vmem:[%s1978] ss:$9 sm:$0xff]
    %s1980 = scalar_lea.vmem [#allocation1], 6
    %v1981 = vld [vmem:[%s1980] ss:$9 sm:$0xff]
    %1982 = vst [vmem:[#allocation1] sm:$0xff] %v1366
    %v1983 = vld [vmem:[%s1976] ss:$9 sm:$0xff]
    %v1984 = vld [vmem:[%s1978] ss:$9 sm:$0xff]
    %v1985 = vld [vmem:[%s1980] ss:$9 sm:$0xff]
    %v1986 = vperm.slane %v135, 6
    %1987 = vst [vmem:[#allocation1] ss:$9 sm:$0xff] %v1977
    %s1988 = scalar_lea.vmem [#allocation1], 1
    %1989 = vst [vmem:[%s1988] ss:$9 sm:$0xff] %v1979
    %s1990 = scalar_lea.vmem [#allocation1], 2
    %1991 = vst [vmem:[%s1990] ss:$9 sm:$0xff] %v1981
    %s1992 = scalar_lea.vmem [#allocation1], 3
    %1993 = vst [vmem:[%s1992] ss:$9 sm:$0xff] %v1983
    %s1994 = scalar_lea.vmem [#allocation1], 4
    %1995 = vst [vmem:[%s1994] ss:$9 sm:$0xff] %v1984
    %s1996 = scalar_lea.vmem [#allocation1], 5
    %1997 = vst [vmem:[%s1996] ss:$9 sm:$0xff] %v1985
    %v1998 = vld [vmem:[#allocation1] sm:$0xff]
    %1999 = vrot.lane.b32.xlu0 %v1534, 64
    %v2000 = vpop.permute.xlu0 %1999
    %2001 = vrot.lane.b32.xlu0 %v1535, 64
    %v2002 = vpop.permute.xlu0 %2001
    %2003 = vrot.lane.b32.xlu0 %v1536, 64
    %v2004 = vpop.permute.xlu0 %2003
    %2005 = vrot.lane.b32.xlu0 %v1537, 64
    %v2006 = vpop.permute.xlu0 %2005
    %v2011 = vsel %vm1557, %v1998, 0
    %2013 = vmatpush.msra.mxu0 0.0
    %2014 = vmatpush.msra.mxu0 0.0
    %2015 = vmatpush.msra.mxu0 0.0
    %2016 = vmatpush.msra.mxu0 0.0
    %2017 = vmatpush.msra.mxu0 0.0
    %2018 = vmatpush.msra.mxu0 0.0
    %2019 = vmatpush.msra.mxu0 0.0
    %2020 = vmatpush.msra.mxu0 0.0
    %2021 = vmatpush.msra.mxu0 0.0
    %2022 = vmatpush.msra.mxu0 0.0
    %2023 = vmatpush.msra.mxu0 0.0
    %2024 = vmatpush.msra.mxu0 0.0
    %2025 = vmatpush.msra.mxu0 %v2006
    %2026 = vmatpush.msra.mxu0 %v2004
    %2027 = vmatpush.msra.mxu0 %v2002
    %2028 = vmatpush.msra.mxu0 %v2000
    %2029 = vmatmul.f32.gmra.mxu0 %v2011
    %v2030 = vpop.f32.mrf.mxu0
    %v2031 = vadd.f32 %v1986, %v2030
    %2032 = vdwg.mxu0
    %v2033 = vperm.slane %v136, 6
    %v2034 = vmul.f32 %v2031, %v2033
    %v2036 = vrot.slane %v2034, 1
    %v2037 = vrot.slane %v2034, 2
    %v2038 = vrot.slane %v2034, 3
    %v2039 = vrot.slane %v2034, 4
    %v2040 = vrot.slane %v2034, 5
    %2041 = vst [vmem:[#allocation1] ss:$9 sm:$0xff] %v2034
    %s2042 = scalar_lea.vmem [#allocation1], 1
    %2043 = vst [vmem:[%s2042] ss:$9 sm:$0xff] %v2036
    %s2044 = scalar_lea.vmem [#allocation1], 2
    %2045 = vst [vmem:[%s2044] ss:$9 sm:$0xff] %v2037
    %v2046 = vld [vmem:[#allocation1] sm:$0xff]
    %v2047 = vsel %vm1557, %v2046, 0
    %v2050 = vsel %vm1557, %v1497, 0
    %2052 = vmatpush.xpose.msra.mxu0 0.0
    %2053 = vmatpush.xpose.msra.mxu0 0.0
    %2054 = vmatpush.xpose.msra.mxu0 0.0
    %2055 = vmatpush.xpose.msra.mxu0 0.0
    %2056 = vmatpush.xpose.msra.mxu0 0.0
    %2057 = vmatpush.xpose.msra.mxu0 0.0
    %2058 = vmatpush.xpose.msra.mxu0 0.0
    %2059 = vmatpush.xpose.msra.mxu0 0.0
    %2060 = vmatpush.xpose.msra.mxu0 0.0
    %2061 = vmatpush.xpose.msra.mxu0 0.0
    %2062 = vmatpush.xpose.msra.mxu0 0.0
    %2063 = vmatpush.xpose.msra.mxu0 0.0
    %2064 = vmatpush.xpose.msra.mxu0 0.0
    %2065 = vmatpush.xpose.msra.mxu0 0.0
    %2066 = vmatpush.xpose.msra.mxu0 0.0
    %2067 = vmatpush.xpose.msra.mxu0 %v2050
    %2068 = vmatmul.f32.gmra.mxu0 %v2047
    %v2069 = vpop.f32.mrf.mxu0
    %v2070 = vadd.f32 0.0, %v2069
    %2071 = vdwg.mxu0
    %2072 = vst [vmem:[#allocation1] ss:$9 sm:$0xff] %v2038
    %s2073 = scalar_lea.vmem [#allocation1], 1
    %2074 = vst [vmem:[%s2073] ss:$9 sm:$0xff] %v2039
    %s2075 = scalar_lea.vmem [#allocation1], 2
    %2076 = vst [vmem:[%s2075] ss:$9 sm:$0xff] %v2040
    %v2077 = vld [vmem:[#allocation1] sm:$0xff]
    %v2078 = vsel %vm1557, %v2077, 0
    %v2081 = vsel %vm1557, %v1500, 0
    %2083 = vmatpush.xpose.msra.mxu0 0.0
    %2084 = vmatpush.xpose.msra.mxu0 0.0
    %2085 = vmatpush.xpose.msra.mxu0 0.0
    %2086 = vmatpush.xpose.msra.mxu0 0.0
    %2087 = vmatpush.xpose.msra.mxu0 0.0
    %2088 = vmatpush.xpose.msra.mxu0 0.0
    %2089 = vmatpush.xpose.msra.mxu0 0.0
    %2090 = vmatpush.xpose.msra.mxu0 0.0
    %2091 = vmatpush.xpose.msra.mxu0 0.0
    %2092 = vmatpush.xpose.msra.mxu0 0.0
    %2093 = vmatpush.xpose.msra.mxu0 0.0
    %2094 = vmatpush.xpose.msra.mxu0 0.0
    %2095 = vmatpush.xpose.msra.mxu0 0.0
    %2096 = vmatpush.xpose.msra.mxu0 0.0
    %2097 = vmatpush.xpose.msra.mxu0 0.0
    %2098 = vmatpush.xpose.msra.mxu0 %v2081
    %2099 = vmatmul.f32.gmra.mxu0 %v2078
    %v2100 = vpop.f32.mrf.mxu0
    %v2101 = vadd.f32 0.0, %v2100
    %2102 = vdwg.mxu0
    %v2103 = vsel %vm1733, %v2070, -inf
    %2104 = vmax.xlane.f32.xlu0 %v2103
    %v2105 = vpop.xlane.xlu0 %2104
    %v2106 = vsel %vm1733, %v2101, -inf
    %2107 = vmax.xlane.f32.xlu0 %v2106
    %v2108 = vpop.xlane.xlu0 %2107
    %v2109 = vsub.f32 %v2070, %v2105
    %v2110 = vsub.f32 %v2101, %v2108
    %v2111 = vmul.f32 %v2109, 1.442695
    %v2112 = vpow.pop %v2111
    %v2113 = vmul.f32 %v2110, 1.442695
    %v2114 = vpow.pop %v2113
    %v2116 = vsel %vm1312, %v2112, 0
    %2118 = vmatpush.msra.mxu0 0.0
    %2119 = vmatpush.msra.mxu0 0.0
    %2120 = vmatpush.msra.mxu0 0.0
    %2121 = vmatpush.msra.mxu0 0.0
    %2122 = vmatpush.msra.mxu0 0.0
    %2123 = vmatpush.msra.mxu0 0.0
    %2124 = vmatpush.msra.mxu0 0.0
    %2125 = vmatpush.msra.mxu0 0.0
    %2126 = vmatpush.msra.mxu0 0.0
    %2127 = vmatpush.msra.mxu0 0.0
    %2128 = vmatpush.msra.mxu0 0.0
    %2129 = vmatpush.msra.mxu0 0.0
    %2130 = vmatpush.msra.mxu0 0.0
    %2131 = vmatpush.msra.mxu0 0.0
    %2132 = vmatpush.msra.mxu0 0.0
    %2133 = vmatpush.msra.mxu0 %v1380
    %2134 = vmatmul.f32.gmra.mxu0 %v2116
    %v2135 = vpop.f32.mrf.mxu0
    %v2136 = vadd.f32 0.0, %v2135
    %2137 = vdwg.mxu0
    %v2139 = vsel %vm1312, %v2114, 0
    %2141 = vmatpush.msra.mxu0 0.0
    %2142 = vmatpush.msra.mxu0 0.0
    %2143 = vmatpush.msra.mxu0 0.0
    %2144 = vmatpush.msra.mxu0 0.0
    %2145 = vmatpush.msra.mxu0 0.0
    %2146 = vmatpush.msra.mxu0 0.0
    %2147 = vmatpush.msra.mxu0 0.0
    %2148 = vmatpush.msra.mxu0 0.0
    %2149 = vmatpush.msra.mxu0 0.0
    %2150 = vmatpush.msra.mxu0 0.0
    %2151 = vmatpush.msra.mxu0 0.0
    %2152 = vmatpush.msra.mxu0 0.0
    %2153 = vmatpush.msra.mxu0 0.0
    %2154 = vmatpush.msra.mxu0 0.0
    %2155 = vmatpush.msra.mxu0 0.0
    %2156 = vmatpush.msra.mxu0 %v1381
    %2157 = vmatmul.f32.gmra.mxu0 %v2139
    %v2158 = vpop.f32.mrf.mxu0
    %v2159 = vadd.f32 0.0, %v2158
    %2160 = vdwg.mxu0
    %v2163 = vrot.slane %v1623, 7
    %v2164 = vrot.slane %v1654, 7
    %v2167 = vsel %vm1265, 0.0, %v2163
    %v2168 = vsel %vm1265, 0.0, %v2164
    %vm2169 = vcmp.gt.f32.partialorder %v2136, 0.0
    %vm2170 = vcmp.gt.f32.partialorder %v2159, 0.0
    %v2171 = vrcp.pop %v2136
    %v2172 = vrcp.pop %v2159
    %v2173 = vsel %vm2169, %v2171, 0.0
    %v2174 = vsel %vm2170, %v2172, 0.0
    %v2175 = vmul.f32 %v2167, %v2173
    %v2176 = vmul.f32 %v2168, %v2174
    %v2178 = vsel %vm1312, %v2175, 0
    %v2181 = vsel %vm1312, %v1380, 0
    %2183 = vmatpush.xpose.msra.mxu0 0.0
    %2184 = vmatpush.xpose.msra.mxu0 0.0
    %2185 = vmatpush.xpose.msra.mxu0 0.0
    %2186 = vmatpush.xpose.msra.mxu0 0.0
    %2187 = vmatpush.xpose.msra.mxu0 0.0
    %2188 = vmatpush.xpose.msra.mxu0 0.0
    %2189 = vmatpush.xpose.msra.mxu0 0.0
    %2190 = vmatpush.xpose.msra.mxu0 0.0
    %2191 = vmatpush.xpose.msra.mxu0 0.0
    %2192 = vmatpush.xpose.msra.mxu0 0.0
    %2193 = vmatpush.xpose.msra.mxu0 0.0
    %2194 = vmatpush.xpose.msra.mxu0 0.0
    %2195 = vmatpush.xpose.msra.mxu0 0.0
    %2196 = vmatpush.xpose.msra.mxu0 0.0
    %2197 = vmatpush.xpose.msra.mxu0 0.0
    %2198 = vmatpush.xpose.msra.mxu0 %v2181
    %2199 = vmatmul.f32.gmra.mxu0 %v2178
    %v2200 = vpop.f32.mrf.mxu0
    %v2201 = vadd.f32 0.0, %v2200
    %2202 = vdwg.mxu0
    %v2204 = vsel %vm1312, %v2176, 0
    %v2207 = vsel %vm1312, %v1381, 0
    %2209 = vmatpush.xpose.msra.mxu0 0.0
    %2210 = vmatpush.xpose.msra.mxu0 0.0
    %2211 = vmatpush.xpose.msra.mxu0 0.0
    %2212 = vmatpush.xpose.msra.mxu0 0.0
    %2213 = vmatpush.xpose.msra.mxu0 0.0
    %2214 = vmatpush.xpose.msra.mxu0 0.0
    %2215 = vmatpush.xpose.msra.mxu0 0.0
    %2216 = vmatpush.xpose.msra.mxu0 0.0
    %2217 = vmatpush.xpose.msra.mxu0 0.0
    %2218 = vmatpush.xpose.msra.mxu0 0.0
    %2219 = vmatpush.xpose.msra.mxu0 0.0
    %2220 = vmatpush.xpose.msra.mxu0 0.0
    %2221 = vmatpush.xpose.msra.mxu0 0.0
    %2222 = vmatpush.xpose.msra.mxu0 0.0
    %2223 = vmatpush.xpose.msra.mxu0 0.0
    %2224 = vmatpush.xpose.msra.mxu0 %v2207
    %2225 = vmatmul.f32.gmra.mxu0 %v2204
    %v2226 = vpop.f32.mrf.mxu0
    %v2227 = vadd.f32 0.0, %v2226
    %2228 = vdwg.mxu0
    %v2229 = vmul.f32 %v2112, %v2201
    %v2230 = vmul.f32 %v2114, %v2227
    %v2231 = vsel %vm2169, 0.0, %v2167
    %v2232 = vsel %vm2170, 0.0, %v2168
    %v2233 = vsel %vm1733, %v2231, 0.0
    %2234 = vadd.xlane.f32.xlu0 %v2233
    %v2235 = vpop.xlane.xlu0 %2234
    %v2236 = vsel %vm1733, %v2232, 0.0
    %2237 = vadd.xlane.f32.xlu0 %v2236
    %v2238 = vpop.xlane.xlu0 %2237
    %v2239 = vmul.f32 %v2235, 0.125
    %v2240 = vmul.f32 %v2238, 0.125
    %v2241 = vadd.f32 %v2229, %v2239
    %v2242 = vadd.f32 %v2230, %v2240
    %v2245 = vrot.slane %v2241, 7
    %v2246 = vrot.slane %v2242, 7
    %v2249 = vsel %vm1265, 0.0, %v2245
    %v2250 = vsel %vm1265, 0.0, %v2246
    %v2251 = vlog2.pop %v1748
    %v2252 = vmul.f32 %v2251, 0.6931472
    %v2253 = vlog2.pop %v1751
    %v2254 = vmul.f32 %v2253, 0.6931472
    %v2255 = vsub.f32 %v1740, %v2252
    %v2256 = vsub.f32 %v1741, %v2254
    %v2257 = vsel %vm1733, %v2249, -inf
    %2258 = vmax.xlane.f32.xlu0 %v2257
    %v2259 = vpop.xlane.xlu0 %2258
    %v2260 = vsel %vm1733, %v2250, -inf
    %2261 = vmax.xlane.f32.xlu0 %v2260
    %v2262 = vpop.xlane.xlu0 %2261
    %v2263 = vsub.f32 %v2249, %v2259
    %v2264 = vsub.f32 %v2250, %v2262
    %v2265 = vmul.f32 %v2263, 1.442695
    %v2266 = vpow.pop %v2265
    %v2267 = vmul.f32 %v2264, 1.442695
    %v2268 = vpow.pop %v2267
    %v2269 = vsel %vm1733, %v2266, 0.0
    %2270 = vadd.xlane.f32.xlu0 %v2269
    %v2271 = vpop.xlane.xlu0 %2270
    %v2272 = vsel %vm1733, %v2268, 0.0
    %2273 = vadd.xlane.f32.xlu0 %v2272
    %v2274 = vpop.xlane.xlu0 %2273
    %v2275 = vlog2.pop %v2271
    %v2276 = vmul.f32 %v2275, 0.6931472
    %v2277 = vlog2.pop %v2274
    %v2278 = vmul.f32 %v2277, 0.6931472
    %v2279 = vsub.f32 %v2263, %v2276
    %v2280 = vsub.f32 %v2264, %v2278
    %v2281 = vmul.f32 %v2255, 1.442695
    %v2282 = vpow.pop %v2281
    %v2283 = vmul.f32 %v2256, 1.442695
    %v2284 = vpow.pop %v2283
    %v2285 = vsub.f32 %v2255, %v2279
    %v2286 = vsub.f32 %v2256, %v2280
    %v2287 = vmul.f32 %v2282, %v2285
    %v2288 = vmul.f32 %v2284, %v2286
    %v2289 = vsel %vm1733, %v2287, 0.0
    %2290 = vadd.xlane.f32.xlu0 %v2289
    %v2291 = vpop.xlane.xlu0 %2290
    %v2292 = vsel %vm1733, %v2288, 0.0
    %2293 = vadd.xlane.f32.xlu0 %v2292
    %v2294 = vpop.xlane.xlu0 %2293
    %v2295 = vmul.f32 %v2291, 0.1
    %v2296 = vmul.f32 %v2294, 0.1
    %v2299 = vperm.slane %v1731, %v140
    %v2300 = vperm.slane %v1732, %v140
    %v2301 = vsel %vm1374, %v2300, %v2299
    %vm2303 = vcmask 58368
    %v2304 = vsel %vm2303, %v2301, -inf
    %2305 = vmax.xlane.f32.xlu0 %v2304
    %v2306 = vpop.xlane.xlu0 %2305
    %v2308 = vperm.slane %v2306, 0
    %v2309 = vperm.slane %v2306, 1
    %v2312 = vsub.f32 %v1731, %v2308
    %v2313 = vsub.f32 %v1732, %v2309
    %v2314 = vmul.f32 %v2312, 1.442695
    %v2315 = vpow.pop %v2314
    %v2316 = vmul.f32 %v2313, 1.442695
    %v2317 = vpow.pop %v2316
    %2320 = vset.pattern.permute.xlu0 0
    %2321 = vperm.xlu0 %2320, %v2315
    %v2322 = vpop.permute.xlu0 %2321
    %2323 = vset.pattern.permute.xlu0 0
    %2324 = vperm.xlu0 %2323, %v2317
    %v2325 = vpop.permute.xlu0 %2324
    %v2326 = vperm.slane %v2322, %v140
    %v2327 = vperm.slane %v2325, %v140
    %v2328 = vsel %vm1374, %v2327, %v2326
    %v2330 = vsel %vm2303, %v2328, 0.0
    %2331 = vadd.xlane.f32.xlu0 %v2330
    %v2332 = vpop.xlane.xlu0 %2331
    %v2333 = vlog2.pop %v2332
    %v2334 = vmul.f32 %v2333, 0.6931472
    %v2336 = vperm.slane %v2334, 0
    %v2337 = vperm.slane %v2334, 1
    %v2340 = vsub.f32 %v2312, %v2336
    %v2341 = vsub.f32 %v2313, %v2337
    %vm2342 = vcmask 1043459
    %v2343 = vsel %vm2342, %v2246, %v2241
    %vm2345 = vcmask 60418
    %v2346 = vsel %vm2345, %v2343, -inf
    %2347 = vmax.xlane.f32.xlu0 %v2346
    %v2348 = vpop.xlane.xlu0 %2347
    %v2350 = vrot.slane %v2348, 1
    %v2353 = vsub.f32 %v2241, %v2348
    %v2354 = vsub.f32 %v2242, %v2350
    %v2355 = vmul.f32 %v2353, 1.442695
    %v2356 = vpow.pop %v2355
    %v2357 = vmul.f32 %v2354, 1.442695
    %v2358 = vpow.pop %v2357
    %v2361 = vrot.slane %v2358, 7
    %v2362 = vsel %vm2342, %v2361, %v2356
    %v2364 = vsel %vm2345, %v2362, 0.0
    %2365 = vadd.xlane.f32.xlu0 %v2364
    %v2366 = vpop.xlane.xlu0 %2365
    %v2367 = vlog2.pop %v2366
    %v2368 = vmul.f32 %v2367, 0.6931472
    %v2370 = vrot.slane %v2368, 1
    %v2373 = vsub.f32 %v2353, %v2368
    %v2374 = vsub.f32 %v2354, %v2370
    %v2375 = vmul.f32 %v2340, 1.442695
    %v2376 = vpow.pop %v2375
    %v2377 = vmul.f32 %v2341, 1.442695
    %v2378 = vpow.pop %v2377
    %v2381 = vperm.slane %v2373, 2
    %v2382 = vlaneseq
    %v2383 = vshrl.u32 %v2382, 7
    %2385 = vset.pattern.permute.xlu0 %v2383
    %2386 = vperm.xlu0 %2385, %v2381
    %v2387 = vpop.permute.xlu0 %2386
    %v2388 = vperm.slane %v2374, 2
    %v2389 = vlaneseq
    %v2390 = vshrl.u32 %v2389, 7
    %2392 = vset.pattern.permute.xlu0 %v2390
    %2393 = vperm.xlu0 %2392, %v2388
    %v2394 = vpop.permute.xlu0 %2393
    %v2397 = vsub.f32 %v2340, %v2387
    %v2398 = vsub.f32 %v2341, %v2394
    %v2399 = vmul.f32 %v2376, %v2397
    %v2400 = vmul.f32 %v2378, %v2398
    %2403 = vset.pattern.permute.xlu0 0
    %2404 = vperm.xlu0 %2403, %v2399
    %v2405 = vpop.permute.xlu0 %2404
    %2406 = vset.pattern.permute.xlu0 0
    %2407 = vperm.xlu0 %2406, %v2400
    %v2408 = vpop.permute.xlu0 %2407
    %v2409 = vperm.slane %v2405, %v140
    %v2410 = vperm.slane %v2408, %v140
    %v2411 = vsel %vm1374, %v2410, %v2409
    %v2413 = vsel %vm2303, %v2411, 0.0
    %2414 = vadd.xlane.f32.xlu0 %v2413
    %v2415 = vpop.xlane.xlu0 %2414
    %v2416 = vmul.f32 %v2415, 0.1
    %vm2417 = vcmp.eq.s32.totalorder %v140, 0
    %v2420 = vperm.slane %v2295, %v140
    %v2421 = vperm.slane %v2296, %v140
    %v2422 = vsel %vm1374, %v2421, %v2420
    %v2424 = vsel %vm2417, 0.0, %v2422
    %v2426 = vperm.slane %v2424, 0
    %v2427 = vlaneseq
    %v2428 = vshrl.u32 %v2427, 7
    %2430 = vset.pattern.permute.xlu0 %v2428
    %2431 = vperm.xlu0 %2430, %v2426
    %v2432 = vpop.permute.xlu0 %2431
    %v2433 = vperm.slane %v2424, 1
    %v2434 = vlaneseq
    %v2435 = vshrl.u32 %v2434, 7
    %2437 = vset.pattern.permute.xlu0 %v2435
    %2438 = vperm.xlu0 %2437, %v2433
    %v2439 = vpop.permute.xlu0 %2438
    %v2442 = vadd.f32 %v1973, %v2432
    %v2443 = vadd.f32 %v1974, %v2439
    %v2444 = vld [vmem:[%s10] sm:$0x3]
    %v2446 = vperm.slane %v2444, 0
    %v2447 = vlaneseq
    %v2448 = vshrl.u32 %v2447, 7
    %2450 = vset.pattern.permute.xlu0 %v2448
    %2451 = vperm.xlu0 %2450, %v2446
    %v2452 = vpop.permute.xlu0 %2451
    %v2453 = vperm.slane %v2444, 1
    %v2454 = vlaneseq
    %v2455 = vshrl.u32 %v2454, 7
    %2457 = vset.pattern.permute.xlu0 %v2455
    %2458 = vperm.xlu0 %2457, %v2453
    %v2459 = vpop.permute.xlu0 %2458
    %v2462 = vmul.f32 %v2442, %v2452
    %v2463 = vmul.f32 %v2443, %v2459
    %2466 = vset.pattern.permute.xlu0 0
    %2467 = vperm.xlu0 %2466, %v2462
    %v2468 = vpop.permute.xlu0 %2467
    %2469 = vset.pattern.permute.xlu0 0
    %2470 = vperm.xlu0 %2469, %v2463
    %v2471 = vpop.permute.xlu0 %2470
    %v2472 = vperm.slane %v2468, %v140
    %v2473 = vperm.slane %v2471, %v140
    %v2474 = vsel %vm1374, %v2473, %v2472
    %vm2476 = vcmask 17408
    %v2477 = vsel %vm2476, %v2474, 0.0
    %2478 = vadd.xlane.f32.xlu0 %v2477
    %v2479 = vpop.xlane.xlu0 %2478
    %v2480 = vadd.f32 %v2479, %v2416
    %v2481 = vrcp.pop %v2332
    %v2483 = vperm.slane %v2481, 0
    %v2484 = vperm.slane %v2481, 1
    %v2487 = vmul.f32 %v2315, %v2483
    %v2488 = vmul.f32 %v2317, %v2484
    %2490 = vset.pattern.permute.xlu0 0
    %2491 = vperm.xlu0 %2490, %v2487
    %v2492 = vpop.permute.xlu0 %2491
    %2495 = vset.pattern.permute.xlu0 0
    %2496 = vperm.xlu0 %2495, %v2488
    %v2497 = vpop.permute.xlu0 %2496
    %v2499 = vmul.f32 %v1378, %v2492
    %v2500 = vmul.f32 %v1379, %v2497
    %v2501 = vsel %vm1390, %v2499, 0.0
    %v2502 = vrot.slane %v2501, 4
    %v2503 = vadd.f32 %v2501, %v2502
    %v2504 = vrot.slane %v2503, 2
    %v2505 = vadd.f32 %v2503, %v2504
    %v2506 = vrot.slane %v2505, 1
    %v2507 = vadd.f32 %v2505, %v2506
    %v2508 = vsel %vm1390, %v2500, 0.0
    %v2509 = vrot.slane %v2508, 4
    %v2510 = vadd.f32 %v2508, %v2509
    %v2511 = vrot.slane %v2510, 2
    %v2512 = vadd.f32 %v2510, %v2511
    %v2513 = vrot.slane %v2512, 1
    %v2514 = vadd.f32 %v2512, %v2513
    %v2515 = vld [vmem:[#allocation6] sm:$0xff]
    %v2516 = vld [vmem:[#allocation6 + $0x8] sm:$0xff]
    %v2517 = vld [vmem:[#allocation6 + $0x10] sm:$0xff]
    %v2518 = vld [vmem:[#allocation6 + $0x18] sm:$0xff]
    %v2519 = vperm.slane %v136, 0
    %v2522 = vsel %vm1374, %v2514, %v2507
    %2526 = vrot.lane.b32.xlu0 %v1382, 12
    %v2527 = vpop.permute.xlu0 %2526
    %2528 = vrot.lane.b32.xlu0 %v1383, 12
    %v2529 = vpop.permute.xlu0 %2528
    %2530 = vrot.lane.b32.xlu0 %v1384, 12
    %v2531 = vpop.permute.xlu0 %2530
    %2532 = vrot.lane.b32.xlu0 %v1385, 12
    %v2533 = vpop.permute.xlu0 %2532
    %2534 = vrot.lane.b32.xlu0 %v1386, 12
    %v2535 = vpop.permute.xlu0 %2534
    %2536 = vrot.lane.b32.xlu0 %v1387, 12
    %v2537 = vpop.permute.xlu0 %2536
    %vm2538 = vcmask 97280
    %v2539 = vsel %vm2538, %v2527, %v2529
    %v2540 = vsel %vm2538, %v2531, %v2533
    %v2541 = vsel %vm2538, %v2535, %v2537
    %v2545 = vsel %vm1390, %v2522, 0
    %2547 = vmatpush.msra.mxu0 0.0
    %2548 = vmatpush.msra.mxu0 0.0
    %2549 = vmatpush.msra.mxu0 0.0
    %2550 = vmatpush.msra.mxu0 0.0
    %2551 = vmatpush.msra.mxu0 0.0
    %2552 = vmatpush.msra.mxu0 0.0
    %2553 = vmatpush.msra.mxu0 0.0
    %2554 = vmatpush.msra.mxu0 0.0
    %2555 = vmatpush.msra.mxu0 0.0
    %2556 = vmatpush.msra.mxu0 0.0
    %2557 = vmatpush.msra.mxu0 0.0
    %2558 = vmatpush.msra.mxu0 0.0
    %2559 = vmatpush.msra.mxu0 0.0
    %2560 = vmatpush.msra.mxu0 %v2541
    %2561 = vmatpush.msra.mxu0 %v2540
    %2562 = vmatpush.msra.mxu0 %v2539
    %2563 = vmatmul.f32.gmra.mxu0 %v2545
    %v2564 = vpop.f32.mrf.mxu0
    %v2565 = vadd.f32 %v2519, %v2564
    %2566 = vdwg.mxu0
    %v2567 = vperm.slane %v136, 1
    %2568 = vrot.lane.b32.xlu0 %v1534, 32
    %v2569 = vpop.permute.xlu0 %2568
    %2570 = vrot.lane.b32.xlu0 %v1535, 32
    %v2571 = vpop.permute.xlu0 %2570
    %2572 = vrot.lane.b32.xlu0 %v1536, 32
    %v2573 = vpop.permute.xlu0 %2572
    %2574 = vrot.lane.b32.xlu0 %v1537, 32
    %v2575 = vpop.permute.xlu0 %2574
    %v2581 = vsel %vm1557, %v1377, 0
    %2583 = vmatpush.msra.mxu0 0.0
    %2584 = vmatpush.msra.mxu0 0.0
    %2585 = vmatpush.msra.mxu0 0.0
    %2586 = vmatpush.msra.mxu0 0.0
    %2587 = vmatpush.msra.mxu0 0.0
    %2588 = vmatpush.msra.mxu0 0.0
    %2589 = vmatpush.msra.mxu0 0.0
    %2590 = vmatpush.msra.mxu0 0.0
    %2591 = vmatpush.msra.mxu0 0.0
    %2592 = vmatpush.msra.mxu0 0.0
    %2593 = vmatpush.msra.mxu0 0.0
    %2594 = vmatpush.msra.mxu0 0.0
    %2595 = vmatpush.msra.mxu0 %v2575
    %2596 = vmatpush.msra.mxu0 %v2573
    %2597 = vmatpush.msra.mxu0 %v2571
    %2598 = vmatpush.msra.mxu0 %v2569
    %2599 = vmatmul.f32.gmra.mxu0 %v2581
    %v2600 = vpop.f32.mrf.mxu0
    %v2601 = vadd.f32 %v2567, %v2600
    %2602 = vdwg.mxu0
    %v2603 = vmul.f32 %v2565, %v2601
    %v2604 = vperm.slane %v136, 2
    %v2606 = vsel %vm1557, %v2603, 0
    %2608 = vmatpush.msra.mxu0 0.0
    %2609 = vmatpush.msra.mxu0 0.0
    %2610 = vmatpush.msra.mxu0 0.0
    %2611 = vmatpush.msra.mxu0 0.0
    %2612 = vmatpush.msra.mxu0 0.0
    %2613 = vmatpush.msra.mxu0 0.0
    %2614 = vmatpush.msra.mxu0 0.0
    %2615 = vmatpush.msra.mxu0 0.0
    %2616 = vmatpush.msra.mxu0 0.0
    %2617 = vmatpush.msra.mxu0 0.0
    %2618 = vmatpush.msra.mxu0 0.0
    %2619 = vmatpush.msra.mxu0 0.0
    %2620 = vmatpush.msra.mxu0 %v2518
    %2621 = vmatpush.msra.mxu0 %v2517
    %2622 = vmatpush.msra.mxu0 %v2516
    %2623 = vmatpush.msra.mxu0 %v2515
    %2624 = vmatmul.f32.gmra.mxu0 %v2606
    %v2625 = vpop.f32.mrf.mxu0
    %v2626 = vadd.f32 %v2604, %v2625
    %2627 = vdwg.mxu0
    %v2628 = vmax.f32 %v2626, 0.0
    %v2629 = vperm.slane %v136, 3
    %2634 = vrot.lane.b32.xlu0 %v2515, 96
    %v2635 = vpop.permute.xlu0 %2634
    %2636 = vrot.lane.b32.xlu0 %v2516, 96
    %v2637 = vpop.permute.xlu0 %2636
    %2638 = vrot.lane.b32.xlu0 %v2517, 96
    %v2639 = vpop.permute.xlu0 %2638
    %2640 = vrot.lane.b32.xlu0 %v2518, 96
    %v2641 = vpop.permute.xlu0 %2640
    %v2647 = vsel %vm1557, %v2628, 0
    %2649 = vmatpush.msra.mxu0 0.0
    %2650 = vmatpush.msra.mxu0 0.0
    %2651 = vmatpush.msra.mxu0 0.0
    %2652 = vmatpush.msra.mxu0 0.0
    %2653 = vmatpush.msra.mxu0 0.0
    %2654 = vmatpush.msra.mxu0 0.0
    %2655 = vmatpush.msra.mxu0 0.0
    %2656 = vmatpush.msra.mxu0 0.0
    %2657 = vmatpush.msra.mxu0 0.0
    %2658 = vmatpush.msra.mxu0 0.0
    %2659 = vmatpush.msra.mxu0 0.0
    %2660 = vmatpush.msra.mxu0 0.0
    %2661 = vmatpush.msra.mxu0 %v2641
    %2662 = vmatpush.msra.mxu0 %v2639
    %2663 = vmatpush.msra.mxu0 %v2637
    %2664 = vmatpush.msra.mxu0 %v2635
    %2665 = vmatmul.f32.gmra.mxu0 %v2647
    %v2666 = vpop.f32.mrf.mxu0
    %v2667 = vadd.f32 %v2629, %v2666
    %2668 = vdwg.mxu0
    %vm2669 = vcmask 80896
    %v2670 = vsel %vm2669, %v2667, %v2480
    %vm2671 = vcmask 89088
    %v2672 = vsel %vm2671, %v2670, 0.0
    %2673 = vst [vmem:[%s12] sm:$0x3] %v2672
    // Predicated region
    $region74: #{net_forward.1} parent=1 // pred_check
      _
    $region75: #{net_forward.1} parent=1 // pred_check_branch
      %2675 = sbr.rel (0) target = $region77
    $region76: #{net_forward.1} parent=1 // pred_region
      _
    $region77: #{net_forward.1} parent=1 // pred_fallthru
      _
    // Predicated region
    $region78: #{net_forward.1} parent=1 // pred_check
      _
    $region79: #{net_forward.1} parent=1 // pred_check_branch
      %2677 = sbr.rel (0) target = $region81
    $region80: #{net_forward.1} parent=1 // pred_region
      _
    $region81: #{net_forward.1} parent=1 // pred_fallthru
      _
    %2678 = vsyncpa [#allocation3], 1
    %2679 = vsyncpa [#allocation5], 1
    %2680 = vsyncpa [#allocation8], 1
    %2681 = vsyncpa [#allocation11], 1

</llo_original>
